<compile_context>
chip_gen: v7x
topology: tpu7x:2x2x1
jax: 0.10.0
libtpu: 0.0.40
codegen_flags: <defaults>
</compile_context>

<pallas_src>
import functools

import numpy as np

import jax
import jax.numpy as jnp
from jax.experimental import pallas as pl
from jax.experimental.pallas import tpu as pltpu


def _round_up(x, m):
    return ((x + m - 1) // m) * m


# --------------------------- fused Pallas kernel ----------------------------

def _make_fused_kernel(n_conv, n_hidden, scale, bias):
    """Build the single fused forward kernel.

    Ref order: img, [conv_dense, conv_bias] * n_conv, seg2, segxy,
               [w, b, gamma, beta] * n_hidden, w_out, b_out, o_ref.
    The image/output are (batch, feature) windowed blocks; all weights are
    whole-array VMEM residents.
    """

    def kernel(*refs):
        img_ref = refs[0]
        conv_refs = refs[1:1 + 2 * n_conv]
        seg_ref = refs[1 + 2 * n_conv]
        segxy_ref = refs[2 + 2 * n_conv]
        mlp_refs = refs[3 + 2 * n_conv:-1]
        o_ref = refs[-1]

        # uint8 NCHW image flattened to (bn, C*H*W).  The 1/255 scale is baked
        # into the first conv dense matrix, so no f32 multiply here.
        x = img_ref[...].astype(jnp.float32)

        # Conv2d + ReLU layers, each one wide bf16xbf16 MXU matmul (f32 acc).
        # The conv's own padding, the NEXT conv's zero-pad border and the
        # 256-lane feature padding are all baked into the dense matrix; bias is
        # zero on those columns so ReLU keeps them exactly 0.
        for li in range(n_conv):
            w_t = conv_refs[2 * li][...]                      # (F_in, F_out) bf16
            b_t = conv_refs[2 * li + 1][...]                  # (1, F_out)    f32
            x = jnp.dot(x.astype(w_t.dtype), w_t,
                        preferred_element_type=jnp.float32)
            x = jnp.maximum(x + b_t, 0.0)

        # SpatialSoftmax.  Subtracting the per-sample global max is exact for
        # the per-channel softmax (shift invariance) and avoids any reshape.
        # Per-channel sums / coordinate expectations are segmented reductions
        # expressed as bf16 matmuls against host-built selection matrices that
        # are already duplicated to 2C columns (no lane concatenate needed).
        e = jnp.exp(x - jnp.max(x, axis=-1, keepdims=True))         # (bn, F) f32
        e16 = e.astype(seg_ref.dtype)
        denom = jnp.dot(e16, seg_ref[...],
                        preferred_element_type=jnp.float32)         # (bn, 2C)
        num = jnp.dot(e16, segxy_ref[...],
                      preferred_element_type=jnp.float32)           # (bn, 2C)
        h = num * pl.reciprocal(jnp.maximum(denom, 1e-20), approx=True)

        # GaussianPolicy mean MLP: (Linear -> LayerNorm -> ReLU) * n_hidden.
        for li in range(n_hidden):
            w_t = mlp_refs[4 * li][...]
            b_t = mlp_refs[4 * li + 1][...]
            g_t = mlp_refs[4 * li + 2][...]
            beta_t = mlp_refs[4 * li + 3][...]
            h = jnp.dot(h, w_t, preferred_element_type=jnp.float32) + b_t
            mu = jnp.mean(h, axis=-1, keepdims=True)
            var = jnp.mean((h - mu) ** 2, axis=-1, keepdims=True)
            h = (h - mu) * jax.lax.rsqrt(var + 1e-5) * g_t + beta_t
            h = jnp.maximum(h, 0.0)

        # Output head: Linear (zero-padded to 128 lanes) -> Tanh -> rescale,
        # stored as a lane-dense (bn, 128) block.
        w_t = mlp_refs[4 * n_hidden][...]
        b_t = mlp_refs[4 * n_hidden + 1][...]
        h = jnp.dot(h, w_t, preferred_element_type=jnp.float32) + b_t
        o_ref[...] = jnp.tanh(h) * scale + bias

    return kernel


# ----------------- host-side (load-time) parameter folding ------------------

def _conv_as_dense(w_oihw, b, in_hw, in_border, in_feat, stride, conv_pad,
                   out_hw, out_border, out_feat, input_scale, dtype):
    """Fold one Conv2d into a dense matrix over flattened (C, H, W) activations.

    The input activation has a pre-materialized zero border of width
    `in_border` and is stored in a vector of length `in_feat` (>= raw size,
    padded with zeros).  The output is stored with a zero border of width
    `out_border` inside a vector of length `out_feat` (>= raw, lane-aligned).
    `input_scale` is multiplied into the dense matrix (used to fold 1/255).
    Bias is zero on border / padding columns, so relu keeps them exactly 0.
    """
    w = np.asarray(w_oihw, np.float32)
    b = np.asarray(b, np.float32)
    cout, cin, kh, kw = w.shape
    hin_s = in_hw[0] + 2 * in_border
    win_s = in_hw[1] + 2 * in_border
    ho, wo = out_hw
    ho_s = ho + 2 * out_border
    wo_s = wo + 2 * out_border
    assert cin * hin_s * win_s <= in_feat
    assert cout * ho_s * wo_s <= out_feat

    dense = np.zeros((in_feat, out_feat), np.float32)
    bvec = np.zeros((1, out_feat), np.float32)
    cin_ids = np.arange(cin)
    cout_ids = np.arange(cout)
    for oh in range(ho):
        for ow in range(wo):
            cols = (cout_ids * ho_s + oh + out_border) * wo_s + (ow + out_border)
            bvec[0, cols] = b
            for i in range(kh):
                for j in range(kw):
                    hs = oh * stride - conv_pad + i + in_border
                    ws = ow * stride - conv_pad + j + in_border
                    if not (0 <= hs < hin_s and 0 <= ws < win_s):
                        continue            # conv's zero padding -> contributes 0
                    rows = (cin_ids * hin_s + hs) * win_s + ws
                    dense[np.ix_(rows, cols)] += w[:, :, i, j].T
    dense *= input_scale
    return jnp.asarray(dense, dtype), jnp.asarray(bvec, jnp.float32)


def _spatial_softmax_mats(num_ch, h, w, f_rows, dtype):
    """Selection matrices turning SpatialSoftmax into two matmuls.

    seg2[q, c] = seg2[q, C+c] = 1 if flat position q belongs to channel c
    segxy[q, c]   = pos_x of q (same mask), columns [0, C)
    segxy[q, C+c] = pos_y of q (same mask), columns [C, 2C)
    Rows beyond the raw C*H*W (feature padding) are zero.
    denom = e @ seg2 (bn, 2C); num = e @ segxy (bn, 2C); feat = num / denom.
    """
    pos_x, pos_y = np.meshgrid(np.linspace(-1.0, 1.0, w, dtype=np.float32),
                               np.linspace(-1.0, 1.0, h, dtype=np.float32))
    px = np.tile(pos_x.reshape(-1), num_ch)          # (C*H*W,)
    py = np.tile(pos_y.reshape(-1), num_ch)
    ch = np.arange(num_ch * h * w) // (h * w)
    ind = (ch[:, None] == np.arange(num_ch)[None, :]).astype(np.float32)
    raw = num_ch * h * w
    seg2 = np.zeros((f_rows, 2 * num_ch), np.float32)
    segxy = np.zeros((f_rows, 2 * num_ch), np.float32)
    seg2[:raw, :num_ch] = ind
    seg2[:raw, num_ch:] = ind
    segxy[:raw, :num_ch] = ind * px[:, None]
    segxy[:raw, num_ch:] = ind * py[:, None]
    return jnp.asarray(seg2, dtype), jnp.asarray(segxy, dtype)


def prepare_fused_params(params, cfg, conv_dtype=jnp.bfloat16,
                         feat_align=256, out_align=128):
    """One-time folding of the PyTorch-layout parameters into the operand set
    consumed by the fused kernel (analogous to load-time weight preprocessing).
    conv_dtype=jnp.float32 for bit-closer fidelity; bf16 halves VMEM/HBM and
    runs the MXU at full rate.
    """
    convs = params["conv"]
    n_conv = len(convs)
    h = w = cfg["img_sz"]
    in_border = 0
    in_feat = cfg["input_n_channel"] * h * w        # raw image flat dim
    tensors = []
    for li, (cw, cb, stride, pad) in enumerate(convs):
        kh, kw = int(cw.shape[2]), int(cw.shape[3])
        ho = (h + 2 * pad - kh) // stride + 1
        wo = (w + 2 * pad - kw) // stride + 1
        out_border = convs[li + 1][3] if li + 1 < n_conv else 0
        cout = int(cw.shape[0])
        out_feat = _round_up(cout * (ho + 2 * out_border) * (wo + 2 * out_border),
                             feat_align)
        dense, bvec = _conv_as_dense(
            cw, cb, (h, w), in_border, in_feat, stride, pad,
            (ho, wo), out_border, out_feat,
            (1.0 / 255.0) if li == 0 else 1.0,       # fold uint8 scale into conv1
            conv_dtype)
        tensors += [dense, bvec]
        h, w, in_border, in_feat = ho, wo, out_border, out_feat

    c_last = int(convs[-1][0].shape[0])
    seg2, segxy = _spatial_softmax_mats(c_last, h, w, in_feat, conv_dtype)
    tensors += [seg2, segxy]

    for (mw, mb, g, beta) in params["mlp_hidden"]:
        tensors += [jnp.asarray(mw, jnp.float32), jnp.asarray(mb, jnp.float32),
                    jnp.asarray(g, jnp.float32), jnp.asarray(beta, jnp.float32)]

    ow, ob = params["mlp_out"]
    a_dim = int(ow.shape[1])
    out_cols = _round_up(a_dim, out_align)           # lane-dense output head
    ow_p = np.zeros((int(ow.shape[0]), out_cols), np.float32)
    ow_p[:, :a_dim] = np.asarray(ow, np.float32)
    ob_p = np.zeros((1, out_cols), np.float32)
    ob_p[:, :a_dim] = np.asarray(ob, np.float32).reshape(1, -1)
    tensors += [jnp.asarray(ow_p), jnp.asarray(ob_p)]

    return dict(
        tensors=tensors,
        n_conv=n_conv,
        n_hidden=len(params["mlp_hidden"]),
        action_dim=a_dim,
        out_cols=out_cols,
        scale=float(params["scale"]),
        bias=float(params["bias"]),
    )


# ------------------------------ forward wrapper ------------------------------

def sac_pi_forward(fused, image_u8, *, batch_block=512):
    """SACPiNetwork.forward(image) with append=None, latent=None, rec_type=None."""
    if image_u8.dtype != jnp.uint8:
        raise TypeError("SACPiNetwork.forward expects uint8 images")

    squeeze_lead = False
    seq_shape = None
    if image_u8.ndim == 3:                       # (C, H, W) -> add batch dim
        image_u8 = image_u8[None]
        squeeze_lead = True
    elif image_u8.ndim == 5:                     # (L, N, C, H, W) -> flatten L*N
        seq_shape = image_u8.shape[:2]
        image_u8 = image_u8.reshape((-1,) + image_u8.shape[2:])

    n = image_u8.shape[0]
    img_flat = image_u8.reshape(n, -1)           # free reshape; stays uint8 in HBM

    tensors = fused["tensors"]
    a_dim = fused["action_dim"]
    out_cols = fused["out_cols"]

    # Batch tile: multiple of 8 sublanes; if a single tile would cover the
    # whole batch but there is enough work, split into >=2 grid steps so
    # v7x's two TensorCores both get a share of the "parallel" axis.
    bn = min(n, batch_block)
    if n > 8 and pl.cdiv(n, bn) < 2:
        bn = pl.cdiv(n, 2)
    bn = max(8, _round_up(bn, 8))
    grid_n = pl.cdiv(n, bn)
    n_pad = grid_n * bn
    if n_pad != n:                               # pad so blocks divide the batch
        img_flat = jnp.pad(img_flat, ((0, n_pad - n), (0, 0)))

    # Image: the only pipelined/windowed input.  Weights & constants: whole
    # arrays resident in VMEM (single buffer, no per-step re-DMA).
    in_specs = [pl.BlockSpec((bn, img_flat.shape[1]), lambda i: (i, 0))]
    in_specs += [pl.BlockSpec(memory_space=pltpu.MemorySpace.VMEM)
                 for _ in tensors]
    out_specs = pl.BlockSpec((bn, out_cols), lambda i: (i, 0))

    kernel = _make_fused_kernel(fused["n_conv"], fused["n_hidden"],
                                fused["scale"], fused["bias"])

    out = pl.pallas_call(
        kernel,
        grid=(grid_n,),
        in_specs=in_specs,
        out_specs=out_specs,
        out_shape=jax.ShapeDtypeStruct((n_pad, out_cols), jnp.float32),
        compiler_params=pltpu.CompilerParams(
            dimension_semantics=("parallel",),
            vmem_limit_bytes=48 * 1024 * 1024),
    )(img_flat, *tensors)

    out = out[:n, :a_dim]                        # drop batch pad + lane pad
    if seq_shape is not None:
        out = out.reshape(seq_shape + (a_dim,))
    if squeeze_lead:
        out = out[0]
    return out


# ------------------------- synthetic params + reference ----------------------

def init_params(key):
    """Deterministic synthetic parameters matching the module's __init__ shapes."""
    cfg = dict(
        input_n_channel=4, img_sz=16,
        kernel_sz=[3, 3], stride=[2, 2], padding=[1, 1], n_channel=[8, 16],
        mlp_dim=[32, 32], action_dim=2, action_mag=2.0,
    )
    params = {}

    conv = []
    c_in = cfg["input_n_channel"]
    for li, c_out in enumerate(cfg["n_channel"]):
        k = cfg["kernel_sz"][li]
        key, kw_, kb_ = jax.random.split(key, 3)
        w = jax.random.normal(kw_, (c_out, c_in, k, k), jnp.float32) * 0.1
        b = jax.random.normal(kb_, (c_out,), jnp.float32) * 0.01
        conv.append((w, b, cfg["stride"][li], cfg["padding"][li]))
        c_in = c_out
    params["conv"] = conv

    dims = [2 * cfg["n_channel"][-1]] + cfg["mlp_dim"] + [cfg["action_dim"]]
    hidden = []
    for i in range(len(dims) - 2):
        key, kw_, kb_ = jax.random.split(key, 3)
        w = jax.random.normal(kw_, (dims[i], dims[i + 1]), jnp.float32) * 0.1
        b = jax.random.normal(kb_, (1, dims[i + 1]), jnp.float32) * 0.01
        g = jnp.ones((1, dims[i + 1]), jnp.float32)
        beta = jnp.zeros((1, dims[i + 1]), jnp.float32)
        hidden.append((w, b, g, beta))
    params["mlp_hidden"] = hidden
    key, kw_, kb_ = jax.random.split(key, 3)
    params["mlp_out"] = (
        jax.random.normal(kw_, (dims[-2], dims[-1]), jnp.float32) * 0.1,
        jax.random.normal(kb_, (1, dims[-1]), jnp.float32) * 0.01,
    )
    params["scale"] = float(cfg["action_mag"])   # (a_max - a_min)/2
    params["bias"] = 0.0                         # (a_max + a_min)/2
    return params, cfg


def _reference_forward(params, image_u8):
    """Pure-JAX (XLA) reference of SACPiNetwork.forward (rec_type=None)."""
    x = image_u8.astype(jnp.float32) / 255.0
    for (w, b, stride, pad) in params["conv"]:
        x = jax.lax.conv_general_dilated(
            x, w, window_strides=(stride, stride),
            padding=[(pad, pad), (pad, pad)],
            dimension_numbers=("NCHW", "OIHW", "NCHW"))
        x = jnp.maximum(x + b[None, :, None, None], 0.0)
    n, c, h, w_ = x.shape
    feat = x.reshape(n * c, h * w_)
    pos_x, pos_y = jnp.meshgrid(jnp.linspace(-1.0, 1.0, w_),
                                jnp.linspace(-1.0, 1.0, h))
    p = jax.nn.softmax(feat, axis=-1)
    ex = jnp.sum(p * pos_x.reshape(1, -1), axis=-1).reshape(n, c)
    ey = jnp.sum(p * pos_y.reshape(1, -1), axis=-1).reshape(n, c)
    hcur = jnp.concatenate([ex, ey], axis=-1)
    for (w, b, g, beta) in params["mlp_hidden"]:
        hcur = hcur @ w + b
        mu = jnp.mean(hcur, axis=-1, keepdims=True)
        var = jnp.mean((hcur - mu) ** 2, axis=-1, keepdims=True)
        hcur = jnp.maximum((hcur - mu) * jax.lax.rsqrt(var + 1e-5) * g + beta, 0.0)
    w, b = params["mlp_out"]
    return jnp.tanh(hcur @ w + b) * params["scale"] + params["bias"]


# ------------------------------------ main -----------------------------------

if __name__ == "__main__":
    key = jax.random.PRNGKey(0)
    params, cfg = init_params(key)
    fused = prepare_fused_params(params, cfg)

    img_key = jax.random.fold_in(key, 123)
    image = jax.random.randint(
        img_key, (2, cfg["input_n_channel"], cfg["img_sz"], cfg["img_sz"]),
        0, 256, dtype=jnp.int32).astype(jnp.uint8)

    forward = jax.jit(functools.partial(sac_pi_forward, fused))
    out = jax.block_until_ready(forward(image))

    assert out.shape == (2, cfg["action_dim"])
    assert bool(jnp.all(jnp.isfinite(out)))

    # Cross-check against a pure-JAX/XLA reference of the same forward pass
    # (tolerance covers bf16 conv/seg matrices + approximate reciprocal).
    ref = jax.block_until_ready(_reference_forward(params, image))
    max_err = float(jnp.max(jnp.abs(out - ref)))
    assert max_err < 0.1, f"kernel/reference mismatch: {max_err}"

    print("KERNEL_OK")
</pallas_src>

<mosaic_0001>
module attributes {stable_mosaic.version = 11 : i64} {
  func.func @kernel(%arg0: i32, %arg1: memref<8x1024xi8, #tpu.memory_space<vmem>>, %arg2: memref<1024x1024xbf16, #tpu.memory_space<vmem>>, %arg3: memref<1x1024xf32, #tpu.memory_space<vmem>>, %arg4: memref<1024x256xbf16, #tpu.memory_space<vmem>>, %arg5: memref<1x256xf32, #tpu.memory_space<vmem>>, %arg6: memref<256x32xbf16, #tpu.memory_space<vmem>>, %arg7: memref<256x32xbf16, #tpu.memory_space<vmem>>, %arg8: memref<32x32xf32, #tpu.memory_space<vmem>>, %arg9: memref<1x32xf32, #tpu.memory_space<vmem>>, %arg10: memref<1x32xf32, #tpu.memory_space<vmem>>, %arg11: memref<1x32xf32, #tpu.memory_space<vmem>>, %arg12: memref<32x32xf32, #tpu.memory_space<vmem>>, %arg13: memref<1x32xf32, #tpu.memory_space<vmem>>, %arg14: memref<1x32xf32, #tpu.memory_space<vmem>>, %arg15: memref<1x32xf32, #tpu.memory_space<vmem>>, %arg16: memref<32x128xf32, #tpu.memory_space<vmem>>, %arg17: memref<1x128xf32, #tpu.memory_space<vmem>>, %arg18: memref<8x128xf32, #tpu.memory_space<vmem>>) attributes {dimension_semantics = [#tpu.dimension_semantics<parallel>], iteration_bounds = array<i64: 1>, scalar_prefetch = 0 : i64, scratch_operands = 0 : i64, tpu.core_type = #tpu.core_type<tc>, window_params = [{transform_indices = @transform_0, window_bounds = array<i64: 8, 1024>}, {pipeline_mode = #tpu.pipeline_mode<synchronous>, transform_indices = @transform_1, window_bounds = array<i64: 1024, 1024>}, {pipeline_mode = #tpu.pipeline_mode<synchronous>, transform_indices = @transform_2, window_bounds = array<i64: 1, 1024>}, {pipeline_mode = #tpu.pipeline_mode<synchronous>, transform_indices = @transform_3, window_bounds = array<i64: 1024, 256>}, {pipeline_mode = #tpu.pipeline_mode<synchronous>, transform_indices = @transform_4, window_bounds = array<i64: 1, 256>}, {pipeline_mode = #tpu.pipeline_mode<synchronous>, transform_indices = @transform_5, window_bounds = array<i64: 256, 32>}, {pipeline_mode = #tpu.pipeline_mode<synchronous>, transform_indices = @transform_6, window_bounds = array<i64: 256, 32>}, {pipeline_mode = #tpu.pipeline_mode<synchronous>, transform_indices = @transform_7, window_bounds = array<i64: 32, 32>}, {pipeline_mode = #tpu.pipeline_mode<synchronous>, transform_indices = @transform_8, window_bounds = array<i64: 1, 32>}, {pipeline_mode = #tpu.pipeline_mode<synchronous>, transform_indices = @transform_9, window_bounds = array<i64: 1, 32>}, {pipeline_mode = #tpu.pipeline_mode<synchronous>, transform_indices = @transform_10, window_bounds = array<i64: 1, 32>}, {pipeline_mode = #tpu.pipeline_mode<synchronous>, transform_indices = @transform_11, window_bounds = array<i64: 32, 32>}, {pipeline_mode = #tpu.pipeline_mode<synchronous>, transform_indices = @transform_12, window_bounds = array<i64: 1, 32>}, {pipeline_mode = #tpu.pipeline_mode<synchronous>, transform_indices = @transform_13, window_bounds = array<i64: 1, 32>}, {pipeline_mode = #tpu.pipeline_mode<synchronous>, transform_indices = @transform_14, window_bounds = array<i64: 1, 32>}, {pipeline_mode = #tpu.pipeline_mode<synchronous>, transform_indices = @transform_15, window_bounds = array<i64: 32, 128>}, {pipeline_mode = #tpu.pipeline_mode<synchronous>, transform_indices = @transform_16, window_bounds = array<i64: 1, 128>}, {transform_indices = @transform_17, window_bounds = array<i64: 8, 128>}]} {
    %c0 = arith.constant 0 : index
    %c0_0 = arith.constant 0 : index
    %0 = vector.load %arg1[%c0, %c0_0] : memref<8x1024xi8, #tpu.memory_space<vmem>>, vector<8x1024xi8>
    %1 = arith.uitofp %0 : vector<8x1024xi8> to vector<8x1024xf32>
    %c0_1 = arith.constant 0 : index
    %c0_2 = arith.constant 0 : index
    %2 = vector.load %arg2[%c0_1, %c0_2] : memref<1024x1024xbf16, #tpu.memory_space<vmem>>, vector<1024x1024xbf16>
    %c0_3 = arith.constant 0 : index
    %c0_4 = arith.constant 0 : index
    %3 = vector.load %arg3[%c0_3, %c0_4] : memref<1x1024xf32, #tpu.memory_space<vmem>>, vector<1x1024xf32>
    %4 = arith.truncf %1 : vector<8x1024xf32> to vector<8x1024xbf16>
    %cst = arith.constant dense<0.000000e+00> : vector<8x1024xf32>
    %5 = tpu.matmul %4, %2, %cst {dimension_numbers = #tpu.dot_dimension_numbers<[1], [0], [0], [1], [0, 0, 1, 1], [], []>} : vector<8x1024xbf16>, vector<1024x1024xbf16>, vector<8x1024xf32> -> vector<8x1024xf32>
    %6 = vector.broadcast %3 : vector<1x1024xf32> to vector<8x1024xf32>
    %7 = arith.addf %5, %6 : vector<8x1024xf32>
    %cst_5 = arith.constant 0.000000e+00 : f32
    %8 = vector.broadcast %cst_5 : f32 to vector<8x1024xf32>
    %9 = arith.maximumf %7, %8 : vector<8x1024xf32>
    %c0_6 = arith.constant 0 : index
    %c0_7 = arith.constant 0 : index
    %10 = vector.load %arg4[%c0_6, %c0_7] : memref<1024x256xbf16, #tpu.memory_space<vmem>>, vector<1024x256xbf16>
    %c0_8 = arith.constant 0 : index
    %c0_9 = arith.constant 0 : index
    %11 = vector.load %arg5[%c0_8, %c0_9] : memref<1x256xf32, #tpu.memory_space<vmem>>, vector<1x256xf32>
    %12 = arith.truncf %9 : vector<8x1024xf32> to vector<8x1024xbf16>
    %cst_10 = arith.constant dense<0.000000e+00> : vector<8x256xf32>
    %13 = tpu.matmul %12, %10, %cst_10 {dimension_numbers = #tpu.dot_dimension_numbers<[1], [0], [0], [1], [0, 0, 1, 1], [], []>} : vector<8x1024xbf16>, vector<1024x256xbf16>, vector<8x256xf32> -> vector<8x256xf32>
    %14 = vector.broadcast %11 : vector<1x256xf32> to vector<8x256xf32>
    %15 = arith.addf %13, %14 : vector<8x256xf32>
    %cst_11 = arith.constant 0.000000e+00 : f32
    %16 = vector.broadcast %cst_11 : f32 to vector<8x256xf32>
    %17 = arith.maximumf %15, %16 : vector<8x256xf32>
    %cst_12 = arith.constant dense<0xFF800000> : vector<8xf32>
    %18 = vector.multi_reduction <maximumf>, %17, %cst_12 [1] : vector<8x256xf32> to vector<8xf32>
    %19 = vector.shape_cast %18 : vector<8xf32> to vector<8x1xf32>
    %20 = vector.broadcast %19 : vector<8x1xf32> to vector<8x256xf32>
    %21 = arith.subf %17, %20 : vector<8x256xf32>
    %22 = math.exp %21 : vector<8x256xf32>
    %23 = arith.truncf %22 : vector<8x256xf32> to vector<8x256xbf16>
    %c0_13 = arith.constant 0 : index
    %c0_14 = arith.constant 0 : index
    %24 = vector.load %arg6[%c0_13, %c0_14] : memref<256x32xbf16, #tpu.memory_space<vmem>>, vector<256x32xbf16>
    %cst_15 = arith.constant dense<0.000000e+00> : vector<8x32xf32>
    %25 = tpu.matmul %23, %24, %cst_15 {dimension_numbers = #tpu.dot_dimension_numbers<[1], [0], [0], [1], [0, 0, 1, 1], [], []>} : vector<8x256xbf16>, vector<256x32xbf16>, vector<8x32xf32> -> vector<8x32xf32>
    %c0_16 = arith.constant 0 : index
    %c0_17 = arith.constant 0 : index
    %26 = vector.load %arg7[%c0_16, %c0_17] : memref<256x32xbf16, #tpu.memory_space<vmem>>, vector<256x32xbf16>
    %cst_18 = arith.constant dense<0.000000e+00> : vector<8x32xf32>
    %27 = tpu.matmul %23, %26, %cst_18 {dimension_numbers = #tpu.dot_dimension_numbers<[1], [0], [0], [1], [0, 0, 1, 1], [], []>} : vector<8x256xbf16>, vector<256x32xbf16>, vector<8x32xf32> -> vector<8x32xf32>
    %cst_19 = arith.constant 9.99999968E-21 : f32
    %28 = vector.broadcast %cst_19 : f32 to vector<8x32xf32>
    %29 = arith.maximumf %25, %28 : vector<8x32xf32>
    %30 = tpu.reciprocal %29 {approx = true} : vector<8x32xf32> -> vector<8x32xf32>
    %31 = arith.mulf %27, %30 : vector<8x32xf32>
    %c0_20 = arith.constant 0 : index
    %c0_21 = arith.constant 0 : index
    %32 = vector.load %arg8[%c0_20, %c0_21] : memref<32x32xf32, #tpu.memory_space<vmem>>, vector<32x32xf32>
    %c0_22 = arith.constant 0 : index
    %c0_23 = arith.constant 0 : index
    %33 = vector.load %arg9[%c0_22, %c0_23] : memref<1x32xf32, #tpu.memory_space<vmem>>, vector<1x32xf32>
    %c0_24 = arith.constant 0 : index
    %c0_25 = arith.constant 0 : index
    %34 = vector.load %arg10[%c0_24, %c0_25] : memref<1x32xf32, #tpu.memory_space<vmem>>, vector<1x32xf32>
    %c0_26 = arith.constant 0 : index
    %c0_27 = arith.constant 0 : index
    %35 = vector.load %arg11[%c0_26, %c0_27] : memref<1x32xf32, #tpu.memory_space<vmem>>, vector<1x32xf32>
    %cst_28 = arith.constant dense<0.000000e+00> : vector<8x32xf32>
    %36 = tpu.matmul %31, %32, %cst_28 {dimension_numbers = #tpu.dot_dimension_numbers<[1], [0], [0], [1], [0, 0, 1, 1], [], []>} : vector<8x32xf32>, vector<32x32xf32>, vector<8x32xf32> -> vector<8x32xf32>
    %37 = vector.broadcast %33 : vector<1x32xf32> to vector<8x32xf32>
    %38 = arith.addf %36, %37 : vector<8x32xf32>
    %cst_29 = arith.constant dense<0.000000e+00> : vector<8xf32>
    %39 = vector.multi_reduction <add>, %38, %cst_29 [1] : vector<8x32xf32> to vector<8xf32>
    %40 = vector.shape_cast %39 : vector<8xf32> to vector<8x1xf32>
    %cst_30 = arith.constant 3.200000e+01 : f32
    %41 = vector.broadcast %cst_30 : f32 to vector<8x1xf32>
    %42 = arith.divf %40, %41 : vector<8x1xf32>
    %43 = vector.broadcast %42 : vector<8x1xf32> to vector<8x32xf32>
    %44 = arith.subf %38, %43 : vector<8x32xf32>
    %45 = arith.mulf %44, %44 : vector<8x32xf32>
    %cst_31 = arith.constant dense<0.000000e+00> : vector<8xf32>
    %46 = vector.multi_reduction <add>, %45, %cst_31 [1] : vector<8x32xf32> to vector<8xf32>
    %47 = vector.shape_cast %46 : vector<8xf32> to vector<8x1xf32>
    %cst_32 = arith.constant 3.200000e+01 : f32
    %48 = vector.broadcast %cst_32 : f32 to vector<8x1xf32>
    %49 = arith.divf %47, %48 : vector<8x1xf32>
    %50 = vector.broadcast %42 : vector<8x1xf32> to vector<8x32xf32>
    %51 = arith.subf %38, %50 : vector<8x32xf32>
    %cst_33 = arith.constant 9.99999974E-6 : f32
    %52 = vector.broadcast %cst_33 : f32 to vector<8x1xf32>
    %53 = arith.addf %49, %52 : vector<8x1xf32>
    %54 = math.rsqrt %53 : vector<8x1xf32>
    %55 = vector.broadcast %54 : vector<8x1xf32> to vector<8x32xf32>
    %56 = arith.mulf %51, %55 : vector<8x32xf32>
    %57 = vector.broadcast %34 : vector<1x32xf32> to vector<8x32xf32>
    %58 = arith.mulf %56, %57 : vector<8x32xf32>
    %59 = vector.broadcast %35 : vector<1x32xf32> to vector<8x32xf32>
    %60 = arith.addf %58, %59 : vector<8x32xf32>
    %cst_34 = arith.constant 0.000000e+00 : f32
    %61 = vector.broadcast %cst_34 : f32 to vector<8x32xf32>
    %62 = arith.maximumf %60, %61 : vector<8x32xf32>
    %c0_35 = arith.constant 0 : index
    %c0_36 = arith.constant 0 : index
    %63 = vector.load %arg12[%c0_35, %c0_36] : memref<32x32xf32, #tpu.memory_space<vmem>>, vector<32x32xf32>
    %c0_37 = arith.constant 0 : index
    %c0_38 = arith.constant 0 : index
    %64 = vector.load %arg13[%c0_37, %c0_38] : memref<1x32xf32, #tpu.memory_space<vmem>>, vector<1x32xf32>
    %c0_39 = arith.constant 0 : index
    %c0_40 = arith.constant 0 : index
    %65 = vector.load %arg14[%c0_39, %c0_40] : memref<1x32xf32, #tpu.memory_space<vmem>>, vector<1x32xf32>
    %c0_41 = arith.constant 0 : index
    %c0_42 = arith.constant 0 : index
    %66 = vector.load %arg15[%c0_41, %c0_42] : memref<1x32xf32, #tpu.memory_space<vmem>>, vector<1x32xf32>
    %cst_43 = arith.constant dense<0.000000e+00> : vector<8x32xf32>
    %67 = tpu.matmul %62, %63, %cst_43 {dimension_numbers = #tpu.dot_dimension_numbers<[1], [0], [0], [1], [0, 0, 1, 1], [], []>} : vector<8x32xf32>, vector<32x32xf32>, vector<8x32xf32> -> vector<8x32xf32>
    %68 = vector.broadcast %64 : vector<1x32xf32> to vector<8x32xf32>
    %69 = arith.addf %67, %68 : vector<8x32xf32>
    %cst_44 = arith.constant dense<0.000000e+00> : vector<8xf32>
    %70 = vector.multi_reduction <add>, %69, %cst_44 [1] : vector<8x32xf32> to vector<8xf32>
    %71 = vector.shape_cast %70 : vector<8xf32> to vector<8x1xf32>
    %cst_45 = arith.constant 3.200000e+01 : f32
    %72 = vector.broadcast %cst_45 : f32 to vector<8x1xf32>
    %73 = arith.divf %71, %72 : vector<8x1xf32>
    %74 = vector.broadcast %73 : vector<8x1xf32> to vector<8x32xf32>
    %75 = arith.subf %69, %74 : vector<8x32xf32>
    %76 = arith.mulf %75, %75 : vector<8x32xf32>
    %cst_46 = arith.constant dense<0.000000e+00> : vector<8xf32>
    %77 = vector.multi_reduction <add>, %76, %cst_46 [1] : vector<8x32xf32> to vector<8xf32>
    %78 = vector.shape_cast %77 : vector<8xf32> to vector<8x1xf32>
    %cst_47 = arith.constant 3.200000e+01 : f32
    %79 = vector.broadcast %cst_47 : f32 to vector<8x1xf32>
    %80 = arith.divf %78, %79 : vector<8x1xf32>
    %81 = vector.broadcast %73 : vector<8x1xf32> to vector<8x32xf32>
    %82 = arith.subf %69, %81 : vector<8x32xf32>
    %cst_48 = arith.constant 9.99999974E-6 : f32
    %83 = vector.broadcast %cst_48 : f32 to vector<8x1xf32>
    %84 = arith.addf %80, %83 : vector<8x1xf32>
    %85 = math.rsqrt %84 : vector<8x1xf32>
    %86 = vector.broadcast %85 : vector<8x1xf32> to vector<8x32xf32>
    %87 = arith.mulf %82, %86 : vector<8x32xf32>
    %88 = vector.broadcast %65 : vector<1x32xf32> to vector<8x32xf32>
    %89 = arith.mulf %87, %88 : vector<8x32xf32>
    %90 = vector.broadcast %66 : vector<1x32xf32> to vector<8x32xf32>
    %91 = arith.addf %89, %90 : vector<8x32xf32>
    %cst_49 = arith.constant 0.000000e+00 : f32
    %92 = vector.broadcast %cst_49 : f32 to vector<8x32xf32>
    %93 = arith.maximumf %91, %92 : vector<8x32xf32>
    %c0_50 = arith.constant 0 : index
    %c0_51 = arith.constant 0 : index
    %94 = vector.load %arg16[%c0_50, %c0_51] : memref<32x128xf32, #tpu.memory_space<vmem>>, vector<32x128xf32>
    %c0_52 = arith.constant 0 : index
    %c0_53 = arith.constant 0 : index
    %95 = vector.load %arg17[%c0_52, %c0_53] : memref<1x128xf32, #tpu.memory_space<vmem>>, vector<1x128xf32>
    %cst_54 = arith.constant dense<0.000000e+00> : vector<8x128xf32>
    %96 = tpu.matmul %93, %94, %cst_54 {dimension_numbers = #tpu.dot_dimension_numbers<[1], [0], [0], [1], [0, 0, 1, 1], [], []>} : vector<8x32xf32>, vector<32x128xf32>, vector<8x128xf32> -> vector<8x128xf32>
    %97 = vector.broadcast %95 : vector<1x128xf32> to vector<8x128xf32>
    %98 = arith.addf %96, %97 : vector<8x128xf32>
    %99 = math.tanh %98 : vector<8x128xf32>
    %cst_55 = arith.constant 2.000000e+00 : f32
    %100 = vector.broadcast %cst_55 : f32 to vector<8x128xf32>
    %101 = arith.mulf %99, %100 : vector<8x128xf32>
    %cst_56 = arith.constant 0.000000e+00 : f32
    %102 = vector.broadcast %cst_56 : f32 to vector<8x128xf32>
    %103 = arith.addf %101, %102 : vector<8x128xf32>
    %c0_57 = arith.constant 0 : index
    %c0_58 = arith.constant 0 : index
    %104 = vector.load %arg18[%c0_57, %c0_58] : memref<8x128xf32, #tpu.memory_space<vmem>>, vector<8x128xf32>
    tpu.vector_store %arg18[%c0_57, %c0_58], %103 {strides = array<i32>} : memref<8x128xf32, #tpu.memory_space<vmem>>, vector<8x128xf32>,
    return
  }
  func.func @transform_0(%arg0: i32) -> (i32, i32) {
    %c0_i32 = arith.constant 0 : i32
    %c0_i32_0 = arith.constant 0 : i32
    return %arg0, %c0_i32 : i32, i32
  }
  func.func @transform_1(%arg0: i32) -> (i32, i32) {
    %c0_i32 = arith.constant 0 : i32
    %c0_i32_0 = arith.constant 0 : i32
    %c0_i32_1 = arith.constant 0 : i32
    return %c0_i32, %c0_i32_0 : i32, i32
  }
  func.func @transform_2(%arg0: i32) -> (i32, i32) {
    %c0_i32 = arith.constant 0 : i32
    %c0_i32_0 = arith.constant 0 : i32
    %c0_i32_1 = arith.constant 0 : i32
    return %c0_i32, %c0_i32_0 : i32, i32
  }
  func.func @transform_3(%arg0: i32) -> (i32, i32) {
    %c0_i32 = arith.constant 0 : i32
    %c0_i32_0 = arith.constant 0 : i32
    %c0_i32_1 = arith.constant 0 : i32
    return %c0_i32, %c0_i32_0 : i32, i32
  }
  func.func @transform_4(%arg0: i32) -> (i32, i32) {
    %c0_i32 = arith.constant 0 : i32
    %c0_i32_0 = arith.constant 0 : i32
    %c0_i32_1 = arith.constant 0 : i32
    return %c0_i32, %c0_i32_0 : i32, i32
  }
  func.func @transform_5(%arg0: i32) -> (i32, i32) {
    %c0_i32 = arith.constant 0 : i32
    %c0_i32_0 = arith.constant 0 : i32
    %c0_i32_1 = arith.constant 0 : i32
    return %c0_i32, %c0_i32_0 : i32, i32
  }
  func.func @transform_6(%arg0: i32) -> (i32, i32) {
    %c0_i32 = arith.constant 0 : i32
    %c0_i32_0 = arith.constant 0 : i32
    %c0_i32_1 = arith.constant 0 : i32
    return %c0_i32, %c0_i32_0 : i32, i32
  }
  func.func @transform_7(%arg0: i32) -> (i32, i32) {
    %c0_i32 = arith.constant 0 : i32
    %c0_i32_0 = arith.constant 0 : i32
    %c0_i32_1 = arith.constant 0 : i32
    return %c0_i32, %c0_i32_0 : i32, i32
  }
  func.func @transform_8(%arg0: i32) -> (i32, i32) {
    %c0_i32 = arith.constant 0 : i32
    %c0_i32_0 = arith.constant 0 : i32
    %c0_i32_1 = arith.constant 0 : i32
    return %c0_i32, %c0_i32_0 : i32, i32
  }
  func.func @transform_9(%arg0: i32) -> (i32, i32) {
    %c0_i32 = arith.constant 0 : i32
    %c0_i32_0 = arith.constant 0 : i32
    %c0_i32_1 = arith.constant 0 : i32
    return %c0_i32, %c0_i32_0 : i32, i32
  }
  func.func @transform_10(%arg0: i32) -> (i32, i32) {
    %c0_i32 = arith.constant 0 : i32
    %c0_i32_0 = arith.constant 0 : i32
    %c0_i32_1 = arith.constant 0 : i32
    return %c0_i32, %c0_i32_0 : i32, i32
  }
  func.func @transform_11(%arg0: i32) -> (i32, i32) {
    %c0_i32 = arith.constant 0 : i32
    %c0_i32_0 = arith.constant 0 : i32
    %c0_i32_1 = arith.constant 0 : i32
    return %c0_i32, %c0_i32_0 : i32, i32
  }
  func.func @transform_12(%arg0: i32) -> (i32, i32) {
    %c0_i32 = arith.constant 0 : i32
    %c0_i32_0 = arith.constant 0 : i32
    %c0_i32_1 = arith.constant 0 : i32
    return %c0_i32, %c0_i32_0 : i32, i32
  }
  func.func @transform_13(%arg0: i32) -> (i32, i32) {
    %c0_i32 = arith.constant 0 : i32
    %c0_i32_0 = arith.constant 0 : i32
    %c0_i32_1 = arith.constant 0 : i32
    return %c0_i32, %c0_i32_0 : i32, i32
  }
  func.func @transform_14(%arg0: i32) -> (i32, i32) {
    %c0_i32 = arith.constant 0 : i32
    %c0_i32_0 = arith.constant 0 : i32
    %c0_i32_1 = arith.constant 0 : i32
    return %c0_i32, %c0_i32_0 : i32, i32
  }
  func.func @transform_15(%arg0: i32) -> (i32, i32) {
    %c0_i32 = arith.constant 0 : i32
    %c0_i32_0 = arith.constant 0 : i32
    %c0_i32_1 = arith.constant 0 : i32
    return %c0_i32, %c0_i32_0 : i32, i32
  }
  func.func @transform_16(%arg0: i32) -> (i32, i32) {
    %c0_i32 = arith.constant 0 : i32
    %c0_i32_0 = arith.constant 0 : i32
    %c0_i32_1 = arith.constant 0 : i32
    return %c0_i32, %c0_i32_0 : i32, i32
  }
  func.func @transform_17(%arg0: i32) -> (i32, i32) {
    %c0_i32 = arith.constant 0 : i32
    %c0_i32_0 = arith.constant 0 : i32
    return %arg0, %c0_i32 : i32, i32
  }
}

</mosaic_0001>

<llo_original>
// kernel: sac_pi_forward.1
$region0: #{sac_pi_forward.1}
  #allocation0 [shape = 'u32[]', space=smem, size = 0x4, offset = 0x4, fixed_abs, tag = 'smem constant byte address 0x4 - core index']
  #allocation1 [shape = 'u32[144,128]{1,0:T(1,128)}', space=vmem, size = 0x12000, scoped, tag = 'internal scratch']
  %s0 = inlined_call_operand.vmem [shape: u8[8,1024], index: 0, kind: input, shape index: {}]
  %s1 = inlined_call_operand.vmem [shape: bf16[1024,1024], index: 1, kind: input, shape index: {}]
  %s2 = inlined_call_operand.vmem [shape: f32[1,1024], index: 2, kind: input, shape index: {}]
  %s3 = inlined_call_operand.vmem [shape: bf16[1024,256], index: 3, kind: input, shape index: {}]
  %s4 = inlined_call_operand.vmem [shape: f32[1,256], index: 4, kind: input, shape index: {}]
  %s5 = inlined_call_operand.vmem [shape: bf16[256,32], index: 5, kind: input, shape index: {}]
  %s6 = inlined_call_operand.vmem [shape: bf16[256,32], index: 6, kind: input, shape index: {}]
  %s7 = inlined_call_operand.vmem [shape: f32[32,32], index: 7, kind: input, shape index: {}]
  %s8 = inlined_call_operand.vmem [shape: f32[1,32], index: 8, kind: input, shape index: {}]
  %s9 = inlined_call_operand.vmem [shape: f32[1,32], index: 9, kind: input, shape index: {}, may-alias: {9,13}]
  %s10 = inlined_call_operand.vmem [shape: f32[1,32], index: 10, kind: input, shape index: {}, may-alias: {10,14}]
  %s11 = inlined_call_operand.vmem [shape: f32[32,32], index: 11, kind: input, shape index: {}]
  %s12 = inlined_call_operand.vmem [shape: f32[1,32], index: 12, kind: input, shape index: {}]
  %s13 = inlined_call_operand.vmem [shape: f32[1,32], index: 13, kind: input, shape index: {}, may-alias: {9,13}]
  %s14 = inlined_call_operand.vmem [shape: f32[1,32], index: 14, kind: input, shape index: {}, may-alias: {10,14}]
  %s15 = inlined_call_operand.vmem [shape: f32[32,128], index: 15, kind: input, shape index: {}]
  %s16 = inlined_call_operand.vmem [shape: f32[1,128], index: 16, kind: input, shape index: {}]
  %s17 = inlined_call_operand.vmem [shape: f32[8,128], index: 17, kind: output, shape index: {}]
  %s18 = sld [smem:[#allocation0]]
  $region78: #{sac_pi_forward.1} parent=0
    _
  %s20 = ssub.s32 1, %s18
  %s21 = scalar_select 0, %s20, %s18
  // Predicated region
  $region2: #{sac_pi_forward.1} parent=0 // pred_check
    _
  $region3: #{sac_pi_forward.1} parent=0 // pred_check_branch
    %23 = sbr.rel (0) target = $region5
  $region4: #{sac_pi_forward.1} parent=0 // pred_region
    _
  $region5: #{sac_pi_forward.1} parent=0 // pred_fallthru
    _
  // Predicated region
  $region6: #{sac_pi_forward.1} parent=0 // pred_check
    _
  $region7: #{sac_pi_forward.1} parent=0 // pred_check_branch
    %25 = sbr.rel (0) target = $region9
  $region8: #{sac_pi_forward.1} parent=0 // pred_region
    _
  $region9: #{sac_pi_forward.1} parent=0 // pred_fallthru
    _
  // Predicated region
  $region10: #{sac_pi_forward.1} parent=0 // pred_check
    _
  $region11: #{sac_pi_forward.1} parent=0 // pred_check_branch
    %27 = sbr.rel (0) target = $region13
  $region12: #{sac_pi_forward.1} parent=0 // pred_region
    _
  $region13: #{sac_pi_forward.1} parent=0 // pred_fallthru
    _
  // Predicated region
  $region14: #{sac_pi_forward.1} parent=0 // pred_check
    _
  $region15: #{sac_pi_forward.1} parent=0 // pred_check_branch
    %29 = sbr.rel (0) target = $region17
  $region16: #{sac_pi_forward.1} parent=0 // pred_region
    _
  $region17: #{sac_pi_forward.1} parent=0 // pred_fallthru
    _
  // Predicated region
  $region18: #{sac_pi_forward.1} parent=0 // pred_check
    _
  $region19: #{sac_pi_forward.1} parent=0 // pred_check_branch
    %31 = sbr.rel (0) target = $region21
  $region20: #{sac_pi_forward.1} parent=0 // pred_region
    _
  $region21: #{sac_pi_forward.1} parent=0 // pred_fallthru
    _
  // Predicated region
  $region22: #{sac_pi_forward.1} parent=0 // pred_check
    _
  $region23: #{sac_pi_forward.1} parent=0 // pred_check_branch
    %33 = sbr.rel (0) target = $region25
  $region24: #{sac_pi_forward.1} parent=0 // pred_region
    _
  $region25: #{sac_pi_forward.1} parent=0 // pred_fallthru
    _
  // Predicated region
  $region26: #{sac_pi_forward.1} parent=0 // pred_check
    _
  $region27: #{sac_pi_forward.1} parent=0 // pred_check_branch
    %35 = sbr.rel (0) target = $region29
  $region28: #{sac_pi_forward.1} parent=0 // pred_region
    _
  $region29: #{sac_pi_forward.1} parent=0 // pred_fallthru
    _
  // Predicated region
  $region30: #{sac_pi_forward.1} parent=0 // pred_check
    _
  $region31: #{sac_pi_forward.1} parent=0 // pred_check_branch
    %37 = sbr.rel (0) target = $region33
  $region32: #{sac_pi_forward.1} parent=0 // pred_region
    _
  $region33: #{sac_pi_forward.1} parent=0 // pred_fallthru
    _
  // Predicated region
  $region34: #{sac_pi_forward.1} parent=0 // pred_check
    _
  $region35: #{sac_pi_forward.1} parent=0 // pred_check_branch
    %39 = sbr.rel (0) target = $region37
  $region36: #{sac_pi_forward.1} parent=0 // pred_region
    _
  $region37: #{sac_pi_forward.1} parent=0 // pred_fallthru
    _
  // Predicated region
  $region38: #{sac_pi_forward.1} parent=0 // pred_check
    _
  $region39: #{sac_pi_forward.1} parent=0 // pred_check_branch
    %41 = sbr.rel (0) target = $region41
  $region40: #{sac_pi_forward.1} parent=0 // pred_region
    _
  $region41: #{sac_pi_forward.1} parent=0 // pred_fallthru
    _
  // Predicated region
  $region42: #{sac_pi_forward.1} parent=0 // pred_check
    _
  $region43: #{sac_pi_forward.1} parent=0 // pred_check_branch
    %43 = sbr.rel (0) target = $region45
  $region44: #{sac_pi_forward.1} parent=0 // pred_region
    _
  $region45: #{sac_pi_forward.1} parent=0 // pred_fallthru
    _
  // Predicated region
  $region46: #{sac_pi_forward.1} parent=0 // pred_check
    _
  $region47: #{sac_pi_forward.1} parent=0 // pred_check_branch
    %45 = sbr.rel (0) target = $region49
  $region48: #{sac_pi_forward.1} parent=0 // pred_region
    _
  $region49: #{sac_pi_forward.1} parent=0 // pred_fallthru
    _
  // Predicated region
  $region50: #{sac_pi_forward.1} parent=0 // pred_check
    _
  $region51: #{sac_pi_forward.1} parent=0 // pred_check_branch
    %47 = sbr.rel (0) target = $region53
  $region52: #{sac_pi_forward.1} parent=0 // pred_region
    _
  $region53: #{sac_pi_forward.1} parent=0 // pred_fallthru
    _
  // Predicated region
  $region54: #{sac_pi_forward.1} parent=0 // pred_check
    _
  $region55: #{sac_pi_forward.1} parent=0 // pred_check_branch
    %49 = sbr.rel (0) target = $region57
  $region56: #{sac_pi_forward.1} parent=0 // pred_region
    _
  $region57: #{sac_pi_forward.1} parent=0 // pred_fallthru
    _
  // Predicated region
  $region58: #{sac_pi_forward.1} parent=0 // pred_check
    _
  $region59: #{sac_pi_forward.1} parent=0 // pred_check_branch
    %51 = sbr.rel (0) target = $region61
  $region60: #{sac_pi_forward.1} parent=0 // pred_region
    _
  $region61: #{sac_pi_forward.1} parent=0 // pred_fallthru
    _
  // Predicated region
  $region62: #{sac_pi_forward.1} parent=0 // pred_check
    _
  $region63: #{sac_pi_forward.1} parent=0 // pred_check_branch
    %53 = sbr.rel (0) target = $region65
  $region64: #{sac_pi_forward.1} parent=0 // pred_region
    _
  $region65: #{sac_pi_forward.1} parent=0 // pred_fallthru
    _
  // Predicated region
  $region66: #{sac_pi_forward.1} parent=0 // pred_check
    _
  $region67: #{sac_pi_forward.1} parent=0 // pred_check_branch
    %55 = sbr.rel (0) target = $region69
  $region68: #{sac_pi_forward.1} parent=0 // pred_region
    _
  $region69: #{sac_pi_forward.1} parent=0 // pred_fallthru
    _
  %v57 = vld [vmem:[%s0] sm:$0xff]
  %v58 = vld [vmem:[%s0 + $0x8] sm:$0xff]
  %v59 = vld [vmem:[%s1] sm:$0xff]
  %v60 = vld [vmem:[%s1 + $0x8] sm:$0xff]
  %v61 = vld [vmem:[%s1 + $0x10] sm:$0xff]
  %v62 = vld [vmem:[%s1 + $0x18] sm:$0xff]
  %v63 = vld [vmem:[%s1 + $0x20] sm:$0xff]
  %v64 = vld [vmem:[%s1 + $0x28] sm:$0xff]
  %v65 = vld [vmem:[%s1 + $0x30] sm:$0xff]
  %v66 = vld [vmem:[%s1 + $0x38] sm:$0xff]
  %v67 = vld [vmem:[%s1 + $0x40] sm:$0xff]
  %v68 = vld [vmem:[%s1 + $0x48] sm:$0xff]
  %v69 = vld [vmem:[%s1 + $0x50] sm:$0xff]
  %v70 = vld [vmem:[%s1 + $0x58] sm:$0xff]
  %v71 = vld [vmem:[%s1 + $0x60] sm:$0xff]
  %v72 = vld [vmem:[%s1 + $0x68] sm:$0xff]
  %v73 = vld [vmem:[%s1 + $0x70] sm:$0xff]
  %v74 = vld [vmem:[%s1 + $0x78] sm:$0xff]
  %v75 = vld [vmem:[%s1 + $0x80] sm:$0xff]
  %v76 = vld [vmem:[%s1 + $0x88] sm:$0xff]
  %v77 = vld [vmem:[%s1 + $0x90] sm:$0xff]
  %v78 = vld [vmem:[%s1 + $0x98] sm:$0xff]
  %v79 = vld [vmem:[%s1 + $0xa0] sm:$0xff]
  %v80 = vld [vmem:[%s1 + $0xa8] sm:$0xff]
  %v81 = vld [vmem:[%s1 + $0xb0] sm:$0xff]
  %v82 = vld [vmem:[%s1 + $0xb8] sm:$0xff]
  %v83 = vld [vmem:[%s1 + $0xc0] sm:$0xff]
  %v84 = vld [vmem:[%s1 + $0xc8] sm:$0xff]
  %v85 = vld [vmem:[%s1 + $0xd0] sm:$0xff]
  %v86 = vld [vmem:[%s1 + $0xd8] sm:$0xff]
  %v87 = vld [vmem:[%s1 + $0xe0] sm:$0xff]
  %v88 = vld [vmem:[%s1 + $0xe8] sm:$0xff]
  %v89 = vld [vmem:[%s1 + $0xf0] sm:$0xff]
  %v90 = vld [vmem:[%s1 + $0xf8] sm:$0xff]
  %v91 = vld [vmem:[%s1 + $0x100] sm:$0xff]
  %v92 = vld [vmem:[%s1 + $0x108] sm:$0xff]
  %v93 = vld [vmem:[%s1 + $0x110] sm:$0xff]
  %v94 = vld [vmem:[%s1 + $0x118] sm:$0xff]
  %v95 = vld [vmem:[%s1 + $0x120] sm:$0xff]
  %v96 = vld [vmem:[%s1 + $0x128] sm:$0xff]
  %v97 = vld [vmem:[%s1 + $0x130] sm:$0xff]
  %v98 = vld [vmem:[%s1 + $0x138] sm:$0xff]
  %v99 = vld [vmem:[%s1 + $0x140] sm:$0xff]
  %v100 = vld [vmem:[%s1 + $0x148] sm:$0xff]
  %v101 = vld [vmem:[%s1 + $0x150] sm:$0xff]
  %v102 = vld [vmem:[%s1 + $0x158] sm:$0xff]
  %v103 = vld [vmem:[%s1 + $0x160] sm:$0xff]
  %v104 = vld [vmem:[%s1 + $0x168] sm:$0xff]
  %v105 = vld [vmem:[%s1 + $0x170] sm:$0xff]
  %v106 = vld [vmem:[%s1 + $0x178] sm:$0xff]
  %v107 = vld [vmem:[%s1 + $0x180] sm:$0xff]
  %v108 = vld [vmem:[%s1 + $0x188] sm:$0xff]
  %v109 = vld [vmem:[%s1 + $0x190] sm:$0xff]
  %v110 = vld [vmem:[%s1 + $0x198] sm:$0xff]
  %v111 = vld [vmem:[%s1 + $0x1a0] sm:$0xff]
  %v112 = vld [vmem:[%s1 + $0x1a8] sm:$0xff]
  %v113 = vld [vmem:[%s1 + $0x1b0] sm:$0xff]
  %v114 = vld [vmem:[%s1 + $0x1b8] sm:$0xff]
  %v115 = vld [vmem:[%s1 + $0x1c0] sm:$0xff]
  %v116 = vld [vmem:[%s1 + $0x1c8] sm:$0xff]
  %v117 = vld [vmem:[%s1 + $0x1d0] sm:$0xff]
  %v118 = vld [vmem:[%s1 + $0x1d8] sm:$0xff]
  %v119 = vld [vmem:[%s1 + $0x1e0] sm:$0xff]
  %v120 = vld [vmem:[%s1 + $0x1e8] sm:$0xff]
  %v121 = vld [vmem:[%s1 + $0x1f0] sm:$0xff]
  %v122 = vld [vmem:[%s1 + $0x1f8] sm:$0xff]
  %v123 = vld [vmem:[%s1 + $0x200] sm:$0xff]
  %v124 = vld [vmem:[%s1 + $0x208] sm:$0xff]
  %v125 = vld [vmem:[%s1 + $0x210] sm:$0xff]
  %v126 = vld [vmem:[%s1 + $0x218] sm:$0xff]
  %v127 = vld [vmem:[%s1 + $0x220] sm:$0xff]
  %v128 = vld [vmem:[%s1 + $0x228] sm:$0xff]
  %v129 = vld [vmem:[%s1 + $0x230] sm:$0xff]
  %v130 = vld [vmem:[%s1 + $0x238] sm:$0xff]
  %v131 = vld [vmem:[%s1 + $0x240] sm:$0xff]
  %v132 = vld [vmem:[%s1 + $0x248] sm:$0xff]
  %v133 = vld [vmem:[%s1 + $0x250] sm:$0xff]
  %v134 = vld [vmem:[%s1 + $0x258] sm:$0xff]
  %v135 = vld [vmem:[%s1 + $0x260] sm:$0xff]
  %v136 = vld [vmem:[%s1 + $0x268] sm:$0xff]
  %v137 = vld [vmem:[%s1 + $0x270] sm:$0xff]
  %v138 = vld [vmem:[%s1 + $0x278] sm:$0xff]
  %v139 = vld [vmem:[%s1 + $0x280] sm:$0xff]
  %v140 = vld [vmem:[%s1 + $0x288] sm:$0xff]
  %v141 = vld [vmem:[%s1 + $0x290] sm:$0xff]
  %v142 = vld [vmem:[%s1 + $0x298] sm:$0xff]
  %v143 = vld [vmem:[%s1 + $0x2a0] sm:$0xff]
  %v144 = vld [vmem:[%s1 + $0x2a8] sm:$0xff]
  %v145 = vld [vmem:[%s1 + $0x2b0] sm:$0xff]
  %v146 = vld [vmem:[%s1 + $0x2b8] sm:$0xff]
  %v147 = vld [vmem:[%s1 + $0x2c0] sm:$0xff]
  %v148 = vld [vmem:[%s1 + $0x2c8] sm:$0xff]
  %v149 = vld [vmem:[%s1 + $0x2d0] sm:$0xff]
  %v150 = vld [vmem:[%s1 + $0x2d8] sm:$0xff]
  %v151 = vld [vmem:[%s1 + $0x2e0] sm:$0xff]
  %v152 = vld [vmem:[%s1 + $0x2e8] sm:$0xff]
  %v153 = vld [vmem:[%s1 + $0x2f0] sm:$0xff]
  %v154 = vld [vmem:[%s1 + $0x2f8] sm:$0xff]
  %v155 = vld [vmem:[%s1 + $0x300] sm:$0xff]
  %v156 = vld [vmem:[%s1 + $0x308] sm:$0xff]
  %v157 = vld [vmem:[%s1 + $0x310] sm:$0xff]
  %v158 = vld [vmem:[%s1 + $0x318] sm:$0xff]
  %v159 = vld [vmem:[%s1 + $0x320] sm:$0xff]
  %v160 = vld [vmem:[%s1 + $0x328] sm:$0xff]
  %v161 = vld [vmem:[%s1 + $0x330] sm:$0xff]
  %v162 = vld [vmem:[%s1 + $0x338] sm:$0xff]
  %v163 = vld [vmem:[%s1 + $0x340] sm:$0xff]
  %v164 = vld [vmem:[%s1 + $0x348] sm:$0xff]
  %v165 = vld [vmem:[%s1 + $0x350] sm:$0xff]
  %v166 = vld [vmem:[%s1 + $0x358] sm:$0xff]
  %v167 = vld [vmem:[%s1 + $0x360] sm:$0xff]
  %v168 = vld [vmem:[%s1 + $0x368] sm:$0xff]
  %v169 = vld [vmem:[%s1 + $0x370] sm:$0xff]
  %v170 = vld [vmem:[%s1 + $0x378] sm:$0xff]
  %v171 = vld [vmem:[%s1 + $0x380] sm:$0xff]
  %v172 = vld [vmem:[%s1 + $0x388] sm:$0xff]
  %v173 = vld [vmem:[%s1 + $0x390] sm:$0xff]
  %v174 = vld [vmem:[%s1 + $0x398] sm:$0xff]
  %v175 = vld [vmem:[%s1 + $0x3a0] sm:$0xff]
  %v176 = vld [vmem:[%s1 + $0x3a8] sm:$0xff]
  %v177 = vld [vmem:[%s1 + $0x3b0] sm:$0xff]
  %v178 = vld [vmem:[%s1 + $0x3b8] sm:$0xff]
  %v179 = vld [vmem:[%s1 + $0x3c0] sm:$0xff]
  %v180 = vld [vmem:[%s1 + $0x3c8] sm:$0xff]
  %v181 = vld [vmem:[%s1 + $0x3d0] sm:$0xff]
  %v182 = vld [vmem:[%s1 + $0x3d8] sm:$0xff]
  %v183 = vld [vmem:[%s1 + $0x3e0] sm:$0xff]
  %v184 = vld [vmem:[%s1 + $0x3e8] sm:$0xff]
  %v185 = vld [vmem:[%s1 + $0x3f0] sm:$0xff]
  %v186 = vld [vmem:[%s1 + $0x3f8] sm:$0xff]
  %v187 = vld [vmem:[%s1 + $0x400] sm:$0xff]
  %v188 = vld [vmem:[%s1 + $0x408] sm:$0xff]
  %v189 = vld [vmem:[%s1 + $0x410] sm:$0xff]
  %v190 = vld [vmem:[%s1 + $0x418] sm:$0xff]
  %v191 = vld [vmem:[%s1 + $0x420] sm:$0xff]
  %v192 = vld [vmem:[%s1 + $0x428] sm:$0xff]
  %v193 = vld [vmem:[%s1 + $0x430] sm:$0xff]
  %v194 = vld [vmem:[%s1 + $0x438] sm:$0xff]
  %v195 = vld [vmem:[%s1 + $0x440] sm:$0xff]
  %v196 = vld [vmem:[%s1 + $0x448] sm:$0xff]
  %v197 = vld [vmem:[%s1 + $0x450] sm:$0xff]
  %v198 = vld [vmem:[%s1 + $0x458] sm:$0xff]
  %v199 = vld [vmem:[%s1 + $0x460] sm:$0xff]
  %v200 = vld [vmem:[%s1 + $0x468] sm:$0xff]
  %v201 = vld [vmem:[%s1 + $0x470] sm:$0xff]
  %v202 = vld [vmem:[%s1 + $0x478] sm:$0xff]
  %v203 = vld [vmem:[%s1 + $0x480] sm:$0xff]
  %v204 = vld [vmem:[%s1 + $0x488] sm:$0xff]
  %v205 = vld [vmem:[%s1 + $0x490] sm:$0xff]
  %v206 = vld [vmem:[%s1 + $0x498] sm:$0xff]
  %v207 = vld [vmem:[%s1 + $0x4a0] sm:$0xff]
  %v208 = vld [vmem:[%s1 + $0x4a8] sm:$0xff]
  %v209 = vld [vmem:[%s1 + $0x4b0] sm:$0xff]
  %v210 = vld [vmem:[%s1 + $0x4b8] sm:$0xff]
  %v211 = vld [vmem:[%s1 + $0x4c0] sm:$0xff]
  %v212 = vld [vmem:[%s1 + $0x4c8] sm:$0xff]
  %v213 = vld [vmem:[%s1 + $0x4d0] sm:$0xff]
  %v214 = vld [vmem:[%s1 + $0x4d8] sm:$0xff]
  %v215 = vld [vmem:[%s1 + $0x4e0] sm:$0xff]
  %v216 = vld [vmem:[%s1 + $0x4e8] sm:$0xff]
  %v217 = vld [vmem:[%s1 + $0x4f0] sm:$0xff]
  %v218 = vld [vmem:[%s1 + $0x4f8] sm:$0xff]
  %v219 = vld [vmem:[%s1 + $0x500] sm:$0xff]
  %v220 = vld [vmem:[%s1 + $0x508] sm:$0xff]
  %v221 = vld [vmem:[%s1 + $0x510] sm:$0xff]
  %v222 = vld [vmem:[%s1 + $0x518] sm:$0xff]
  %v223 = vld [vmem:[%s1 + $0x520] sm:$0xff]
  %v224 = vld [vmem:[%s1 + $0x528] sm:$0xff]
  %v225 = vld [vmem:[%s1 + $0x530] sm:$0xff]
  %v226 = vld [vmem:[%s1 + $0x538] sm:$0xff]
  %v227 = vld [vmem:[%s1 + $0x540] sm:$0xff]
  %v228 = vld [vmem:[%s1 + $0x548] sm:$0xff]
  %v229 = vld [vmem:[%s1 + $0x550] sm:$0xff]
  %v230 = vld [vmem:[%s1 + $0x558] sm:$0xff]
  %v231 = vld [vmem:[%s1 + $0x560] sm:$0xff]
  %v232 = vld [vmem:[%s1 + $0x568] sm:$0xff]
  %v233 = vld [vmem:[%s1 + $0x570] sm:$0xff]
  %v234 = vld [vmem:[%s1 + $0x578] sm:$0xff]
  %v235 = vld [vmem:[%s1 + $0x580] sm:$0xff]
  %v236 = vld [vmem:[%s1 + $0x588] sm:$0xff]
  %v237 = vld [vmem:[%s1 + $0x590] sm:$0xff]
  %v238 = vld [vmem:[%s1 + $0x598] sm:$0xff]
  %v239 = vld [vmem:[%s1 + $0x5a0] sm:$0xff]
  %v240 = vld [vmem:[%s1 + $0x5a8] sm:$0xff]
  %v241 = vld [vmem:[%s1 + $0x5b0] sm:$0xff]
  %v242 = vld [vmem:[%s1 + $0x5b8] sm:$0xff]
  %v243 = vld [vmem:[%s1 + $0x5c0] sm:$0xff]
  %v244 = vld [vmem:[%s1 + $0x5c8] sm:$0xff]
  %v245 = vld [vmem:[%s1 + $0x5d0] sm:$0xff]
  %v246 = vld [vmem:[%s1 + $0x5d8] sm:$0xff]
  %v247 = vld [vmem:[%s1 + $0x5e0] sm:$0xff]
  %v248 = vld [vmem:[%s1 + $0x5e8] sm:$0xff]
  %v249 = vld [vmem:[%s1 + $0x5f0] sm:$0xff]
  %v250 = vld [vmem:[%s1 + $0x5f8] sm:$0xff]
  %v251 = vld [vmem:[%s1 + $0x600] sm:$0xff]
  %v252 = vld [vmem:[%s1 + $0x608] sm:$0xff]
  %v253 = vld [vmem:[%s1 + $0x610] sm:$0xff]
  %v254 = vld [vmem:[%s1 + $0x618] sm:$0xff]
  %v255 = vld [vmem:[%s1 + $0x620] sm:$0xff]
  %v256 = vld [vmem:[%s1 + $0x628] sm:$0xff]
  %v257 = vld [vmem:[%s1 + $0x630] sm:$0xff]
  %v258 = vld [vmem:[%s1 + $0x638] sm:$0xff]
  %v259 = vld [vmem:[%s1 + $0x640] sm:$0xff]
  %v260 = vld [vmem:[%s1 + $0x648] sm:$0xff]
  %v261 = vld [vmem:[%s1 + $0x650] sm:$0xff]
  %v262 = vld [vmem:[%s1 + $0x658] sm:$0xff]
  %v263 = vld [vmem:[%s1 + $0x660] sm:$0xff]
  %v264 = vld [vmem:[%s1 + $0x668] sm:$0xff]
  %v265 = vld [vmem:[%s1 + $0x670] sm:$0xff]
  %v266 = vld [vmem:[%s1 + $0x678] sm:$0xff]
  %v267 = vld [vmem:[%s1 + $0x680] sm:$0xff]
  %v268 = vld [vmem:[%s1 + $0x688] sm:$0xff]
  %v269 = vld [vmem:[%s1 + $0x690] sm:$0xff]
  %v270 = vld [vmem:[%s1 + $0x698] sm:$0xff]
  %v271 = vld [vmem:[%s1 + $0x6a0] sm:$0xff]
  %v272 = vld [vmem:[%s1 + $0x6a8] sm:$0xff]
  %v273 = vld [vmem:[%s1 + $0x6b0] sm:$0xff]
  %v274 = vld [vmem:[%s1 + $0x6b8] sm:$0xff]
  %v275 = vld [vmem:[%s1 + $0x6c0] sm:$0xff]
  %v276 = vld [vmem:[%s1 + $0x6c8] sm:$0xff]
  %v277 = vld [vmem:[%s1 + $0x6d0] sm:$0xff]
  %v278 = vld [vmem:[%s1 + $0x6d8] sm:$0xff]
  %v279 = vld [vmem:[%s1 + $0x6e0] sm:$0xff]
  %v280 = vld [vmem:[%s1 + $0x6e8] sm:$0xff]
  %v281 = vld [vmem:[%s1 + $0x6f0] sm:$0xff]
  %v282 = vld [vmem:[%s1 + $0x6f8] sm:$0xff]
  %v283 = vld [vmem:[%s1 + $0x700] sm:$0xff]
  %v284 = vld [vmem:[%s1 + $0x708] sm:$0xff]
  %v285 = vld [vmem:[%s1 + $0x710] sm:$0xff]
  %v286 = vld [vmem:[%s1 + $0x718] sm:$0xff]
  %v287 = vld [vmem:[%s1 + $0x720] sm:$0xff]
  %v288 = vld [vmem:[%s1 + $0x728] sm:$0xff]
  %v289 = vld [vmem:[%s1 + $0x730] sm:$0xff]
  %v290 = vld [vmem:[%s1 + $0x738] sm:$0xff]
  %v291 = vld [vmem:[%s1 + $0x740] sm:$0xff]
  %v292 = vld [vmem:[%s1 + $0x748] sm:$0xff]
  %v293 = vld [vmem:[%s1 + $0x750] sm:$0xff]
  %v294 = vld [vmem:[%s1 + $0x758] sm:$0xff]
  %v295 = vld [vmem:[%s1 + $0x760] sm:$0xff]
  %v296 = vld [vmem:[%s1 + $0x768] sm:$0xff]
  %v297 = vld [vmem:[%s1 + $0x770] sm:$0xff]
  %v298 = vld [vmem:[%s1 + $0x778] sm:$0xff]
  %v299 = vld [vmem:[%s1 + $0x780] sm:$0xff]
  %v300 = vld [vmem:[%s1 + $0x788] sm:$0xff]
  %v301 = vld [vmem:[%s1 + $0x790] sm:$0xff]
  %v302 = vld [vmem:[%s1 + $0x798] sm:$0xff]
  %v303 = vld [vmem:[%s1 + $0x7a0] sm:$0xff]
  %v304 = vld [vmem:[%s1 + $0x7a8] sm:$0xff]
  %v305 = vld [vmem:[%s1 + $0x7b0] sm:$0xff]
  %v306 = vld [vmem:[%s1 + $0x7b8] sm:$0xff]
  %v307 = vld [vmem:[%s1 + $0x7c0] sm:$0xff]
  %v308 = vld [vmem:[%s1 + $0x7c8] sm:$0xff]
  %v309 = vld [vmem:[%s1 + $0x7d0] sm:$0xff]
  %v310 = vld [vmem:[%s1 + $0x7d8] sm:$0xff]
  %v311 = vld [vmem:[%s1 + $0x7e0] sm:$0xff]
  %v312 = vld [vmem:[%s1 + $0x7e8] sm:$0xff]
  %v313 = vld [vmem:[%s1 + $0x7f0] sm:$0xff]
  %v314 = vld [vmem:[%s1 + $0x7f8] sm:$0xff]
  %v315 = vld [vmem:[%s1 + $0x800] sm:$0xff]
  %v316 = vld [vmem:[%s1 + $0x808] sm:$0xff]
  %v317 = vld [vmem:[%s1 + $0x810] sm:$0xff]
  %v318 = vld [vmem:[%s1 + $0x818] sm:$0xff]
  %v319 = vld [vmem:[%s1 + $0x820] sm:$0xff]
  %v320 = vld [vmem:[%s1 + $0x828] sm:$0xff]
  %v321 = vld [vmem:[%s1 + $0x830] sm:$0xff]
  %v322 = vld [vmem:[%s1 + $0x838] sm:$0xff]
  %v323 = vld [vmem:[%s1 + $0x840] sm:$0xff]
  %v324 = vld [vmem:[%s1 + $0x848] sm:$0xff]
  %v325 = vld [vmem:[%s1 + $0x850] sm:$0xff]
  %v326 = vld [vmem:[%s1 + $0x858] sm:$0xff]
  %v327 = vld [vmem:[%s1 + $0x860] sm:$0xff]
  %v328 = vld [vmem:[%s1 + $0x868] sm:$0xff]
  %v329 = vld [vmem:[%s1 + $0x870] sm:$0xff]
  %v330 = vld [vmem:[%s1 + $0x878] sm:$0xff]
  %v331 = vld [vmem:[%s1 + $0x880] sm:$0xff]
  %v332 = vld [vmem:[%s1 + $0x888] sm:$0xff]
  %v333 = vld [vmem:[%s1 + $0x890] sm:$0xff]
  %v334 = vld [vmem:[%s1 + $0x898] sm:$0xff]
  %v335 = vld [vmem:[%s1 + $0x8a0] sm:$0xff]
  %v336 = vld [vmem:[%s1 + $0x8a8] sm:$0xff]
  %v337 = vld [vmem:[%s1 + $0x8b0] sm:$0xff]
  %v338 = vld [vmem:[%s1 + $0x8b8] sm:$0xff]
  %v339 = vld [vmem:[%s1 + $0x8c0] sm:$0xff]
  %v340 = vld [vmem:[%s1 + $0x8c8] sm:$0xff]
  %v341 = vld [vmem:[%s1 + $0x8d0] sm:$0xff]
  %v342 = vld [vmem:[%s1 + $0x8d8] sm:$0xff]
  %v343 = vld [vmem:[%s1 + $0x8e0] sm:$0xff]
  %v344 = vld [vmem:[%s1 + $0x8e8] sm:$0xff]
  %v345 = vld [vmem:[%s1 + $0x8f0] sm:$0xff]
  %v346 = vld [vmem:[%s1 + $0x8f8] sm:$0xff]
  %v347 = vld [vmem:[%s1 + $0x900] sm:$0xff]
  %v348 = vld [vmem:[%s1 + $0x908] sm:$0xff]
  %v349 = vld [vmem:[%s1 + $0x910] sm:$0xff]
  %v350 = vld [vmem:[%s1 + $0x918] sm:$0xff]
  %v351 = vld [vmem:[%s1 + $0x920] sm:$0xff]
  %v352 = vld [vmem:[%s1 + $0x928] sm:$0xff]
  %v353 = vld [vmem:[%s1 + $0x930] sm:$0xff]
  %v354 = vld [vmem:[%s1 + $0x938] sm:$0xff]
  %v355 = vld [vmem:[%s1 + $0x940] sm:$0xff]
  %v356 = vld [vmem:[%s1 + $0x948] sm:$0xff]
  %v357 = vld [vmem:[%s1 + $0x950] sm:$0xff]
  %v358 = vld [vmem:[%s1 + $0x958] sm:$0xff]
  %v359 = vld [vmem:[%s1 + $0x960] sm:$0xff]
  %v360 = vld [vmem:[%s1 + $0x968] sm:$0xff]
  %v361 = vld [vmem:[%s1 + $0x970] sm:$0xff]
  %v362 = vld [vmem:[%s1 + $0x978] sm:$0xff]
  %v363 = vld [vmem:[%s1 + $0x980] sm:$0xff]
  %v364 = vld [vmem:[%s1 + $0x988] sm:$0xff]
  %v365 = vld [vmem:[%s1 + $0x990] sm:$0xff]
  %v366 = vld [vmem:[%s1 + $0x998] sm:$0xff]
  %v367 = vld [vmem:[%s1 + $0x9a0] sm:$0xff]
  %v368 = vld [vmem:[%s1 + $0x9a8] sm:$0xff]
  %v369 = vld [vmem:[%s1 + $0x9b0] sm:$0xff]
  %v370 = vld [vmem:[%s1 + $0x9b8] sm:$0xff]
  %v371 = vld [vmem:[%s1 + $0x9c0] sm:$0xff]
  %v372 = vld [vmem:[%s1 + $0x9c8] sm:$0xff]
  %v373 = vld [vmem:[%s1 + $0x9d0] sm:$0xff]
  %v374 = vld [vmem:[%s1 + $0x9d8] sm:$0xff]
  %v375 = vld [vmem:[%s1 + $0x9e0] sm:$0xff]
  %v376 = vld [vmem:[%s1 + $0x9e8] sm:$0xff]
  %v377 = vld [vmem:[%s1 + $0x9f0] sm:$0xff]
  %v378 = vld [vmem:[%s1 + $0x9f8] sm:$0xff]
  %v379 = vld [vmem:[%s1 + $0xa00] sm:$0xff]
  %v380 = vld [vmem:[%s1 + $0xa08] sm:$0xff]
  %v381 = vld [vmem:[%s1 + $0xa10] sm:$0xff]
  %v382 = vld [vmem:[%s1 + $0xa18] sm:$0xff]
  %v383 = vld [vmem:[%s1 + $0xa20] sm:$0xff]
  %v384 = vld [vmem:[%s1 + $0xa28] sm:$0xff]
  %v385 = vld [vmem:[%s1 + $0xa30] sm:$0xff]
  %v386 = vld [vmem:[%s1 + $0xa38] sm:$0xff]
  %v387 = vld [vmem:[%s1 + $0xa40] sm:$0xff]
  %v388 = vld [vmem:[%s1 + $0xa48] sm:$0xff]
  %v389 = vld [vmem:[%s1 + $0xa50] sm:$0xff]
  %v390 = vld [vmem:[%s1 + $0xa58] sm:$0xff]
  %v391 = vld [vmem:[%s1 + $0xa60] sm:$0xff]
  %v392 = vld [vmem:[%s1 + $0xa68] sm:$0xff]
  %v393 = vld [vmem:[%s1 + $0xa70] sm:$0xff]
  %v394 = vld [vmem:[%s1 + $0xa78] sm:$0xff]
  %v395 = vld [vmem:[%s1 + $0xa80] sm:$0xff]
  %v396 = vld [vmem:[%s1 + $0xa88] sm:$0xff]
  %v397 = vld [vmem:[%s1 + $0xa90] sm:$0xff]
  %v398 = vld [vmem:[%s1 + $0xa98] sm:$0xff]
  %v399 = vld [vmem:[%s1 + $0xaa0] sm:$0xff]
  %v400 = vld [vmem:[%s1 + $0xaa8] sm:$0xff]
  %v401 = vld [vmem:[%s1 + $0xab0] sm:$0xff]
  %v402 = vld [vmem:[%s1 + $0xab8] sm:$0xff]
  %v403 = vld [vmem:[%s1 + $0xac0] sm:$0xff]
  %v404 = vld [vmem:[%s1 + $0xac8] sm:$0xff]
  %v405 = vld [vmem:[%s1 + $0xad0] sm:$0xff]
  %v406 = vld [vmem:[%s1 + $0xad8] sm:$0xff]
  %v407 = vld [vmem:[%s1 + $0xae0] sm:$0xff]
  %v408 = vld [vmem:[%s1 + $0xae8] sm:$0xff]
  %v409 = vld [vmem:[%s1 + $0xaf0] sm:$0xff]
  %v410 = vld [vmem:[%s1 + $0xaf8] sm:$0xff]
  %v411 = vld [vmem:[%s1 + $0xb00] sm:$0xff]
  %v412 = vld [vmem:[%s1 + $0xb08] sm:$0xff]
  %v413 = vld [vmem:[%s1 + $0xb10] sm:$0xff]
  %v414 = vld [vmem:[%s1 + $0xb18] sm:$0xff]
  %v415 = vld [vmem:[%s1 + $0xb20] sm:$0xff]
  %v416 = vld [vmem:[%s1 + $0xb28] sm:$0xff]
  %v417 = vld [vmem:[%s1 + $0xb30] sm:$0xff]
  %v418 = vld [vmem:[%s1 + $0xb38] sm:$0xff]
  %v419 = vld [vmem:[%s1 + $0xb40] sm:$0xff]
  %v420 = vld [vmem:[%s1 + $0xb48] sm:$0xff]
  %v421 = vld [vmem:[%s1 + $0xb50] sm:$0xff]
  %v422 = vld [vmem:[%s1 + $0xb58] sm:$0xff]
  %v423 = vld [vmem:[%s1 + $0xb60] sm:$0xff]
  %v424 = vld [vmem:[%s1 + $0xb68] sm:$0xff]
  %v425 = vld [vmem:[%s1 + $0xb70] sm:$0xff]
  %v426 = vld [vmem:[%s1 + $0xb78] sm:$0xff]
  %v427 = vld [vmem:[%s1 + $0xb80] sm:$0xff]
  %v428 = vld [vmem:[%s1 + $0xb88] sm:$0xff]
  %v429 = vld [vmem:[%s1 + $0xb90] sm:$0xff]
  %v430 = vld [vmem:[%s1 + $0xb98] sm:$0xff]
  %v431 = vld [vmem:[%s1 + $0xba0] sm:$0xff]
  %v432 = vld [vmem:[%s1 + $0xba8] sm:$0xff]
  %v433 = vld [vmem:[%s1 + $0xbb0] sm:$0xff]
  %v434 = vld [vmem:[%s1 + $0xbb8] sm:$0xff]
  %v435 = vld [vmem:[%s1 + $0xbc0] sm:$0xff]
  %v436 = vld [vmem:[%s1 + $0xbc8] sm:$0xff]
  %v437 = vld [vmem:[%s1 + $0xbd0] sm:$0xff]
  %v438 = vld [vmem:[%s1 + $0xbd8] sm:$0xff]
  %v439 = vld [vmem:[%s1 + $0xbe0] sm:$0xff]
  %v440 = vld [vmem:[%s1 + $0xbe8] sm:$0xff]
  %v441 = vld [vmem:[%s1 + $0xbf0] sm:$0xff]
  %v442 = vld [vmem:[%s1 + $0xbf8] sm:$0xff]
  %v443 = vld [vmem:[%s1 + $0xc00] sm:$0xff]
  %v444 = vld [vmem:[%s1 + $0xc08] sm:$0xff]
  %v445 = vld [vmem:[%s1 + $0xc10] sm:$0xff]
  %v446 = vld [vmem:[%s1 + $0xc18] sm:$0xff]
  %v447 = vld [vmem:[%s1 + $0xc20] sm:$0xff]
  %v448 = vld [vmem:[%s1 + $0xc28] sm:$0xff]
  %v449 = vld [vmem:[%s1 + $0xc30] sm:$0xff]
  %v450 = vld [vmem:[%s1 + $0xc38] sm:$0xff]
  %v451 = vld [vmem:[%s1 + $0xc40] sm:$0xff]
  %v452 = vld [vmem:[%s1 + $0xc48] sm:$0xff]
  %v453 = vld [vmem:[%s1 + $0xc50] sm:$0xff]
  %v454 = vld [vmem:[%s1 + $0xc58] sm:$0xff]
  %v455 = vld [vmem:[%s1 + $0xc60] sm:$0xff]
  %v456 = vld [vmem:[%s1 + $0xc68] sm:$0xff]
  %v457 = vld [vmem:[%s1 + $0xc70] sm:$0xff]
  %v458 = vld [vmem:[%s1 + $0xc78] sm:$0xff]
  %v459 = vld [vmem:[%s1 + $0xc80] sm:$0xff]
  %v460 = vld [vmem:[%s1 + $0xc88] sm:$0xff]
  %v461 = vld [vmem:[%s1 + $0xc90] sm:$0xff]
  %v462 = vld [vmem:[%s1 + $0xc98] sm:$0xff]
  %v463 = vld [vmem:[%s1 + $0xca0] sm:$0xff]
  %v464 = vld [vmem:[%s1 + $0xca8] sm:$0xff]
  %v465 = vld [vmem:[%s1 + $0xcb0] sm:$0xff]
  %v466 = vld [vmem:[%s1 + $0xcb8] sm:$0xff]
  %v467 = vld [vmem:[%s1 + $0xcc0] sm:$0xff]
  %v468 = vld [vmem:[%s1 + $0xcc8] sm:$0xff]
  %v469 = vld [vmem:[%s1 + $0xcd0] sm:$0xff]
  %v470 = vld [vmem:[%s1 + $0xcd8] sm:$0xff]
  %v471 = vld [vmem:[%s1 + $0xce0] sm:$0xff]
  %v472 = vld [vmem:[%s1 + $0xce8] sm:$0xff]
  %v473 = vld [vmem:[%s1 + $0xcf0] sm:$0xff]
  %v474 = vld [vmem:[%s1 + $0xcf8] sm:$0xff]
  %v475 = vld [vmem:[%s1 + $0xd00] sm:$0xff]
  %v476 = vld [vmem:[%s1 + $0xd08] sm:$0xff]
  %v477 = vld [vmem:[%s1 + $0xd10] sm:$0xff]
  %v478 = vld [vmem:[%s1 + $0xd18] sm:$0xff]
  %v479 = vld [vmem:[%s1 + $0xd20] sm:$0xff]
  %v480 = vld [vmem:[%s1 + $0xd28] sm:$0xff]
  %v481 = vld [vmem:[%s1 + $0xd30] sm:$0xff]
  %v482 = vld [vmem:[%s1 + $0xd38] sm:$0xff]
  %v483 = vld [vmem:[%s1 + $0xd40] sm:$0xff]
  %v484 = vld [vmem:[%s1 + $0xd48] sm:$0xff]
  %v485 = vld [vmem:[%s1 + $0xd50] sm:$0xff]
  %v486 = vld [vmem:[%s1 + $0xd58] sm:$0xff]
  %v487 = vld [vmem:[%s1 + $0xd60] sm:$0xff]
  %v488 = vld [vmem:[%s1 + $0xd68] sm:$0xff]
  %v489 = vld [vmem:[%s1 + $0xd70] sm:$0xff]
  %v490 = vld [vmem:[%s1 + $0xd78] sm:$0xff]
  %v491 = vld [vmem:[%s1 + $0xd80] sm:$0xff]
  %v492 = vld [vmem:[%s1 + $0xd88] sm:$0xff]
  %v493 = vld [vmem:[%s1 + $0xd90] sm:$0xff]
  %v494 = vld [vmem:[%s1 + $0xd98] sm:$0xff]
  %v495 = vld [vmem:[%s1 + $0xda0] sm:$0xff]
  %v496 = vld [vmem:[%s1 + $0xda8] sm:$0xff]
  %v497 = vld [vmem:[%s1 + $0xdb0] sm:$0xff]
  %v498 = vld [vmem:[%s1 + $0xdb8] sm:$0xff]
  %v499 = vld [vmem:[%s1 + $0xdc0] sm:$0xff]
  %v500 = vld [vmem:[%s1 + $0xdc8] sm:$0xff]
  %v501 = vld [vmem:[%s1 + $0xdd0] sm:$0xff]
  %v502 = vld [vmem:[%s1 + $0xdd8] sm:$0xff]
  %v503 = vld [vmem:[%s1 + $0xde0] sm:$0xff]
  %v504 = vld [vmem:[%s1 + $0xde8] sm:$0xff]
  %v505 = vld [vmem:[%s1 + $0xdf0] sm:$0xff]
  %v506 = vld [vmem:[%s1 + $0xdf8] sm:$0xff]
  %v507 = vld [vmem:[%s1 + $0xe00] sm:$0xff]
  %v508 = vld [vmem:[%s1 + $0xe08] sm:$0xff]
  %v509 = vld [vmem:[%s1 + $0xe10] sm:$0xff]
  %v510 = vld [vmem:[%s1 + $0xe18] sm:$0xff]
  %v511 = vld [vmem:[%s1 + $0xe20] sm:$0xff]
  %v512 = vld [vmem:[%s1 + $0xe28] sm:$0xff]
  %v513 = vld [vmem:[%s1 + $0xe30] sm:$0xff]
  %v514 = vld [vmem:[%s1 + $0xe38] sm:$0xff]
  %v515 = vld [vmem:[%s1 + $0xe40] sm:$0xff]
  %v516 = vld [vmem:[%s1 + $0xe48] sm:$0xff]
  %v517 = vld [vmem:[%s1 + $0xe50] sm:$0xff]
  %v518 = vld [vmem:[%s1 + $0xe58] sm:$0xff]
  %v519 = vld [vmem:[%s1 + $0xe60] sm:$0xff]
  %v520 = vld [vmem:[%s1 + $0xe68] sm:$0xff]
  %v521 = vld [vmem:[%s1 + $0xe70] sm:$0xff]
  %v522 = vld [vmem:[%s1 + $0xe78] sm:$0xff]
  %v523 = vld [vmem:[%s1 + $0xe80] sm:$0xff]
  %v524 = vld [vmem:[%s1 + $0xe88] sm:$0xff]
  %v525 = vld [vmem:[%s1 + $0xe90] sm:$0xff]
  %v526 = vld [vmem:[%s1 + $0xe98] sm:$0xff]
  %v527 = vld [vmem:[%s1 + $0xea0] sm:$0xff]
  %v528 = vld [vmem:[%s1 + $0xea8] sm:$0xff]
  %v529 = vld [vmem:[%s1 + $0xeb0] sm:$0xff]
  %v530 = vld [vmem:[%s1 + $0xeb8] sm:$0xff]
  %v531 = vld [vmem:[%s1 + $0xec0] sm:$0xff]
  %v532 = vld [vmem:[%s1 + $0xec8] sm:$0xff]
  %v533 = vld [vmem:[%s1 + $0xed0] sm:$0xff]
  %v534 = vld [vmem:[%s1 + $0xed8] sm:$0xff]
  %v535 = vld [vmem:[%s1 + $0xee0] sm:$0xff]
  %v536 = vld [vmem:[%s1 + $0xee8] sm:$0xff]
  %v537 = vld [vmem:[%s1 + $0xef0] sm:$0xff]
  %v538 = vld [vmem:[%s1 + $0xef8] sm:$0xff]
  %v539 = vld [vmem:[%s1 + $0xf00] sm:$0xff]
  %v540 = vld [vmem:[%s1 + $0xf08] sm:$0xff]
  %v541 = vld [vmem:[%s1 + $0xf10] sm:$0xff]
  %v542 = vld [vmem:[%s1 + $0xf18] sm:$0xff]
  %v543 = vld [vmem:[%s1 + $0xf20] sm:$0xff]
  %v544 = vld [vmem:[%s1 + $0xf28] sm:$0xff]
  %v545 = vld [vmem:[%s1 + $0xf30] sm:$0xff]
  %v546 = vld [vmem:[%s1 + $0xf38] sm:$0xff]
  %v547 = vld [vmem:[%s1 + $0xf40] sm:$0xff]
  %v548 = vld [vmem:[%s1 + $0xf48] sm:$0xff]
  %v549 = vld [vmem:[%s1 + $0xf50] sm:$0xff]
  %v550 = vld [vmem:[%s1 + $0xf58] sm:$0xff]
  %v551 = vld [vmem:[%s1 + $0xf60] sm:$0xff]
  %v552 = vld [vmem:[%s1 + $0xf68] sm:$0xff]
  %v553 = vld [vmem:[%s1 + $0xf70] sm:$0xff]
  %v554 = vld [vmem:[%s1 + $0xf78] sm:$0xff]
  %v555 = vld [vmem:[%s1 + $0xf80] sm:$0xff]
  %v556 = vld [vmem:[%s1 + $0xf88] sm:$0xff]
  %v557 = vld [vmem:[%s1 + $0xf90] sm:$0xff]
  %v558 = vld [vmem:[%s1 + $0xf98] sm:$0xff]
  %v559 = vld [vmem:[%s1 + $0xfa0] sm:$0xff]
  %v560 = vld [vmem:[%s1 + $0xfa8] sm:$0xff]
  %v561 = vld [vmem:[%s1 + $0xfb0] sm:$0xff]
  %v562 = vld [vmem:[%s1 + $0xfb8] sm:$0xff]
  %v563 = vld [vmem:[%s1 + $0xfc0] sm:$0xff]
  %v564 = vld [vmem:[%s1 + $0xfc8] sm:$0xff]
  %v565 = vld [vmem:[%s1 + $0xfd0] sm:$0xff]
  %v566 = vld [vmem:[%s1 + $0xfd8] sm:$0xff]
  %v567 = vld [vmem:[%s1 + $0xfe0] sm:$0xff]
  %v568 = vld [vmem:[%s1 + $0xfe8] sm:$0xff]
  %v569 = vld [vmem:[%s1 + $0xff0] sm:$0xff]
  %v570 = vld [vmem:[%s1 + $0xff8] sm:$0xff]
  %v571 = vld [vmem:[%s2] sm:$0xff]
  %v572 = vunpack.c.l.u8.bf16 %v57
  %v573 = vunpack.c.h.u8.bf16 %v57
  %v574 = vunpack.c.l.u8.bf16 %v58
  %v575 = vunpack.c.h.u8.bf16 %v58
  %v577 = vlaneseq
  %v578 = vshrl.u32 %v577, 7
  %v579 = vsub.s32 0, %v578
  %v580 = vrot.slane %v571, %v579
  %v581 = vlaneseq
  %v582 = vshrl.u32 %v581, 7
  %v583 = vsub.s32 1, %v582
  %v584 = vrot.slane %v571, %v583
  %v585 = vlaneseq
  %v586 = vshrl.u32 %v585, 7
  %v587 = vsub.s32 2, %v586
  %v588 = vrot.slane %v571, %v587
  %v589 = vlaneseq
  %v590 = vshrl.u32 %v589, 7
  %v591 = vsub.s32 3, %v590
  %v592 = vrot.slane %v571, %v591
  %v593 = vlaneseq
  %v594 = vshrl.u32 %v593, 7
  %v595 = vsub.s32 4, %v594
  %v596 = vrot.slane %v571, %v595
  %v597 = vlaneseq
  %v598 = vshrl.u32 %v597, 7
  %v599 = vsub.s32 5, %v598
  %v600 = vrot.slane %v571, %v599
  %v601 = vlaneseq
  %v602 = vshrl.u32 %v601, 7
  %v603 = vsub.s32 6, %v602
  %v604 = vrot.slane %v571, %v603
  %v605 = vlaneseq
  %v606 = vshrl.u32 %v605, 7
  %v607 = vsub.s32 7, %v606
  %v608 = vrot.slane %v571, %v607
  %v621 = vunpack.c.l.b16 %v572
  %v622 = vunpack.c.h.b16 %v572
  %v623 = vunpack.c.l.b16 %v573
  %v624 = vunpack.c.h.b16 %v573
  %v625 = vunpack.c.l.b16 %v574
  %v626 = vunpack.c.h.b16 %v574
  %v627 = vunpack.c.l.b16 %v575
  %v628 = vunpack.c.h.b16 %v575
  %v629 = vpack.c.b16 %v621, %v621
  %v630 = vpack.c.b16 %v622, %v622
  %v631 = vpack.c.b16 %v623, %v623
  %v632 = vpack.c.b16 %v624, %v624
  %v633 = vpack.c.b16 %v625, %v625
  %v634 = vpack.c.b16 %v626, %v626
  %v635 = vpack.c.b16 %v627, %v627
  %v636 = vpack.c.b16 %v628, %v628
  %v1157 = vunpack.c.l.b16 %v59
  %v1158 = vunpack.c.h.b16 %v59
  %v1159 = vunpack.c.l.b16 %v60
  %v1160 = vunpack.c.h.b16 %v60
  %v1161 = vunpack.c.l.b16 %v61
  %v1162 = vunpack.c.h.b16 %v61
  %v1163 = vunpack.c.l.b16 %v62
  %v1164 = vunpack.c.h.b16 %v62
  %v1165 = vunpack.c.l.b16 %v63
  %v1166 = vunpack.c.h.b16 %v63
  %v1167 = vunpack.c.l.b16 %v64
  %v1168 = vunpack.c.h.b16 %v64
  %v1169 = vunpack.c.l.b16 %v65
  %v1170 = vunpack.c.h.b16 %v65
  %v1171 = vunpack.c.l.b16 %v66
  %v1172 = vunpack.c.h.b16 %v66
  %v1173 = vunpack.c.l.b16 %v67
  %v1174 = vunpack.c.h.b16 %v67
  %v1175 = vunpack.c.l.b16 %v68
  %v1176 = vunpack.c.h.b16 %v68
  %v1177 = vunpack.c.l.b16 %v69
  %v1178 = vunpack.c.h.b16 %v69
  %v1179 = vunpack.c.l.b16 %v70
  %v1180 = vunpack.c.h.b16 %v70
  %v1181 = vunpack.c.l.b16 %v71
  %v1182 = vunpack.c.h.b16 %v71
  %v1183 = vunpack.c.l.b16 %v72
  %v1184 = vunpack.c.h.b16 %v72
  %v1185 = vunpack.c.l.b16 %v73
  %v1186 = vunpack.c.h.b16 %v73
  %v1187 = vunpack.c.l.b16 %v74
  %v1188 = vunpack.c.h.b16 %v74
  %v1189 = vunpack.c.l.b16 %v75
  %v1190 = vunpack.c.h.b16 %v75
  %v1191 = vunpack.c.l.b16 %v76
  %v1192 = vunpack.c.h.b16 %v76
  %v1193 = vunpack.c.l.b16 %v77
  %v1194 = vunpack.c.h.b16 %v77
  %v1195 = vunpack.c.l.b16 %v78
  %v1196 = vunpack.c.h.b16 %v78
  %v1197 = vunpack.c.l.b16 %v79
  %v1198 = vunpack.c.h.b16 %v79
  %v1199 = vunpack.c.l.b16 %v80
  %v1200 = vunpack.c.h.b16 %v80
  %v1201 = vunpack.c.l.b16 %v81
  %v1202 = vunpack.c.h.b16 %v81
  %v1203 = vunpack.c.l.b16 %v82
  %v1204 = vunpack.c.h.b16 %v82
  %v1205 = vunpack.c.l.b16 %v83
  %v1206 = vunpack.c.h.b16 %v83
  %v1207 = vunpack.c.l.b16 %v84
  %v1208 = vunpack.c.h.b16 %v84
  %v1209 = vunpack.c.l.b16 %v85
  %v1210 = vunpack.c.h.b16 %v85
  %v1211 = vunpack.c.l.b16 %v86
  %v1212 = vunpack.c.h.b16 %v86
  %v1213 = vunpack.c.l.b16 %v87
  %v1214 = vunpack.c.h.b16 %v87
  %v1215 = vunpack.c.l.b16 %v88
  %v1216 = vunpack.c.h.b16 %v88
  %v1217 = vunpack.c.l.b16 %v89
  %v1218 = vunpack.c.h.b16 %v89
  %v1219 = vunpack.c.l.b16 %v90
  %v1220 = vunpack.c.h.b16 %v90
  %v1221 = vunpack.c.l.b16 %v91
  %v1222 = vunpack.c.h.b16 %v91
  %v1223 = vunpack.c.l.b16 %v92
  %v1224 = vunpack.c.h.b16 %v92
  %v1225 = vunpack.c.l.b16 %v93
  %v1226 = vunpack.c.h.b16 %v93
  %v1227 = vunpack.c.l.b16 %v94
  %v1228 = vunpack.c.h.b16 %v94
  %v1229 = vunpack.c.l.b16 %v95
  %v1230 = vunpack.c.h.b16 %v95
  %v1231 = vunpack.c.l.b16 %v96
  %v1232 = vunpack.c.h.b16 %v96
  %v1233 = vunpack.c.l.b16 %v97
  %v1234 = vunpack.c.h.b16 %v97
  %v1235 = vunpack.c.l.b16 %v98
  %v1236 = vunpack.c.h.b16 %v98
  %v1237 = vunpack.c.l.b16 %v99
  %v1238 = vunpack.c.h.b16 %v99
  %v1239 = vunpack.c.l.b16 %v100
  %v1240 = vunpack.c.h.b16 %v100
  %v1241 = vunpack.c.l.b16 %v101
  %v1242 = vunpack.c.h.b16 %v101
  %v1243 = vunpack.c.l.b16 %v102
  %v1244 = vunpack.c.h.b16 %v102
  %v1245 = vunpack.c.l.b16 %v103
  %v1246 = vunpack.c.h.b16 %v103
  %v1247 = vunpack.c.l.b16 %v104
  %v1248 = vunpack.c.h.b16 %v104
  %v1249 = vunpack.c.l.b16 %v105
  %v1250 = vunpack.c.h.b16 %v105
  %v1251 = vunpack.c.l.b16 %v106
  %v1252 = vunpack.c.h.b16 %v106
  %v1253 = vunpack.c.l.b16 %v107
  %v1254 = vunpack.c.h.b16 %v107
  %v1255 = vunpack.c.l.b16 %v108
  %v1256 = vunpack.c.h.b16 %v108
  %v1257 = vunpack.c.l.b16 %v109
  %v1258 = vunpack.c.h.b16 %v109
  %v1259 = vunpack.c.l.b16 %v110
  %v1260 = vunpack.c.h.b16 %v110
  %v1261 = vunpack.c.l.b16 %v111
  %v1262 = vunpack.c.h.b16 %v111
  %v1263 = vunpack.c.l.b16 %v112
  %v1264 = vunpack.c.h.b16 %v112
  %v1265 = vunpack.c.l.b16 %v113
  %v1266 = vunpack.c.h.b16 %v113
  %v1267 = vunpack.c.l.b16 %v114
  %v1268 = vunpack.c.h.b16 %v114
  %v1269 = vunpack.c.l.b16 %v115
  %v1270 = vunpack.c.h.b16 %v115
  %v1271 = vunpack.c.l.b16 %v116
  %v1272 = vunpack.c.h.b16 %v116
  %v1273 = vunpack.c.l.b16 %v117
  %v1274 = vunpack.c.h.b16 %v117
  %v1275 = vunpack.c.l.b16 %v118
  %v1276 = vunpack.c.h.b16 %v118
  %v1277 = vunpack.c.l.b16 %v119
  %v1278 = vunpack.c.h.b16 %v119
  %v1279 = vunpack.c.l.b16 %v120
  %v1280 = vunpack.c.h.b16 %v120
  %v1281 = vunpack.c.l.b16 %v121
  %v1282 = vunpack.c.h.b16 %v121
  %v1283 = vunpack.c.l.b16 %v122
  %v1284 = vunpack.c.h.b16 %v122
  %v1285 = vunpack.c.l.b16 %v123
  %v1286 = vunpack.c.h.b16 %v123
  %v1287 = vunpack.c.l.b16 %v124
  %v1288 = vunpack.c.h.b16 %v124
  %v1289 = vunpack.c.l.b16 %v125
  %v1290 = vunpack.c.h.b16 %v125
  %v1291 = vunpack.c.l.b16 %v126
  %v1292 = vunpack.c.h.b16 %v126
  %v1293 = vunpack.c.l.b16 %v127
  %v1294 = vunpack.c.h.b16 %v127
  %v1295 = vunpack.c.l.b16 %v128
  %v1296 = vunpack.c.h.b16 %v128
  %v1297 = vunpack.c.l.b16 %v129
  %v1298 = vunpack.c.h.b16 %v129
  %v1299 = vunpack.c.l.b16 %v130
  %v1300 = vunpack.c.h.b16 %v130
  %v1301 = vunpack.c.l.b16 %v131
  %v1302 = vunpack.c.h.b16 %v131
  %v1303 = vunpack.c.l.b16 %v132
  %v1304 = vunpack.c.h.b16 %v132
  %v1305 = vunpack.c.l.b16 %v133
  %v1306 = vunpack.c.h.b16 %v133
  %v1307 = vunpack.c.l.b16 %v134
  %v1308 = vunpack.c.h.b16 %v134
  %v1309 = vunpack.c.l.b16 %v135
  %v1310 = vunpack.c.h.b16 %v135
  %v1311 = vunpack.c.l.b16 %v136
  %v1312 = vunpack.c.h.b16 %v136
  %v1313 = vunpack.c.l.b16 %v137
  %v1314 = vunpack.c.h.b16 %v137
  %v1315 = vunpack.c.l.b16 %v138
  %v1316 = vunpack.c.h.b16 %v138
  %v1317 = vunpack.c.l.b16 %v139
  %v1318 = vunpack.c.h.b16 %v139
  %v1319 = vunpack.c.l.b16 %v140
  %v1320 = vunpack.c.h.b16 %v140
  %v1321 = vunpack.c.l.b16 %v141
  %v1322 = vunpack.c.h.b16 %v141
  %v1323 = vunpack.c.l.b16 %v142
  %v1324 = vunpack.c.h.b16 %v142
  %v1325 = vunpack.c.l.b16 %v143
  %v1326 = vunpack.c.h.b16 %v143
  %v1327 = vunpack.c.l.b16 %v144
  %v1328 = vunpack.c.h.b16 %v144
  %v1329 = vunpack.c.l.b16 %v145
  %v1330 = vunpack.c.h.b16 %v145
  %v1331 = vunpack.c.l.b16 %v146
  %v1332 = vunpack.c.h.b16 %v146
  %v1333 = vunpack.c.l.b16 %v147
  %v1334 = vunpack.c.h.b16 %v147
  %v1335 = vunpack.c.l.b16 %v148
  %v1336 = vunpack.c.h.b16 %v148
  %v1337 = vunpack.c.l.b16 %v149
  %v1338 = vunpack.c.h.b16 %v149
  %v1339 = vunpack.c.l.b16 %v150
  %v1340 = vunpack.c.h.b16 %v150
  %v1341 = vunpack.c.l.b16 %v151
  %v1342 = vunpack.c.h.b16 %v151
  %v1343 = vunpack.c.l.b16 %v152
  %v1344 = vunpack.c.h.b16 %v152
  %v1345 = vunpack.c.l.b16 %v153
  %v1346 = vunpack.c.h.b16 %v153
  %v1347 = vunpack.c.l.b16 %v154
  %v1348 = vunpack.c.h.b16 %v154
  %v1349 = vunpack.c.l.b16 %v155
  %v1350 = vunpack.c.h.b16 %v155
  %v1351 = vunpack.c.l.b16 %v156
  %v1352 = vunpack.c.h.b16 %v156
  %v1353 = vunpack.c.l.b16 %v157
  %v1354 = vunpack.c.h.b16 %v157
  %v1355 = vunpack.c.l.b16 %v158
  %v1356 = vunpack.c.h.b16 %v158
  %v1357 = vunpack.c.l.b16 %v159
  %v1358 = vunpack.c.h.b16 %v159
  %v1359 = vunpack.c.l.b16 %v160
  %v1360 = vunpack.c.h.b16 %v160
  %v1361 = vunpack.c.l.b16 %v161
  %v1362 = vunpack.c.h.b16 %v161
  %v1363 = vunpack.c.l.b16 %v162
  %v1364 = vunpack.c.h.b16 %v162
  %v1365 = vunpack.c.l.b16 %v163
  %v1366 = vunpack.c.h.b16 %v163
  %v1367 = vunpack.c.l.b16 %v164
  %v1368 = vunpack.c.h.b16 %v164
  %v1369 = vunpack.c.l.b16 %v165
  %v1370 = vunpack.c.h.b16 %v165
  %v1371 = vunpack.c.l.b16 %v166
  %v1372 = vunpack.c.h.b16 %v166
  %v1373 = vunpack.c.l.b16 %v167
  %v1374 = vunpack.c.h.b16 %v167
  %v1375 = vunpack.c.l.b16 %v168
  %v1376 = vunpack.c.h.b16 %v168
  %v1377 = vunpack.c.l.b16 %v169
  %v1378 = vunpack.c.h.b16 %v169
  %v1379 = vunpack.c.l.b16 %v170
  %v1380 = vunpack.c.h.b16 %v170
  %v1381 = vunpack.c.l.b16 %v171
  %v1382 = vunpack.c.h.b16 %v171
  %v1383 = vunpack.c.l.b16 %v172
  %v1384 = vunpack.c.h.b16 %v172
  %v1385 = vunpack.c.l.b16 %v173
  %v1386 = vunpack.c.h.b16 %v173
  %v1387 = vunpack.c.l.b16 %v174
  %v1388 = vunpack.c.h.b16 %v174
  %v1389 = vunpack.c.l.b16 %v175
  %v1390 = vunpack.c.h.b16 %v175
  %v1391 = vunpack.c.l.b16 %v176
  %v1392 = vunpack.c.h.b16 %v176
  %v1393 = vunpack.c.l.b16 %v177
  %v1394 = vunpack.c.h.b16 %v177
  %v1395 = vunpack.c.l.b16 %v178
  %v1396 = vunpack.c.h.b16 %v178
  %v1397 = vunpack.c.l.b16 %v179
  %v1398 = vunpack.c.h.b16 %v179
  %v1399 = vunpack.c.l.b16 %v180
  %v1400 = vunpack.c.h.b16 %v180
  %v1401 = vunpack.c.l.b16 %v181
  %v1402 = vunpack.c.h.b16 %v181
  %v1403 = vunpack.c.l.b16 %v182
  %v1404 = vunpack.c.h.b16 %v182
  %v1405 = vunpack.c.l.b16 %v183
  %v1406 = vunpack.c.h.b16 %v183
  %v1407 = vunpack.c.l.b16 %v184
  %v1408 = vunpack.c.h.b16 %v184
  %v1409 = vunpack.c.l.b16 %v185
  %v1410 = vunpack.c.h.b16 %v185
  %v1411 = vunpack.c.l.b16 %v186
  %v1412 = vunpack.c.h.b16 %v186
  %v1413 = vunpack.c.l.b16 %v187
  %v1414 = vunpack.c.h.b16 %v187
  %v1415 = vunpack.c.l.b16 %v188
  %v1416 = vunpack.c.h.b16 %v188
  %v1417 = vunpack.c.l.b16 %v189
  %v1418 = vunpack.c.h.b16 %v189
  %v1419 = vunpack.c.l.b16 %v190
  %v1420 = vunpack.c.h.b16 %v190
  %v1421 = vunpack.c.l.b16 %v191
  %v1422 = vunpack.c.h.b16 %v191
  %v1423 = vunpack.c.l.b16 %v192
  %v1424 = vunpack.c.h.b16 %v192
  %v1425 = vunpack.c.l.b16 %v193
  %v1426 = vunpack.c.h.b16 %v193
  %v1427 = vunpack.c.l.b16 %v194
  %v1428 = vunpack.c.h.b16 %v194
  %v1429 = vunpack.c.l.b16 %v195
  %v1430 = vunpack.c.h.b16 %v195
  %v1431 = vunpack.c.l.b16 %v196
  %v1432 = vunpack.c.h.b16 %v196
  %v1433 = vunpack.c.l.b16 %v197
  %v1434 = vunpack.c.h.b16 %v197
  %v1435 = vunpack.c.l.b16 %v198
  %v1436 = vunpack.c.h.b16 %v198
  %v1437 = vunpack.c.l.b16 %v199
  %v1438 = vunpack.c.h.b16 %v199
  %v1439 = vunpack.c.l.b16 %v200
  %v1440 = vunpack.c.h.b16 %v200
  %v1441 = vunpack.c.l.b16 %v201
  %v1442 = vunpack.c.h.b16 %v201
  %v1443 = vunpack.c.l.b16 %v202
  %v1444 = vunpack.c.h.b16 %v202
  %v1445 = vunpack.c.l.b16 %v203
  %v1446 = vunpack.c.h.b16 %v203
  %v1447 = vunpack.c.l.b16 %v204
  %v1448 = vunpack.c.h.b16 %v204
  %v1449 = vunpack.c.l.b16 %v205
  %v1450 = vunpack.c.h.b16 %v205
  %v1451 = vunpack.c.l.b16 %v206
  %v1452 = vunpack.c.h.b16 %v206
  %v1453 = vunpack.c.l.b16 %v207
  %v1454 = vunpack.c.h.b16 %v207
  %v1455 = vunpack.c.l.b16 %v208
  %v1456 = vunpack.c.h.b16 %v208
  %v1457 = vunpack.c.l.b16 %v209
  %v1458 = vunpack.c.h.b16 %v209
  %v1459 = vunpack.c.l.b16 %v210
  %v1460 = vunpack.c.h.b16 %v210
  %v1461 = vunpack.c.l.b16 %v211
  %v1462 = vunpack.c.h.b16 %v211
  %v1463 = vunpack.c.l.b16 %v212
  %v1464 = vunpack.c.h.b16 %v212
  %v1465 = vunpack.c.l.b16 %v213
  %v1466 = vunpack.c.h.b16 %v213
  %v1467 = vunpack.c.l.b16 %v214
  %v1468 = vunpack.c.h.b16 %v214
  %v1469 = vunpack.c.l.b16 %v215
  %v1470 = vunpack.c.h.b16 %v215
  %v1471 = vunpack.c.l.b16 %v216
  %v1472 = vunpack.c.h.b16 %v216
  %v1473 = vunpack.c.l.b16 %v217
  %v1474 = vunpack.c.h.b16 %v217
  %v1475 = vunpack.c.l.b16 %v218
  %v1476 = vunpack.c.h.b16 %v218
  %v1477 = vunpack.c.l.b16 %v219
  %v1478 = vunpack.c.h.b16 %v219
  %v1479 = vunpack.c.l.b16 %v220
  %v1480 = vunpack.c.h.b16 %v220
  %v1481 = vunpack.c.l.b16 %v221
  %v1482 = vunpack.c.h.b16 %v221
  %v1483 = vunpack.c.l.b16 %v222
  %v1484 = vunpack.c.h.b16 %v222
  %v1485 = vunpack.c.l.b16 %v223
  %v1486 = vunpack.c.h.b16 %v223
  %v1487 = vunpack.c.l.b16 %v224
  %v1488 = vunpack.c.h.b16 %v224
  %v1489 = vunpack.c.l.b16 %v225
  %v1490 = vunpack.c.h.b16 %v225
  %v1491 = vunpack.c.l.b16 %v226
  %v1492 = vunpack.c.h.b16 %v226
  %v1493 = vunpack.c.l.b16 %v227
  %v1494 = vunpack.c.h.b16 %v227
  %v1495 = vunpack.c.l.b16 %v228
  %v1496 = vunpack.c.h.b16 %v228
  %v1497 = vunpack.c.l.b16 %v229
  %v1498 = vunpack.c.h.b16 %v229
  %v1499 = vunpack.c.l.b16 %v230
  %v1500 = vunpack.c.h.b16 %v230
  %v1501 = vunpack.c.l.b16 %v231
  %v1502 = vunpack.c.h.b16 %v231
  %v1503 = vunpack.c.l.b16 %v232
  %v1504 = vunpack.c.h.b16 %v232
  %v1505 = vunpack.c.l.b16 %v233
  %v1506 = vunpack.c.h.b16 %v233
  %v1507 = vunpack.c.l.b16 %v234
  %v1508 = vunpack.c.h.b16 %v234
  %v1509 = vunpack.c.l.b16 %v235
  %v1510 = vunpack.c.h.b16 %v235
  %v1511 = vunpack.c.l.b16 %v236
  %v1512 = vunpack.c.h.b16 %v236
  %v1513 = vunpack.c.l.b16 %v237
  %v1514 = vunpack.c.h.b16 %v237
  %v1515 = vunpack.c.l.b16 %v238
  %v1516 = vunpack.c.h.b16 %v238
  %v1517 = vunpack.c.l.b16 %v239
  %v1518 = vunpack.c.h.b16 %v239
  %v1519 = vunpack.c.l.b16 %v240
  %v1520 = vunpack.c.h.b16 %v240
  %v1521 = vunpack.c.l.b16 %v241
  %v1522 = vunpack.c.h.b16 %v241
  %v1523 = vunpack.c.l.b16 %v242
  %v1524 = vunpack.c.h.b16 %v242
  %v1525 = vunpack.c.l.b16 %v243
  %v1526 = vunpack.c.h.b16 %v243
  %v1527 = vunpack.c.l.b16 %v244
  %v1528 = vunpack.c.h.b16 %v244
  %v1529 = vunpack.c.l.b16 %v245
  %v1530 = vunpack.c.h.b16 %v245
  %v1531 = vunpack.c.l.b16 %v246
  %v1532 = vunpack.c.h.b16 %v246
  %v1533 = vunpack.c.l.b16 %v247
  %v1534 = vunpack.c.h.b16 %v247
  %v1535 = vunpack.c.l.b16 %v248
  %v1536 = vunpack.c.h.b16 %v248
  %v1537 = vunpack.c.l.b16 %v249
  %v1538 = vunpack.c.h.b16 %v249
  %v1539 = vunpack.c.l.b16 %v250
  %v1540 = vunpack.c.h.b16 %v250
  %v1541 = vunpack.c.l.b16 %v251
  %v1542 = vunpack.c.h.b16 %v251
  %v1543 = vunpack.c.l.b16 %v252
  %v1544 = vunpack.c.h.b16 %v252
  %v1545 = vunpack.c.l.b16 %v253
  %v1546 = vunpack.c.h.b16 %v253
  %v1547 = vunpack.c.l.b16 %v254
  %v1548 = vunpack.c.h.b16 %v254
  %v1549 = vunpack.c.l.b16 %v255
  %v1550 = vunpack.c.h.b16 %v255
  %v1551 = vunpack.c.l.b16 %v256
  %v1552 = vunpack.c.h.b16 %v256
  %v1553 = vunpack.c.l.b16 %v257
  %v1554 = vunpack.c.h.b16 %v257
  %v1555 = vunpack.c.l.b16 %v258
  %v1556 = vunpack.c.h.b16 %v258
  %v1557 = vunpack.c.l.b16 %v259
  %v1558 = vunpack.c.h.b16 %v259
  %v1559 = vunpack.c.l.b16 %v260
  %v1560 = vunpack.c.h.b16 %v260
  %v1561 = vunpack.c.l.b16 %v261
  %v1562 = vunpack.c.h.b16 %v261
  %v1563 = vunpack.c.l.b16 %v262
  %v1564 = vunpack.c.h.b16 %v262
  %v1565 = vunpack.c.l.b16 %v263
  %v1566 = vunpack.c.h.b16 %v263
  %v1567 = vunpack.c.l.b16 %v264
  %v1568 = vunpack.c.h.b16 %v264
  %v1569 = vunpack.c.l.b16 %v265
  %v1570 = vunpack.c.h.b16 %v265
  %v1571 = vunpack.c.l.b16 %v266
  %v1572 = vunpack.c.h.b16 %v266
  %v1573 = vunpack.c.l.b16 %v267
  %v1574 = vunpack.c.h.b16 %v267
  %v1575 = vunpack.c.l.b16 %v268
  %v1576 = vunpack.c.h.b16 %v268
  %v1577 = vunpack.c.l.b16 %v269
  %v1578 = vunpack.c.h.b16 %v269
  %v1579 = vunpack.c.l.b16 %v270
  %v1580 = vunpack.c.h.b16 %v270
  %v1581 = vunpack.c.l.b16 %v271
  %v1582 = vunpack.c.h.b16 %v271
  %v1583 = vunpack.c.l.b16 %v272
  %v1584 = vunpack.c.h.b16 %v272
  %v1585 = vunpack.c.l.b16 %v273
  %v1586 = vunpack.c.h.b16 %v273
  %v1587 = vunpack.c.l.b16 %v274
  %v1588 = vunpack.c.h.b16 %v274
  %v1589 = vunpack.c.l.b16 %v275
  %v1590 = vunpack.c.h.b16 %v275
  %v1591 = vunpack.c.l.b16 %v276
  %v1592 = vunpack.c.h.b16 %v276
  %v1593 = vunpack.c.l.b16 %v277
  %v1594 = vunpack.c.h.b16 %v277
  %v1595 = vunpack.c.l.b16 %v278
  %v1596 = vunpack.c.h.b16 %v278
  %v1597 = vunpack.c.l.b16 %v279
  %v1598 = vunpack.c.h.b16 %v279
  %v1599 = vunpack.c.l.b16 %v280
  %v1600 = vunpack.c.h.b16 %v280
  %v1601 = vunpack.c.l.b16 %v281
  %v1602 = vunpack.c.h.b16 %v281
  %v1603 = vunpack.c.l.b16 %v282
  %v1604 = vunpack.c.h.b16 %v282
  %v1605 = vunpack.c.l.b16 %v283
  %v1606 = vunpack.c.h.b16 %v283
  %v1607 = vunpack.c.l.b16 %v284
  %v1608 = vunpack.c.h.b16 %v284
  %v1609 = vunpack.c.l.b16 %v285
  %v1610 = vunpack.c.h.b16 %v285
  %v1611 = vunpack.c.l.b16 %v286
  %v1612 = vunpack.c.h.b16 %v286
  %v1613 = vunpack.c.l.b16 %v287
  %v1614 = vunpack.c.h.b16 %v287
  %v1615 = vunpack.c.l.b16 %v288
  %v1616 = vunpack.c.h.b16 %v288
  %v1617 = vunpack.c.l.b16 %v289
  %v1618 = vunpack.c.h.b16 %v289
  %v1619 = vunpack.c.l.b16 %v290
  %v1620 = vunpack.c.h.b16 %v290
  %v1621 = vunpack.c.l.b16 %v291
  %v1622 = vunpack.c.h.b16 %v291
  %v1623 = vunpack.c.l.b16 %v292
  %v1624 = vunpack.c.h.b16 %v292
  %v1625 = vunpack.c.l.b16 %v293
  %v1626 = vunpack.c.h.b16 %v293
  %v1627 = vunpack.c.l.b16 %v294
  %v1628 = vunpack.c.h.b16 %v294
  %v1629 = vunpack.c.l.b16 %v295
  %v1630 = vunpack.c.h.b16 %v295
  %v1631 = vunpack.c.l.b16 %v296
  %v1632 = vunpack.c.h.b16 %v296
  %v1633 = vunpack.c.l.b16 %v297
  %v1634 = vunpack.c.h.b16 %v297
  %v1635 = vunpack.c.l.b16 %v298
  %v1636 = vunpack.c.h.b16 %v298
  %v1637 = vunpack.c.l.b16 %v299
  %v1638 = vunpack.c.h.b16 %v299
  %v1639 = vunpack.c.l.b16 %v300
  %v1640 = vunpack.c.h.b16 %v300
  %v1641 = vunpack.c.l.b16 %v301
  %v1642 = vunpack.c.h.b16 %v301
  %v1643 = vunpack.c.l.b16 %v302
  %v1644 = vunpack.c.h.b16 %v302
  %v1645 = vunpack.c.l.b16 %v303
  %v1646 = vunpack.c.h.b16 %v303
  %v1647 = vunpack.c.l.b16 %v304
  %v1648 = vunpack.c.h.b16 %v304
  %v1649 = vunpack.c.l.b16 %v305
  %v1650 = vunpack.c.h.b16 %v305
  %v1651 = vunpack.c.l.b16 %v306
  %v1652 = vunpack.c.h.b16 %v306
  %v1653 = vunpack.c.l.b16 %v307
  %v1654 = vunpack.c.h.b16 %v307
  %v1655 = vunpack.c.l.b16 %v308
  %v1656 = vunpack.c.h.b16 %v308
  %v1657 = vunpack.c.l.b16 %v309
  %v1658 = vunpack.c.h.b16 %v309
  %v1659 = vunpack.c.l.b16 %v310
  %v1660 = vunpack.c.h.b16 %v310
  %v1661 = vunpack.c.l.b16 %v311
  %v1662 = vunpack.c.h.b16 %v311
  %v1663 = vunpack.c.l.b16 %v312
  %v1664 = vunpack.c.h.b16 %v312
  %v1665 = vunpack.c.l.b16 %v313
  %v1666 = vunpack.c.h.b16 %v313
  %v1667 = vunpack.c.l.b16 %v314
  %v1668 = vunpack.c.h.b16 %v314
  %v1669 = vunpack.c.l.b16 %v315
  %v1670 = vunpack.c.h.b16 %v315
  %v1671 = vunpack.c.l.b16 %v316
  %v1672 = vunpack.c.h.b16 %v316
  %v1673 = vunpack.c.l.b16 %v317
  %v1674 = vunpack.c.h.b16 %v317
  %v1675 = vunpack.c.l.b16 %v318
  %v1676 = vunpack.c.h.b16 %v318
  %v1677 = vunpack.c.l.b16 %v319
  %v1678 = vunpack.c.h.b16 %v319
  %v1679 = vunpack.c.l.b16 %v320
  %v1680 = vunpack.c.h.b16 %v320
  %v1681 = vunpack.c.l.b16 %v321
  %v1682 = vunpack.c.h.b16 %v321
  %v1683 = vunpack.c.l.b16 %v322
  %v1684 = vunpack.c.h.b16 %v322
  %v1685 = vunpack.c.l.b16 %v323
  %v1686 = vunpack.c.h.b16 %v323
  %v1687 = vunpack.c.l.b16 %v324
  %v1688 = vunpack.c.h.b16 %v324
  %v1689 = vunpack.c.l.b16 %v325
  %v1690 = vunpack.c.h.b16 %v325
  %v1691 = vunpack.c.l.b16 %v326
  %v1692 = vunpack.c.h.b16 %v326
  %v1693 = vunpack.c.l.b16 %v327
  %v1694 = vunpack.c.h.b16 %v327
  %v1695 = vunpack.c.l.b16 %v328
  %v1696 = vunpack.c.h.b16 %v328
  %v1697 = vunpack.c.l.b16 %v329
  %v1698 = vunpack.c.h.b16 %v329
  %v1699 = vunpack.c.l.b16 %v330
  %v1700 = vunpack.c.h.b16 %v330
  %v1701 = vunpack.c.l.b16 %v331
  %v1702 = vunpack.c.h.b16 %v331
  %v1703 = vunpack.c.l.b16 %v332
  %v1704 = vunpack.c.h.b16 %v332
  %v1705 = vunpack.c.l.b16 %v333
  %v1706 = vunpack.c.h.b16 %v333
  %v1707 = vunpack.c.l.b16 %v334
  %v1708 = vunpack.c.h.b16 %v334
  %v1709 = vunpack.c.l.b16 %v335
  %v1710 = vunpack.c.h.b16 %v335
  %v1711 = vunpack.c.l.b16 %v336
  %v1712 = vunpack.c.h.b16 %v336
  %v1713 = vunpack.c.l.b16 %v337
  %v1714 = vunpack.c.h.b16 %v337
  %v1715 = vunpack.c.l.b16 %v338
  %v1716 = vunpack.c.h.b16 %v338
  %v1717 = vunpack.c.l.b16 %v339
  %v1718 = vunpack.c.h.b16 %v339
  %v1719 = vunpack.c.l.b16 %v340
  %v1720 = vunpack.c.h.b16 %v340
  %v1721 = vunpack.c.l.b16 %v341
  %v1722 = vunpack.c.h.b16 %v341
  %v1723 = vunpack.c.l.b16 %v342
  %v1724 = vunpack.c.h.b16 %v342
  %v1725 = vunpack.c.l.b16 %v343
  %v1726 = vunpack.c.h.b16 %v343
  %v1727 = vunpack.c.l.b16 %v344
  %v1728 = vunpack.c.h.b16 %v344
  %v1729 = vunpack.c.l.b16 %v345
  %v1730 = vunpack.c.h.b16 %v345
  %v1731 = vunpack.c.l.b16 %v346
  %v1732 = vunpack.c.h.b16 %v346
  %v1733 = vunpack.c.l.b16 %v347
  %v1734 = vunpack.c.h.b16 %v347
  %v1735 = vunpack.c.l.b16 %v348
  %v1736 = vunpack.c.h.b16 %v348
  %v1737 = vunpack.c.l.b16 %v349
  %v1738 = vunpack.c.h.b16 %v349
  %v1739 = vunpack.c.l.b16 %v350
  %v1740 = vunpack.c.h.b16 %v350
  %v1741 = vunpack.c.l.b16 %v351
  %v1742 = vunpack.c.h.b16 %v351
  %v1743 = vunpack.c.l.b16 %v352
  %v1744 = vunpack.c.h.b16 %v352
  %v1745 = vunpack.c.l.b16 %v353
  %v1746 = vunpack.c.h.b16 %v353
  %v1747 = vunpack.c.l.b16 %v354
  %v1748 = vunpack.c.h.b16 %v354
  %v1749 = vunpack.c.l.b16 %v355
  %v1750 = vunpack.c.h.b16 %v355
  %v1751 = vunpack.c.l.b16 %v356
  %v1752 = vunpack.c.h.b16 %v356
  %v1753 = vunpack.c.l.b16 %v357
  %v1754 = vunpack.c.h.b16 %v357
  %v1755 = vunpack.c.l.b16 %v358
  %v1756 = vunpack.c.h.b16 %v358
  %v1757 = vunpack.c.l.b16 %v359
  %v1758 = vunpack.c.h.b16 %v359
  %v1759 = vunpack.c.l.b16 %v360
  %v1760 = vunpack.c.h.b16 %v360
  %v1761 = vunpack.c.l.b16 %v361
  %v1762 = vunpack.c.h.b16 %v361
  %v1763 = vunpack.c.l.b16 %v362
  %v1764 = vunpack.c.h.b16 %v362
  %v1765 = vunpack.c.l.b16 %v363
  %v1766 = vunpack.c.h.b16 %v363
  %v1767 = vunpack.c.l.b16 %v364
  %v1768 = vunpack.c.h.b16 %v364
  %v1769 = vunpack.c.l.b16 %v365
  %v1770 = vunpack.c.h.b16 %v365
  %v1771 = vunpack.c.l.b16 %v366
  %v1772 = vunpack.c.h.b16 %v366
  %v1773 = vunpack.c.l.b16 %v367
  %v1774 = vunpack.c.h.b16 %v367
  %v1775 = vunpack.c.l.b16 %v368
  %v1776 = vunpack.c.h.b16 %v368
  %v1777 = vunpack.c.l.b16 %v369
  %v1778 = vunpack.c.h.b16 %v369
  %v1779 = vunpack.c.l.b16 %v370
  %v1780 = vunpack.c.h.b16 %v370
  %v1781 = vunpack.c.l.b16 %v371
  %v1782 = vunpack.c.h.b16 %v371
  %v1783 = vunpack.c.l.b16 %v372
  %v1784 = vunpack.c.h.b16 %v372
  %v1785 = vunpack.c.l.b16 %v373
  %v1786 = vunpack.c.h.b16 %v373
  %v1787 = vunpack.c.l.b16 %v374
  %v1788 = vunpack.c.h.b16 %v374
  %v1789 = vunpack.c.l.b16 %v375
  %v1790 = vunpack.c.h.b16 %v375
  %v1791 = vunpack.c.l.b16 %v376
  %v1792 = vunpack.c.h.b16 %v376
  %v1793 = vunpack.c.l.b16 %v377
  %v1794 = vunpack.c.h.b16 %v377
  %v1795 = vunpack.c.l.b16 %v378
  %v1796 = vunpack.c.h.b16 %v378
  %v1797 = vunpack.c.l.b16 %v379
  %v1798 = vunpack.c.h.b16 %v379
  %v1799 = vunpack.c.l.b16 %v380
  %v1800 = vunpack.c.h.b16 %v380
  %v1801 = vunpack.c.l.b16 %v381
  %v1802 = vunpack.c.h.b16 %v381
  %v1803 = vunpack.c.l.b16 %v382
  %v1804 = vunpack.c.h.b16 %v382
  %v1805 = vunpack.c.l.b16 %v383
  %v1806 = vunpack.c.h.b16 %v383
  %v1807 = vunpack.c.l.b16 %v384
  %v1808 = vunpack.c.h.b16 %v384
  %v1809 = vunpack.c.l.b16 %v385
  %v1810 = vunpack.c.h.b16 %v385
  %v1811 = vunpack.c.l.b16 %v386
  %v1812 = vunpack.c.h.b16 %v386
  %v1813 = vunpack.c.l.b16 %v387
  %v1814 = vunpack.c.h.b16 %v387
  %v1815 = vunpack.c.l.b16 %v388
  %v1816 = vunpack.c.h.b16 %v388
  %v1817 = vunpack.c.l.b16 %v389
  %v1818 = vunpack.c.h.b16 %v389
  %v1819 = vunpack.c.l.b16 %v390
  %v1820 = vunpack.c.h.b16 %v390
  %v1821 = vunpack.c.l.b16 %v391
  %v1822 = vunpack.c.h.b16 %v391
  %v1823 = vunpack.c.l.b16 %v392
  %v1824 = vunpack.c.h.b16 %v392
  %v1825 = vunpack.c.l.b16 %v393
  %v1826 = vunpack.c.h.b16 %v393
  %v1827 = vunpack.c.l.b16 %v394
  %v1828 = vunpack.c.h.b16 %v394
  %v1829 = vunpack.c.l.b16 %v395
  %v1830 = vunpack.c.h.b16 %v395
  %v1831 = vunpack.c.l.b16 %v396
  %v1832 = vunpack.c.h.b16 %v396
  %v1833 = vunpack.c.l.b16 %v397
  %v1834 = vunpack.c.h.b16 %v397
  %v1835 = vunpack.c.l.b16 %v398
  %v1836 = vunpack.c.h.b16 %v398
  %v1837 = vunpack.c.l.b16 %v399
  %v1838 = vunpack.c.h.b16 %v399
  %v1839 = vunpack.c.l.b16 %v400
  %v1840 = vunpack.c.h.b16 %v400
  %v1841 = vunpack.c.l.b16 %v401
  %v1842 = vunpack.c.h.b16 %v401
  %v1843 = vunpack.c.l.b16 %v402
  %v1844 = vunpack.c.h.b16 %v402
  %v1845 = vunpack.c.l.b16 %v403
  %v1846 = vunpack.c.h.b16 %v403
  %v1847 = vunpack.c.l.b16 %v404
  %v1848 = vunpack.c.h.b16 %v404
  %v1849 = vunpack.c.l.b16 %v405
  %v1850 = vunpack.c.h.b16 %v405
  %v1851 = vunpack.c.l.b16 %v406
  %v1852 = vunpack.c.h.b16 %v406
  %v1853 = vunpack.c.l.b16 %v407
  %v1854 = vunpack.c.h.b16 %v407
  %v1855 = vunpack.c.l.b16 %v408
  %v1856 = vunpack.c.h.b16 %v408
  %v1857 = vunpack.c.l.b16 %v409
  %v1858 = vunpack.c.h.b16 %v409
  %v1859 = vunpack.c.l.b16 %v410
  %v1860 = vunpack.c.h.b16 %v410
  %v1861 = vunpack.c.l.b16 %v411
  %v1862 = vunpack.c.h.b16 %v411
  %v1863 = vunpack.c.l.b16 %v412
  %v1864 = vunpack.c.h.b16 %v412
  %v1865 = vunpack.c.l.b16 %v413
  %v1866 = vunpack.c.h.b16 %v413
  %v1867 = vunpack.c.l.b16 %v414
  %v1868 = vunpack.c.h.b16 %v414
  %v1869 = vunpack.c.l.b16 %v415
  %v1870 = vunpack.c.h.b16 %v415
  %v1871 = vunpack.c.l.b16 %v416
  %v1872 = vunpack.c.h.b16 %v416
  %v1873 = vunpack.c.l.b16 %v417
  %v1874 = vunpack.c.h.b16 %v417
  %v1875 = vunpack.c.l.b16 %v418
  %v1876 = vunpack.c.h.b16 %v418
  %v1877 = vunpack.c.l.b16 %v419
  %v1878 = vunpack.c.h.b16 %v419
  %v1879 = vunpack.c.l.b16 %v420
  %v1880 = vunpack.c.h.b16 %v420
  %v1881 = vunpack.c.l.b16 %v421
  %v1882 = vunpack.c.h.b16 %v421
  %v1883 = vunpack.c.l.b16 %v422
  %v1884 = vunpack.c.h.b16 %v422
  %v1885 = vunpack.c.l.b16 %v423
  %v1886 = vunpack.c.h.b16 %v423
  %v1887 = vunpack.c.l.b16 %v424
  %v1888 = vunpack.c.h.b16 %v424
  %v1889 = vunpack.c.l.b16 %v425
  %v1890 = vunpack.c.h.b16 %v425
  %v1891 = vunpack.c.l.b16 %v426
  %v1892 = vunpack.c.h.b16 %v426
  %v1893 = vunpack.c.l.b16 %v427
  %v1894 = vunpack.c.h.b16 %v427
  %v1895 = vunpack.c.l.b16 %v428
  %v1896 = vunpack.c.h.b16 %v428
  %v1897 = vunpack.c.l.b16 %v429
  %v1898 = vunpack.c.h.b16 %v429
  %v1899 = vunpack.c.l.b16 %v430
  %v1900 = vunpack.c.h.b16 %v430
  %v1901 = vunpack.c.l.b16 %v431
  %v1902 = vunpack.c.h.b16 %v431
  %v1903 = vunpack.c.l.b16 %v432
  %v1904 = vunpack.c.h.b16 %v432
  %v1905 = vunpack.c.l.b16 %v433
  %v1906 = vunpack.c.h.b16 %v433
  %v1907 = vunpack.c.l.b16 %v434
  %v1908 = vunpack.c.h.b16 %v434
  %v1909 = vunpack.c.l.b16 %v435
  %v1910 = vunpack.c.h.b16 %v435
  %v1911 = vunpack.c.l.b16 %v436
  %v1912 = vunpack.c.h.b16 %v436
  %v1913 = vunpack.c.l.b16 %v437
  %v1914 = vunpack.c.h.b16 %v437
  %v1915 = vunpack.c.l.b16 %v438
  %v1916 = vunpack.c.h.b16 %v438
  %v1917 = vunpack.c.l.b16 %v439
  %v1918 = vunpack.c.h.b16 %v439
  %v1919 = vunpack.c.l.b16 %v440
  %v1920 = vunpack.c.h.b16 %v440
  %v1921 = vunpack.c.l.b16 %v441
  %v1922 = vunpack.c.h.b16 %v441
  %v1923 = vunpack.c.l.b16 %v442
  %v1924 = vunpack.c.h.b16 %v442
  %v1925 = vunpack.c.l.b16 %v443
  %v1926 = vunpack.c.h.b16 %v443
  %v1927 = vunpack.c.l.b16 %v444
  %v1928 = vunpack.c.h.b16 %v444
  %v1929 = vunpack.c.l.b16 %v445
  %v1930 = vunpack.c.h.b16 %v445
  %v1931 = vunpack.c.l.b16 %v446
  %v1932 = vunpack.c.h.b16 %v446
  %v1933 = vunpack.c.l.b16 %v447
  %v1934 = vunpack.c.h.b16 %v447
  %v1935 = vunpack.c.l.b16 %v448
  %v1936 = vunpack.c.h.b16 %v448
  %v1937 = vunpack.c.l.b16 %v449
  %v1938 = vunpack.c.h.b16 %v449
  %v1939 = vunpack.c.l.b16 %v450
  %v1940 = vunpack.c.h.b16 %v450
  %v1941 = vunpack.c.l.b16 %v451
  %v1942 = vunpack.c.h.b16 %v451
  %v1943 = vunpack.c.l.b16 %v452
  %v1944 = vunpack.c.h.b16 %v452
  %v1945 = vunpack.c.l.b16 %v453
  %v1946 = vunpack.c.h.b16 %v453
  %v1947 = vunpack.c.l.b16 %v454
  %v1948 = vunpack.c.h.b16 %v454
  %v1949 = vunpack.c.l.b16 %v455
  %v1950 = vunpack.c.h.b16 %v455
  %v1951 = vunpack.c.l.b16 %v456
  %v1952 = vunpack.c.h.b16 %v456
  %v1953 = vunpack.c.l.b16 %v457
  %v1954 = vunpack.c.h.b16 %v457
  %v1955 = vunpack.c.l.b16 %v458
  %v1956 = vunpack.c.h.b16 %v458
  %v1957 = vunpack.c.l.b16 %v459
  %v1958 = vunpack.c.h.b16 %v459
  %v1959 = vunpack.c.l.b16 %v460
  %v1960 = vunpack.c.h.b16 %v460
  %v1961 = vunpack.c.l.b16 %v461
  %v1962 = vunpack.c.h.b16 %v461
  %v1963 = vunpack.c.l.b16 %v462
  %v1964 = vunpack.c.h.b16 %v462
  %v1965 = vunpack.c.l.b16 %v463
  %v1966 = vunpack.c.h.b16 %v463
  %v1967 = vunpack.c.l.b16 %v464
  %v1968 = vunpack.c.h.b16 %v464
  %v1969 = vunpack.c.l.b16 %v465
  %v1970 = vunpack.c.h.b16 %v465
  %v1971 = vunpack.c.l.b16 %v466
  %v1972 = vunpack.c.h.b16 %v466
  %v1973 = vunpack.c.l.b16 %v467
  %v1974 = vunpack.c.h.b16 %v467
  %v1975 = vunpack.c.l.b16 %v468
  %v1976 = vunpack.c.h.b16 %v468
  %v1977 = vunpack.c.l.b16 %v469
  %v1978 = vunpack.c.h.b16 %v469
  %v1979 = vunpack.c.l.b16 %v470
  %v1980 = vunpack.c.h.b16 %v470
  %v1981 = vunpack.c.l.b16 %v471
  %v1982 = vunpack.c.h.b16 %v471
  %v1983 = vunpack.c.l.b16 %v472
  %v1984 = vunpack.c.h.b16 %v472
  %v1985 = vunpack.c.l.b16 %v473
  %v1986 = vunpack.c.h.b16 %v473
  %v1987 = vunpack.c.l.b16 %v474
  %v1988 = vunpack.c.h.b16 %v474
  %v1989 = vunpack.c.l.b16 %v475
  %v1990 = vunpack.c.h.b16 %v475
  %v1991 = vunpack.c.l.b16 %v476
  %v1992 = vunpack.c.h.b16 %v476
  %v1993 = vunpack.c.l.b16 %v477
  %v1994 = vunpack.c.h.b16 %v477
  %v1995 = vunpack.c.l.b16 %v478
  %v1996 = vunpack.c.h.b16 %v478
  %v1997 = vunpack.c.l.b16 %v479
  %v1998 = vunpack.c.h.b16 %v479
  %v1999 = vunpack.c.l.b16 %v480
  %v2000 = vunpack.c.h.b16 %v480
  %v2001 = vunpack.c.l.b16 %v481
  %v2002 = vunpack.c.h.b16 %v481
  %v2003 = vunpack.c.l.b16 %v482
  %v2004 = vunpack.c.h.b16 %v482
  %v2005 = vunpack.c.l.b16 %v483
  %v2006 = vunpack.c.h.b16 %v483
  %v2007 = vunpack.c.l.b16 %v484
  %v2008 = vunpack.c.h.b16 %v484
  %v2009 = vunpack.c.l.b16 %v485
  %v2010 = vunpack.c.h.b16 %v485
  %v2011 = vunpack.c.l.b16 %v486
  %v2012 = vunpack.c.h.b16 %v486
  %v2013 = vunpack.c.l.b16 %v487
  %v2014 = vunpack.c.h.b16 %v487
  %v2015 = vunpack.c.l.b16 %v488
  %v2016 = vunpack.c.h.b16 %v488
  %v2017 = vunpack.c.l.b16 %v489
  %v2018 = vunpack.c.h.b16 %v489
  %v2019 = vunpack.c.l.b16 %v490
  %v2020 = vunpack.c.h.b16 %v490
  %v2021 = vunpack.c.l.b16 %v491
  %v2022 = vunpack.c.h.b16 %v491
  %v2023 = vunpack.c.l.b16 %v492
  %v2024 = vunpack.c.h.b16 %v492
  %v2025 = vunpack.c.l.b16 %v493
  %v2026 = vunpack.c.h.b16 %v493
  %v2027 = vunpack.c.l.b16 %v494
  %v2028 = vunpack.c.h.b16 %v494
  %v2029 = vunpack.c.l.b16 %v495
  %v2030 = vunpack.c.h.b16 %v495
  %v2031 = vunpack.c.l.b16 %v496
  %v2032 = vunpack.c.h.b16 %v496
  %v2033 = vunpack.c.l.b16 %v497
  %v2034 = vunpack.c.h.b16 %v497
  %v2035 = vunpack.c.l.b16 %v498
  %v2036 = vunpack.c.h.b16 %v498
  %v2037 = vunpack.c.l.b16 %v499
  %v2038 = vunpack.c.h.b16 %v499
  %v2039 = vunpack.c.l.b16 %v500
  %v2040 = vunpack.c.h.b16 %v500
  %v2041 = vunpack.c.l.b16 %v501
  %v2042 = vunpack.c.h.b16 %v501
  %v2043 = vunpack.c.l.b16 %v502
  %v2044 = vunpack.c.h.b16 %v502
  %v2045 = vunpack.c.l.b16 %v503
  %v2046 = vunpack.c.h.b16 %v503
  %v2047 = vunpack.c.l.b16 %v504
  %v2048 = vunpack.c.h.b16 %v504
  %v2049 = vunpack.c.l.b16 %v505
  %v2050 = vunpack.c.h.b16 %v505
  %v2051 = vunpack.c.l.b16 %v506
  %v2052 = vunpack.c.h.b16 %v506
  %v2053 = vunpack.c.l.b16 %v507
  %v2054 = vunpack.c.h.b16 %v507
  %v2055 = vunpack.c.l.b16 %v508
  %v2056 = vunpack.c.h.b16 %v508
  %v2057 = vunpack.c.l.b16 %v509
  %v2058 = vunpack.c.h.b16 %v509
  %v2059 = vunpack.c.l.b16 %v510
  %v2060 = vunpack.c.h.b16 %v510
  %v2061 = vunpack.c.l.b16 %v511
  %v2062 = vunpack.c.h.b16 %v511
  %v2063 = vunpack.c.l.b16 %v512
  %v2064 = vunpack.c.h.b16 %v512
  %v2065 = vunpack.c.l.b16 %v513
  %v2066 = vunpack.c.h.b16 %v513
  %v2067 = vunpack.c.l.b16 %v514
  %v2068 = vunpack.c.h.b16 %v514
  %v2069 = vunpack.c.l.b16 %v515
  %v2070 = vunpack.c.h.b16 %v515
  %v2071 = vunpack.c.l.b16 %v516
  %v2072 = vunpack.c.h.b16 %v516
  %v2073 = vunpack.c.l.b16 %v517
  %v2074 = vunpack.c.h.b16 %v517
  %v2075 = vunpack.c.l.b16 %v518
  %v2076 = vunpack.c.h.b16 %v518
  %v2077 = vunpack.c.l.b16 %v519
  %v2078 = vunpack.c.h.b16 %v519
  %v2079 = vunpack.c.l.b16 %v520
  %v2080 = vunpack.c.h.b16 %v520
  %v2081 = vunpack.c.l.b16 %v521
  %v2082 = vunpack.c.h.b16 %v521
  %v2083 = vunpack.c.l.b16 %v522
  %v2084 = vunpack.c.h.b16 %v522
  %v2085 = vunpack.c.l.b16 %v523
  %v2086 = vunpack.c.h.b16 %v523
  %v2087 = vunpack.c.l.b16 %v524
  %v2088 = vunpack.c.h.b16 %v524
  %v2089 = vunpack.c.l.b16 %v525
  %v2090 = vunpack.c.h.b16 %v525
  %v2091 = vunpack.c.l.b16 %v526
  %v2092 = vunpack.c.h.b16 %v526
  %v2093 = vunpack.c.l.b16 %v527
  %v2094 = vunpack.c.h.b16 %v527
  %v2095 = vunpack.c.l.b16 %v528
  %v2096 = vunpack.c.h.b16 %v528
  %v2097 = vunpack.c.l.b16 %v529
  %v2098 = vunpack.c.h.b16 %v529
  %v2099 = vunpack.c.l.b16 %v530
  %v2100 = vunpack.c.h.b16 %v530
  %v2101 = vunpack.c.l.b16 %v531
  %v2102 = vunpack.c.h.b16 %v531
  %v2103 = vunpack.c.l.b16 %v532
  %v2104 = vunpack.c.h.b16 %v532
  %v2105 = vunpack.c.l.b16 %v533
  %v2106 = vunpack.c.h.b16 %v533
  %v2107 = vunpack.c.l.b16 %v534
  %v2108 = vunpack.c.h.b16 %v534
  %v2109 = vunpack.c.l.b16 %v535
  %v2110 = vunpack.c.h.b16 %v535
  %v2111 = vunpack.c.l.b16 %v536
  %v2112 = vunpack.c.h.b16 %v536
  %v2113 = vunpack.c.l.b16 %v537
  %v2114 = vunpack.c.h.b16 %v537
  %v2115 = vunpack.c.l.b16 %v538
  %v2116 = vunpack.c.h.b16 %v538
  %v2117 = vunpack.c.l.b16 %v539
  %v2118 = vunpack.c.h.b16 %v539
  %v2119 = vunpack.c.l.b16 %v540
  %v2120 = vunpack.c.h.b16 %v540
  %v2121 = vunpack.c.l.b16 %v541
  %v2122 = vunpack.c.h.b16 %v541
  %v2123 = vunpack.c.l.b16 %v542
  %v2124 = vunpack.c.h.b16 %v542
  %v2125 = vunpack.c.l.b16 %v543
  %v2126 = vunpack.c.h.b16 %v543
  %v2127 = vunpack.c.l.b16 %v544
  %v2128 = vunpack.c.h.b16 %v544
  %v2129 = vunpack.c.l.b16 %v545
  %v2130 = vunpack.c.h.b16 %v545
  %v2131 = vunpack.c.l.b16 %v546
  %v2132 = vunpack.c.h.b16 %v546
  %v2133 = vunpack.c.l.b16 %v547
  %v2134 = vunpack.c.h.b16 %v547
  %v2135 = vunpack.c.l.b16 %v548
  %v2136 = vunpack.c.h.b16 %v548
  %v2137 = vunpack.c.l.b16 %v549
  %v2138 = vunpack.c.h.b16 %v549
  %v2139 = vunpack.c.l.b16 %v550
  %v2140 = vunpack.c.h.b16 %v550
  %v2141 = vunpack.c.l.b16 %v551
  %v2142 = vunpack.c.h.b16 %v551
  %v2143 = vunpack.c.l.b16 %v552
  %v2144 = vunpack.c.h.b16 %v552
  %v2145 = vunpack.c.l.b16 %v553
  %v2146 = vunpack.c.h.b16 %v553
  %v2147 = vunpack.c.l.b16 %v554
  %v2148 = vunpack.c.h.b16 %v554
  %v2149 = vunpack.c.l.b16 %v555
  %v2150 = vunpack.c.h.b16 %v555
  %v2151 = vunpack.c.l.b16 %v556
  %v2152 = vunpack.c.h.b16 %v556
  %v2153 = vunpack.c.l.b16 %v557
  %v2154 = vunpack.c.h.b16 %v557
  %v2155 = vunpack.c.l.b16 %v558
  %v2156 = vunpack.c.h.b16 %v558
  %v2157 = vunpack.c.l.b16 %v559
  %v2158 = vunpack.c.h.b16 %v559
  %v2159 = vunpack.c.l.b16 %v560
  %v2160 = vunpack.c.h.b16 %v560
  %v2161 = vunpack.c.l.b16 %v561
  %v2162 = vunpack.c.h.b16 %v561
  %v2163 = vunpack.c.l.b16 %v562
  %v2164 = vunpack.c.h.b16 %v562
  %v2165 = vunpack.c.l.b16 %v563
  %v2166 = vunpack.c.h.b16 %v563
  %v2167 = vunpack.c.l.b16 %v564
  %v2168 = vunpack.c.h.b16 %v564
  %v2169 = vunpack.c.l.b16 %v565
  %v2170 = vunpack.c.h.b16 %v565
  %v2171 = vunpack.c.l.b16 %v566
  %v2172 = vunpack.c.h.b16 %v566
  %v2173 = vunpack.c.l.b16 %v567
  %v2174 = vunpack.c.h.b16 %v567
  %v2175 = vunpack.c.l.b16 %v568
  %v2176 = vunpack.c.h.b16 %v568
  %v2177 = vunpack.c.l.b16 %v569
  %v2178 = vunpack.c.h.b16 %v569
  %v2179 = vunpack.c.l.b16 %v570
  %v2180 = vunpack.c.h.b16 %v570
  %v2181 = vpack.c.b16 %v1165, %v1157
  %v2182 = vpack.c.b16 %v1166, %v1158
  %v2183 = vpack.c.b16 %v1167, %v1159
  %v2184 = vpack.c.b16 %v1168, %v1160
  %v2185 = vpack.c.b16 %v1169, %v1161
  %v2186 = vpack.c.b16 %v1170, %v1162
  %v2187 = vpack.c.b16 %v1171, %v1163
  %v2188 = vpack.c.b16 %v1172, %v1164
  %v2189 = vpack.c.b16 %v1181, %v1173
  %v2190 = vpack.c.b16 %v1182, %v1174
  %v2191 = vpack.c.b16 %v1183, %v1175
  %v2192 = vpack.c.b16 %v1184, %v1176
  %v2193 = vpack.c.b16 %v1185, %v1177
  %v2194 = vpack.c.b16 %v1186, %v1178
  %v2195 = vpack.c.b16 %v1187, %v1179
  %v2196 = vpack.c.b16 %v1188, %v1180
  %v2197 = vpack.c.b16 %v1197, %v1189
  %v2198 = vpack.c.b16 %v1198, %v1190
  %v2199 = vpack.c.b16 %v1199, %v1191
  %v2200 = vpack.c.b16 %v1200, %v1192
  %v2201 = vpack.c.b16 %v1201, %v1193
  %v2202 = vpack.c.b16 %v1202, %v1194
  %v2203 = vpack.c.b16 %v1203, %v1195
  %v2204 = vpack.c.b16 %v1204, %v1196
  %v2205 = vpack.c.b16 %v1213, %v1205
  %v2206 = vpack.c.b16 %v1214, %v1206
  %v2207 = vpack.c.b16 %v1215, %v1207
  %v2208 = vpack.c.b16 %v1216, %v1208
  %v2209 = vpack.c.b16 %v1217, %v1209
  %v2210 = vpack.c.b16 %v1218, %v1210
  %v2211 = vpack.c.b16 %v1219, %v1211
  %v2212 = vpack.c.b16 %v1220, %v1212
  %v2213 = vpack.c.b16 %v1229, %v1221
  %v2214 = vpack.c.b16 %v1230, %v1222
  %v2215 = vpack.c.b16 %v1231, %v1223
  %v2216 = vpack.c.b16 %v1232, %v1224
  %v2217 = vpack.c.b16 %v1233, %v1225
  %v2218 = vpack.c.b16 %v1234, %v1226
  %v2219 = vpack.c.b16 %v1235, %v1227
  %v2220 = vpack.c.b16 %v1236, %v1228
  %v2221 = vpack.c.b16 %v1245, %v1237
  %v2222 = vpack.c.b16 %v1246, %v1238
  %v2223 = vpack.c.b16 %v1247, %v1239
  %v2224 = vpack.c.b16 %v1248, %v1240
  %v2225 = vpack.c.b16 %v1249, %v1241
  %v2226 = vpack.c.b16 %v1250, %v1242
  %v2227 = vpack.c.b16 %v1251, %v1243
  %v2228 = vpack.c.b16 %v1252, %v1244
  %v2229 = vpack.c.b16 %v1261, %v1253
  %v2230 = vpack.c.b16 %v1262, %v1254
  %v2231 = vpack.c.b16 %v1263, %v1255
  %v2232 = vpack.c.b16 %v1264, %v1256
  %v2233 = vpack.c.b16 %v1265, %v1257
  %v2234 = vpack.c.b16 %v1266, %v1258
  %v2235 = vpack.c.b16 %v1267, %v1259
  %v2236 = vpack.c.b16 %v1268, %v1260
  %v2237 = vpack.c.b16 %v1277, %v1269
  %v2238 = vpack.c.b16 %v1278, %v1270
  %v2239 = vpack.c.b16 %v1279, %v1271
  %v2240 = vpack.c.b16 %v1280, %v1272
  %v2241 = vpack.c.b16 %v1281, %v1273
  %v2242 = vpack.c.b16 %v1282, %v1274
  %v2243 = vpack.c.b16 %v1283, %v1275
  %v2244 = vpack.c.b16 %v1284, %v1276
  %v2245 = vpack.c.b16 %v1293, %v1285
  %v2246 = vpack.c.b16 %v1294, %v1286
  %v2247 = vpack.c.b16 %v1295, %v1287
  %v2248 = vpack.c.b16 %v1296, %v1288
  %v2249 = vpack.c.b16 %v1297, %v1289
  %v2250 = vpack.c.b16 %v1298, %v1290
  %v2251 = vpack.c.b16 %v1299, %v1291
  %v2252 = vpack.c.b16 %v1300, %v1292
  %v2253 = vpack.c.b16 %v1309, %v1301
  %v2254 = vpack.c.b16 %v1310, %v1302
  %v2255 = vpack.c.b16 %v1311, %v1303
  %v2256 = vpack.c.b16 %v1312, %v1304
  %v2257 = vpack.c.b16 %v1313, %v1305
  %v2258 = vpack.c.b16 %v1314, %v1306
  %v2259 = vpack.c.b16 %v1315, %v1307
  %v2260 = vpack.c.b16 %v1316, %v1308
  %v2261 = vpack.c.b16 %v1325, %v1317
  %v2262 = vpack.c.b16 %v1326, %v1318
  %v2263 = vpack.c.b16 %v1327, %v1319
  %v2264 = vpack.c.b16 %v1328, %v1320
  %v2265 = vpack.c.b16 %v1329, %v1321
  %v2266 = vpack.c.b16 %v1330, %v1322
  %v2267 = vpack.c.b16 %v1331, %v1323
  %v2268 = vpack.c.b16 %v1332, %v1324
  %v2269 = vpack.c.b16 %v1341, %v1333
  %v2270 = vpack.c.b16 %v1342, %v1334
  %v2271 = vpack.c.b16 %v1343, %v1335
  %v2272 = vpack.c.b16 %v1344, %v1336
  %v2273 = vpack.c.b16 %v1345, %v1337
  %v2274 = vpack.c.b16 %v1346, %v1338
  %v2275 = vpack.c.b16 %v1347, %v1339
  %v2276 = vpack.c.b16 %v1348, %v1340
  %v2277 = vpack.c.b16 %v1357, %v1349
  %v2278 = vpack.c.b16 %v1358, %v1350
  %v2279 = vpack.c.b16 %v1359, %v1351
  %v2280 = vpack.c.b16 %v1360, %v1352
  %v2281 = vpack.c.b16 %v1361, %v1353
  %v2282 = vpack.c.b16 %v1362, %v1354
  %v2283 = vpack.c.b16 %v1363, %v1355
  %v2284 = vpack.c.b16 %v1364, %v1356
  %v2285 = vpack.c.b16 %v1373, %v1365
  %v2286 = vpack.c.b16 %v1374, %v1366
  %v2287 = vpack.c.b16 %v1375, %v1367
  %v2288 = vpack.c.b16 %v1376, %v1368
  %v2289 = vpack.c.b16 %v1377, %v1369
  %v2290 = vpack.c.b16 %v1378, %v1370
  %v2291 = vpack.c.b16 %v1379, %v1371
  %v2292 = vpack.c.b16 %v1380, %v1372
  %v2293 = vpack.c.b16 %v1389, %v1381
  %v2294 = vpack.c.b16 %v1390, %v1382
  %v2295 = vpack.c.b16 %v1391, %v1383
  %v2296 = vpack.c.b16 %v1392, %v1384
  %v2297 = vpack.c.b16 %v1393, %v1385
  %v2298 = vpack.c.b16 %v1394, %v1386
  %v2299 = vpack.c.b16 %v1395, %v1387
  %v2300 = vpack.c.b16 %v1396, %v1388
  %v2301 = vpack.c.b16 %v1405, %v1397
  %v2302 = vpack.c.b16 %v1406, %v1398
  %v2303 = vpack.c.b16 %v1407, %v1399
  %v2304 = vpack.c.b16 %v1408, %v1400
  %v2305 = vpack.c.b16 %v1409, %v1401
  %v2306 = vpack.c.b16 %v1410, %v1402
  %v2307 = vpack.c.b16 %v1411, %v1403
  %v2308 = vpack.c.b16 %v1412, %v1404
  %v2309 = vpack.c.b16 %v1421, %v1413
  %v2310 = vpack.c.b16 %v1422, %v1414
  %v2311 = vpack.c.b16 %v1423, %v1415
  %v2312 = vpack.c.b16 %v1424, %v1416
  %v2313 = vpack.c.b16 %v1425, %v1417
  %v2314 = vpack.c.b16 %v1426, %v1418
  %v2315 = vpack.c.b16 %v1427, %v1419
  %v2316 = vpack.c.b16 %v1428, %v1420
  %v2317 = vpack.c.b16 %v1437, %v1429
  %v2318 = vpack.c.b16 %v1438, %v1430
  %v2319 = vpack.c.b16 %v1439, %v1431
  %v2320 = vpack.c.b16 %v1440, %v1432
  %v2321 = vpack.c.b16 %v1441, %v1433
  %v2322 = vpack.c.b16 %v1442, %v1434
  %v2323 = vpack.c.b16 %v1443, %v1435
  %v2324 = vpack.c.b16 %v1444, %v1436
  %v2325 = vpack.c.b16 %v1453, %v1445
  %v2326 = vpack.c.b16 %v1454, %v1446
  %v2327 = vpack.c.b16 %v1455, %v1447
  %v2328 = vpack.c.b16 %v1456, %v1448
  %v2329 = vpack.c.b16 %v1457, %v1449
  %v2330 = vpack.c.b16 %v1458, %v1450
  %v2331 = vpack.c.b16 %v1459, %v1451
  %v2332 = vpack.c.b16 %v1460, %v1452
  %v2333 = vpack.c.b16 %v1469, %v1461
  %v2334 = vpack.c.b16 %v1470, %v1462
  %v2335 = vpack.c.b16 %v1471, %v1463
  %v2336 = vpack.c.b16 %v1472, %v1464
  %v2337 = vpack.c.b16 %v1473, %v1465
  %v2338 = vpack.c.b16 %v1474, %v1466
  %v2339 = vpack.c.b16 %v1475, %v1467
  %v2340 = vpack.c.b16 %v1476, %v1468
  %v2341 = vpack.c.b16 %v1485, %v1477
  %v2342 = vpack.c.b16 %v1486, %v1478
  %v2343 = vpack.c.b16 %v1487, %v1479
  %v2344 = vpack.c.b16 %v1488, %v1480
  %v2345 = vpack.c.b16 %v1489, %v1481
  %v2346 = vpack.c.b16 %v1490, %v1482
  %v2347 = vpack.c.b16 %v1491, %v1483
  %v2348 = vpack.c.b16 %v1492, %v1484
  %v2349 = vpack.c.b16 %v1501, %v1493
  %v2350 = vpack.c.b16 %v1502, %v1494
  %v2351 = vpack.c.b16 %v1503, %v1495
  %v2352 = vpack.c.b16 %v1504, %v1496
  %v2353 = vpack.c.b16 %v1505, %v1497
  %v2354 = vpack.c.b16 %v1506, %v1498
  %v2355 = vpack.c.b16 %v1507, %v1499
  %v2356 = vpack.c.b16 %v1508, %v1500
  %v2357 = vpack.c.b16 %v1517, %v1509
  %v2358 = vpack.c.b16 %v1518, %v1510
  %v2359 = vpack.c.b16 %v1519, %v1511
  %v2360 = vpack.c.b16 %v1520, %v1512
  %v2361 = vpack.c.b16 %v1521, %v1513
  %v2362 = vpack.c.b16 %v1522, %v1514
  %v2363 = vpack.c.b16 %v1523, %v1515
  %v2364 = vpack.c.b16 %v1524, %v1516
  %v2365 = vpack.c.b16 %v1533, %v1525
  %v2366 = vpack.c.b16 %v1534, %v1526
  %v2367 = vpack.c.b16 %v1535, %v1527
  %v2368 = vpack.c.b16 %v1536, %v1528
  %v2369 = vpack.c.b16 %v1537, %v1529
  %v2370 = vpack.c.b16 %v1538, %v1530
  %v2371 = vpack.c.b16 %v1539, %v1531
  %v2372 = vpack.c.b16 %v1540, %v1532
  %v2373 = vpack.c.b16 %v1549, %v1541
  %v2374 = vpack.c.b16 %v1550, %v1542
  %v2375 = vpack.c.b16 %v1551, %v1543
  %v2376 = vpack.c.b16 %v1552, %v1544
  %v2377 = vpack.c.b16 %v1553, %v1545
  %v2378 = vpack.c.b16 %v1554, %v1546
  %v2379 = vpack.c.b16 %v1555, %v1547
  %v2380 = vpack.c.b16 %v1556, %v1548
  %v2381 = vpack.c.b16 %v1565, %v1557
  %v2382 = vpack.c.b16 %v1566, %v1558
  %v2383 = vpack.c.b16 %v1567, %v1559
  %v2384 = vpack.c.b16 %v1568, %v1560
  %v2385 = vpack.c.b16 %v1569, %v1561
  %v2386 = vpack.c.b16 %v1570, %v1562
  %v2387 = vpack.c.b16 %v1571, %v1563
  %v2388 = vpack.c.b16 %v1572, %v1564
  %v2389 = vpack.c.b16 %v1581, %v1573
  %v2390 = vpack.c.b16 %v1582, %v1574
  %v2391 = vpack.c.b16 %v1583, %v1575
  %v2392 = vpack.c.b16 %v1584, %v1576
  %v2393 = vpack.c.b16 %v1585, %v1577
  %v2394 = vpack.c.b16 %v1586, %v1578
  %v2395 = vpack.c.b16 %v1587, %v1579
  %v2396 = vpack.c.b16 %v1588, %v1580
  %v2397 = vpack.c.b16 %v1597, %v1589
  %v2398 = vpack.c.b16 %v1598, %v1590
  %v2399 = vpack.c.b16 %v1599, %v1591
  %v2400 = vpack.c.b16 %v1600, %v1592
  %v2401 = vpack.c.b16 %v1601, %v1593
  %v2402 = vpack.c.b16 %v1602, %v1594
  %v2403 = vpack.c.b16 %v1603, %v1595
  %v2404 = vpack.c.b16 %v1604, %v1596
  %v2405 = vpack.c.b16 %v1613, %v1605
  %v2406 = vpack.c.b16 %v1614, %v1606
  %v2407 = vpack.c.b16 %v1615, %v1607
  %v2408 = vpack.c.b16 %v1616, %v1608
  %v2409 = vpack.c.b16 %v1617, %v1609
  %v2410 = vpack.c.b16 %v1618, %v1610
  %v2411 = vpack.c.b16 %v1619, %v1611
  %v2412 = vpack.c.b16 %v1620, %v1612
  %v2413 = vpack.c.b16 %v1629, %v1621
  %v2414 = vpack.c.b16 %v1630, %v1622
  %v2415 = vpack.c.b16 %v1631, %v1623
  %v2416 = vpack.c.b16 %v1632, %v1624
  %v2417 = vpack.c.b16 %v1633, %v1625
  %v2418 = vpack.c.b16 %v1634, %v1626
  %v2419 = vpack.c.b16 %v1635, %v1627
  %v2420 = vpack.c.b16 %v1636, %v1628
  %v2421 = vpack.c.b16 %v1645, %v1637
  %v2422 = vpack.c.b16 %v1646, %v1638
  %v2423 = vpack.c.b16 %v1647, %v1639
  %v2424 = vpack.c.b16 %v1648, %v1640
  %v2425 = vpack.c.b16 %v1649, %v1641
  %v2426 = vpack.c.b16 %v1650, %v1642
  %v2427 = vpack.c.b16 %v1651, %v1643
  %v2428 = vpack.c.b16 %v1652, %v1644
  %v2429 = vpack.c.b16 %v1661, %v1653
  %v2430 = vpack.c.b16 %v1662, %v1654
  %v2431 = vpack.c.b16 %v1663, %v1655
  %v2432 = vpack.c.b16 %v1664, %v1656
  %v2433 = vpack.c.b16 %v1665, %v1657
  %v2434 = vpack.c.b16 %v1666, %v1658
  %v2435 = vpack.c.b16 %v1667, %v1659
  %v2436 = vpack.c.b16 %v1668, %v1660
  %v2437 = vpack.c.b16 %v1677, %v1669
  %v2438 = vpack.c.b16 %v1678, %v1670
  %v2439 = vpack.c.b16 %v1679, %v1671
  %v2440 = vpack.c.b16 %v1680, %v1672
  %v2441 = vpack.c.b16 %v1681, %v1673
  %v2442 = vpack.c.b16 %v1682, %v1674
  %v2443 = vpack.c.b16 %v1683, %v1675
  %v2444 = vpack.c.b16 %v1684, %v1676
  %v2445 = vpack.c.b16 %v1693, %v1685
  %v2446 = vpack.c.b16 %v1694, %v1686
  %v2447 = vpack.c.b16 %v1695, %v1687
  %v2448 = vpack.c.b16 %v1696, %v1688
  %v2449 = vpack.c.b16 %v1697, %v1689
  %v2450 = vpack.c.b16 %v1698, %v1690
  %v2451 = vpack.c.b16 %v1699, %v1691
  %v2452 = vpack.c.b16 %v1700, %v1692
  %v2453 = vpack.c.b16 %v1709, %v1701
  %v2454 = vpack.c.b16 %v1710, %v1702
  %v2455 = vpack.c.b16 %v1711, %v1703
  %v2456 = vpack.c.b16 %v1712, %v1704
  %v2457 = vpack.c.b16 %v1713, %v1705
  %v2458 = vpack.c.b16 %v1714, %v1706
  %v2459 = vpack.c.b16 %v1715, %v1707
  %v2460 = vpack.c.b16 %v1716, %v1708
  %v2461 = vpack.c.b16 %v1725, %v1717
  %v2462 = vpack.c.b16 %v1726, %v1718
  %v2463 = vpack.c.b16 %v1727, %v1719
  %v2464 = vpack.c.b16 %v1728, %v1720
  %v2465 = vpack.c.b16 %v1729, %v1721
  %v2466 = vpack.c.b16 %v1730, %v1722
  %v2467 = vpack.c.b16 %v1731, %v1723
  %v2468 = vpack.c.b16 %v1732, %v1724
  %v2469 = vpack.c.b16 %v1741, %v1733
  %v2470 = vpack.c.b16 %v1742, %v1734
  %v2471 = vpack.c.b16 %v1743, %v1735
  %v2472 = vpack.c.b16 %v1744, %v1736
  %v2473 = vpack.c.b16 %v1745, %v1737
  %v2474 = vpack.c.b16 %v1746, %v1738
  %v2475 = vpack.c.b16 %v1747, %v1739
  %v2476 = vpack.c.b16 %v1748, %v1740
  %v2477 = vpack.c.b16 %v1757, %v1749
  %v2478 = vpack.c.b16 %v1758, %v1750
  %v2479 = vpack.c.b16 %v1759, %v1751
  %v2480 = vpack.c.b16 %v1760, %v1752
  %v2481 = vpack.c.b16 %v1761, %v1753
  %v2482 = vpack.c.b16 %v1762, %v1754
  %v2483 = vpack.c.b16 %v1763, %v1755
  %v2484 = vpack.c.b16 %v1764, %v1756
  %v2485 = vpack.c.b16 %v1773, %v1765
  %v2486 = vpack.c.b16 %v1774, %v1766
  %v2487 = vpack.c.b16 %v1775, %v1767
  %v2488 = vpack.c.b16 %v1776, %v1768
  %v2489 = vpack.c.b16 %v1777, %v1769
  %v2490 = vpack.c.b16 %v1778, %v1770
  %v2491 = vpack.c.b16 %v1779, %v1771
  %v2492 = vpack.c.b16 %v1780, %v1772
  %v2493 = vpack.c.b16 %v1789, %v1781
  %v2494 = vpack.c.b16 %v1790, %v1782
  %v2495 = vpack.c.b16 %v1791, %v1783
  %v2496 = vpack.c.b16 %v1792, %v1784
  %v2497 = vpack.c.b16 %v1793, %v1785
  %v2498 = vpack.c.b16 %v1794, %v1786
  %v2499 = vpack.c.b16 %v1795, %v1787
  %v2500 = vpack.c.b16 %v1796, %v1788
  %v2501 = vpack.c.b16 %v1805, %v1797
  %v2502 = vpack.c.b16 %v1806, %v1798
  %v2503 = vpack.c.b16 %v1807, %v1799
  %v2504 = vpack.c.b16 %v1808, %v1800
  %v2505 = vpack.c.b16 %v1809, %v1801
  %v2506 = vpack.c.b16 %v1810, %v1802
  %v2507 = vpack.c.b16 %v1811, %v1803
  %v2508 = vpack.c.b16 %v1812, %v1804
  %v2509 = vpack.c.b16 %v1821, %v1813
  %v2510 = vpack.c.b16 %v1822, %v1814
  %v2511 = vpack.c.b16 %v1823, %v1815
  %v2512 = vpack.c.b16 %v1824, %v1816
  %v2513 = vpack.c.b16 %v1825, %v1817
  %v2514 = vpack.c.b16 %v1826, %v1818
  %v2515 = vpack.c.b16 %v1827, %v1819
  %v2516 = vpack.c.b16 %v1828, %v1820
  %v2517 = vpack.c.b16 %v1837, %v1829
  %v2518 = vpack.c.b16 %v1838, %v1830
  %v2519 = vpack.c.b16 %v1839, %v1831
  %v2520 = vpack.c.b16 %v1840, %v1832
  %v2521 = vpack.c.b16 %v1841, %v1833
  %v2522 = vpack.c.b16 %v1842, %v1834
  %v2523 = vpack.c.b16 %v1843, %v1835
  %v2524 = vpack.c.b16 %v1844, %v1836
  %v2525 = vpack.c.b16 %v1853, %v1845
  %v2526 = vpack.c.b16 %v1854, %v1846
  %v2527 = vpack.c.b16 %v1855, %v1847
  %v2528 = vpack.c.b16 %v1856, %v1848
  %v2529 = vpack.c.b16 %v1857, %v1849
  %v2530 = vpack.c.b16 %v1858, %v1850
  %v2531 = vpack.c.b16 %v1859, %v1851
  %v2532 = vpack.c.b16 %v1860, %v1852
  %v2533 = vpack.c.b16 %v1869, %v1861
  %v2534 = vpack.c.b16 %v1870, %v1862
  %v2535 = vpack.c.b16 %v1871, %v1863
  %v2536 = vpack.c.b16 %v1872, %v1864
  %v2537 = vpack.c.b16 %v1873, %v1865
  %v2538 = vpack.c.b16 %v1874, %v1866
  %v2539 = vpack.c.b16 %v1875, %v1867
  %v2540 = vpack.c.b16 %v1876, %v1868
  %v2541 = vpack.c.b16 %v1885, %v1877
  %v2542 = vpack.c.b16 %v1886, %v1878
  %v2543 = vpack.c.b16 %v1887, %v1879
  %v2544 = vpack.c.b16 %v1888, %v1880
  %v2545 = vpack.c.b16 %v1889, %v1881
  %v2546 = vpack.c.b16 %v1890, %v1882
  %v2547 = vpack.c.b16 %v1891, %v1883
  %v2548 = vpack.c.b16 %v1892, %v1884
  %v2549 = vpack.c.b16 %v1901, %v1893
  %v2550 = vpack.c.b16 %v1902, %v1894
  %v2551 = vpack.c.b16 %v1903, %v1895
  %v2552 = vpack.c.b16 %v1904, %v1896
  %v2553 = vpack.c.b16 %v1905, %v1897
  %v2554 = vpack.c.b16 %v1906, %v1898
  %v2555 = vpack.c.b16 %v1907, %v1899
  %v2556 = vpack.c.b16 %v1908, %v1900
  %v2557 = vpack.c.b16 %v1917, %v1909
  %v2558 = vpack.c.b16 %v1918, %v1910
  %v2559 = vpack.c.b16 %v1919, %v1911
  %v2560 = vpack.c.b16 %v1920, %v1912
  %v2561 = vpack.c.b16 %v1921, %v1913
  %v2562 = vpack.c.b16 %v1922, %v1914
  %v2563 = vpack.c.b16 %v1923, %v1915
  %v2564 = vpack.c.b16 %v1924, %v1916
  %v2565 = vpack.c.b16 %v1933, %v1925
  %v2566 = vpack.c.b16 %v1934, %v1926
  %v2567 = vpack.c.b16 %v1935, %v1927
  %v2568 = vpack.c.b16 %v1936, %v1928
  %v2569 = vpack.c.b16 %v1937, %v1929
  %v2570 = vpack.c.b16 %v1938, %v1930
  %v2571 = vpack.c.b16 %v1939, %v1931
  %v2572 = vpack.c.b16 %v1940, %v1932
  %v2573 = vpack.c.b16 %v1949, %v1941
  %v2574 = vpack.c.b16 %v1950, %v1942
  %v2575 = vpack.c.b16 %v1951, %v1943
  %v2576 = vpack.c.b16 %v1952, %v1944
  %v2577 = vpack.c.b16 %v1953, %v1945
  %v2578 = vpack.c.b16 %v1954, %v1946
  %v2579 = vpack.c.b16 %v1955, %v1947
  %v2580 = vpack.c.b16 %v1956, %v1948
  %v2581 = vpack.c.b16 %v1965, %v1957
  %v2582 = vpack.c.b16 %v1966, %v1958
  %v2583 = vpack.c.b16 %v1967, %v1959
  %v2584 = vpack.c.b16 %v1968, %v1960
  %v2585 = vpack.c.b16 %v1969, %v1961
  %v2586 = vpack.c.b16 %v1970, %v1962
  %v2587 = vpack.c.b16 %v1971, %v1963
  %v2588 = vpack.c.b16 %v1972, %v1964
  %v2589 = vpack.c.b16 %v1981, %v1973
  %v2590 = vpack.c.b16 %v1982, %v1974
  %v2591 = vpack.c.b16 %v1983, %v1975
  %v2592 = vpack.c.b16 %v1984, %v1976
  %v2593 = vpack.c.b16 %v1985, %v1977
  %v2594 = vpack.c.b16 %v1986, %v1978
  %v2595 = vpack.c.b16 %v1987, %v1979
  %v2596 = vpack.c.b16 %v1988, %v1980
  %v2597 = vpack.c.b16 %v1997, %v1989
  %v2598 = vpack.c.b16 %v1998, %v1990
  %v2599 = vpack.c.b16 %v1999, %v1991
  %v2600 = vpack.c.b16 %v2000, %v1992
  %v2601 = vpack.c.b16 %v2001, %v1993
  %v2602 = vpack.c.b16 %v2002, %v1994
  %v2603 = vpack.c.b16 %v2003, %v1995
  %v2604 = vpack.c.b16 %v2004, %v1996
  %v2605 = vpack.c.b16 %v2013, %v2005
  %v2606 = vpack.c.b16 %v2014, %v2006
  %v2607 = vpack.c.b16 %v2015, %v2007
  %v2608 = vpack.c.b16 %v2016, %v2008
  %v2609 = vpack.c.b16 %v2017, %v2009
  %v2610 = vpack.c.b16 %v2018, %v2010
  %v2611 = vpack.c.b16 %v2019, %v2011
  %v2612 = vpack.c.b16 %v2020, %v2012
  %v2613 = vpack.c.b16 %v2029, %v2021
  %v2614 = vpack.c.b16 %v2030, %v2022
  %v2615 = vpack.c.b16 %v2031, %v2023
  %v2616 = vpack.c.b16 %v2032, %v2024
  %v2617 = vpack.c.b16 %v2033, %v2025
  %v2618 = vpack.c.b16 %v2034, %v2026
  %v2619 = vpack.c.b16 %v2035, %v2027
  %v2620 = vpack.c.b16 %v2036, %v2028
  %v2621 = vpack.c.b16 %v2045, %v2037
  %v2622 = vpack.c.b16 %v2046, %v2038
  %v2623 = vpack.c.b16 %v2047, %v2039
  %v2624 = vpack.c.b16 %v2048, %v2040
  %v2625 = vpack.c.b16 %v2049, %v2041
  %v2626 = vpack.c.b16 %v2050, %v2042
  %v2627 = vpack.c.b16 %v2051, %v2043
  %v2628 = vpack.c.b16 %v2052, %v2044
  %v2629 = vpack.c.b16 %v2061, %v2053
  %v2630 = vpack.c.b16 %v2062, %v2054
  %v2631 = vpack.c.b16 %v2063, %v2055
  %v2632 = vpack.c.b16 %v2064, %v2056
  %v2633 = vpack.c.b16 %v2065, %v2057
  %v2634 = vpack.c.b16 %v2066, %v2058
  %v2635 = vpack.c.b16 %v2067, %v2059
  %v2636 = vpack.c.b16 %v2068, %v2060
  %v2637 = vpack.c.b16 %v2077, %v2069
  %v2638 = vpack.c.b16 %v2078, %v2070
  %v2639 = vpack.c.b16 %v2079, %v2071
  %v2640 = vpack.c.b16 %v2080, %v2072
  %v2641 = vpack.c.b16 %v2081, %v2073
  %v2642 = vpack.c.b16 %v2082, %v2074
  %v2643 = vpack.c.b16 %v2083, %v2075
  %v2644 = vpack.c.b16 %v2084, %v2076
  %v2645 = vpack.c.b16 %v2093, %v2085
  %v2646 = vpack.c.b16 %v2094, %v2086
  %v2647 = vpack.c.b16 %v2095, %v2087
  %v2648 = vpack.c.b16 %v2096, %v2088
  %v2649 = vpack.c.b16 %v2097, %v2089
  %v2650 = vpack.c.b16 %v2098, %v2090
  %v2651 = vpack.c.b16 %v2099, %v2091
  %v2652 = vpack.c.b16 %v2100, %v2092
  %v2653 = vpack.c.b16 %v2109, %v2101
  %v2654 = vpack.c.b16 %v2110, %v2102
  %v2655 = vpack.c.b16 %v2111, %v2103
  %v2656 = vpack.c.b16 %v2112, %v2104
  %v2657 = vpack.c.b16 %v2113, %v2105
  %v2658 = vpack.c.b16 %v2114, %v2106
  %v2659 = vpack.c.b16 %v2115, %v2107
  %v2660 = vpack.c.b16 %v2116, %v2108
  %v2661 = vpack.c.b16 %v2125, %v2117
  %v2662 = vpack.c.b16 %v2126, %v2118
  %v2663 = vpack.c.b16 %v2127, %v2119
  %v2664 = vpack.c.b16 %v2128, %v2120
  %v2665 = vpack.c.b16 %v2129, %v2121
  %v2666 = vpack.c.b16 %v2130, %v2122
  %v2667 = vpack.c.b16 %v2131, %v2123
  %v2668 = vpack.c.b16 %v2132, %v2124
  %v2669 = vpack.c.b16 %v2141, %v2133
  %v2670 = vpack.c.b16 %v2142, %v2134
  %v2671 = vpack.c.b16 %v2143, %v2135
  %v2672 = vpack.c.b16 %v2144, %v2136
  %v2673 = vpack.c.b16 %v2145, %v2137
  %v2674 = vpack.c.b16 %v2146, %v2138
  %v2675 = vpack.c.b16 %v2147, %v2139
  %v2676 = vpack.c.b16 %v2148, %v2140
  %v2677 = vpack.c.b16 %v2157, %v2149
  %v2678 = vpack.c.b16 %v2158, %v2150
  %v2679 = vpack.c.b16 %v2159, %v2151
  %v2680 = vpack.c.b16 %v2160, %v2152
  %v2681 = vpack.c.b16 %v2161, %v2153
  %v2682 = vpack.c.b16 %v2162, %v2154
  %v2683 = vpack.c.b16 %v2163, %v2155
  %v2684 = vpack.c.b16 %v2164, %v2156
  %v2685 = vpack.c.b16 %v2173, %v2165
  %v2686 = vpack.c.b16 %v2174, %v2166
  %v2687 = vpack.c.b16 %v2175, %v2167
  %v2688 = vpack.c.b16 %v2176, %v2168
  %v2689 = vpack.c.b16 %v2177, %v2169
  %v2690 = vpack.c.b16 %v2178, %v2170
  %v2691 = vpack.c.b16 %v2179, %v2171
  %v2692 = vpack.c.b16 %v2180, %v2172
  %3205 = vmatprep.subr.bf16.mxu0 %v2182
  %3206 = vmatpush1.bf16.msra.mxu0 %v2181
  %3207 = vmatprep.subr.bf16.mxu0 %v2190
  %3208 = vmatpush1.bf16.msra.mxu0 %v2189
  %3209 = vmatprep.subr.bf16.mxu0 %v2198
  %3210 = vmatpush1.bf16.msra.mxu0 %v2197
  %3211 = vmatprep.subr.bf16.mxu0 %v2206
  %3212 = vmatpush1.bf16.msra.mxu0 %v2205
  %3213 = vmatprep.subr.bf16.mxu0 %v2214
  %3214 = vmatpush1.bf16.msra.mxu0 %v2213
  %3215 = vmatprep.subr.bf16.mxu0 %v2222
  %3216 = vmatpush1.bf16.msra.mxu0 %v2221
  %3217 = vmatprep.subr.bf16.mxu0 %v2230
  %3218 = vmatpush1.bf16.msra.mxu0 %v2229
  %3219 = vmatprep.subr.bf16.mxu0 %v2238
  %3220 = vmatpush1.bf16.msra.mxu0 %v2237
  %3221 = vmatprep.subr.bf16.mxu0 %v2246
  %3222 = vmatpush1.bf16.msra.mxu0 %v2245
  %3223 = vmatprep.subr.bf16.mxu0 %v2254
  %3224 = vmatpush1.bf16.msra.mxu0 %v2253
  %3225 = vmatprep.subr.bf16.mxu0 %v2262
  %3226 = vmatpush1.bf16.msra.mxu0 %v2261
  %3227 = vmatprep.subr.bf16.mxu0 %v2270
  %3228 = vmatpush1.bf16.msra.mxu0 %v2269
  %3229 = vmatprep.subr.bf16.mxu0 %v2278
  %3230 = vmatpush1.bf16.msra.mxu0 %v2277
  %3231 = vmatprep.subr.bf16.mxu0 %v2286
  %3232 = vmatpush1.bf16.msra.mxu0 %v2285
  %3233 = vmatprep.subr.bf16.mxu0 %v2294
  %3234 = vmatpush1.bf16.msra.mxu0 %v2293
  %3235 = vmatprep.subr.bf16.mxu0 %v2302
  %3236 = vmatpush1.bf16.msra.mxu0 %v2301
  %3237 = vmatprep.mubr.bf16.mxu0 %v630
  %3238 = vmatmul.mubr.bf16.gmra.mrb[0].mxu0 %v629
  %v3239 = vpop.f32.mrb[0].mxu0
  %v3240 = vadd.f32 %v580, %v3239
  %v3241 = vpop.f32.mrb[0].mxu0
  %v3242 = vadd.f32 %v584, %v3241
  %v3243 = vpop.f32.mrb[0].mxu0
  %v3244 = vpop.f32.mrb[0].mxu0
  %3245 = vdwg.mxu0
  %3246 = vmatprep.subr.bf16.mxu0 %v2310
  %3247 = vmatpush1.bf16.msra.mxu0 %v2309
  %3248 = vmatprep.subr.bf16.mxu0 %v2318
  %3249 = vmatpush1.bf16.msra.mxu0 %v2317
  %3250 = vmatprep.subr.bf16.mxu0 %v2326
  %3251 = vmatpush1.bf16.msra.mxu0 %v2325
  %3252 = vmatprep.subr.bf16.mxu0 %v2334
  %3253 = vmatpush1.bf16.msra.mxu0 %v2333
  %3254 = vmatprep.subr.bf16.mxu0 %v2342
  %3255 = vmatpush1.bf16.msra.mxu0 %v2341
  %3256 = vmatprep.subr.bf16.mxu0 %v2350
  %3257 = vmatpush1.bf16.msra.mxu0 %v2349
  %3258 = vmatprep.subr.bf16.mxu0 %v2358
  %3259 = vmatpush1.bf16.msra.mxu0 %v2357
  %3260 = vmatprep.subr.bf16.mxu0 %v2366
  %3261 = vmatpush1.bf16.msra.mxu0 %v2365
  %3262 = vmatprep.subr.bf16.mxu0 %v2374
  %3263 = vmatpush1.bf16.msra.mxu0 %v2373
  %3264 = vmatprep.subr.bf16.mxu0 %v2382
  %3265 = vmatpush1.bf16.msra.mxu0 %v2381
  %3266 = vmatprep.subr.bf16.mxu0 %v2390
  %3267 = vmatpush1.bf16.msra.mxu0 %v2389
  %3268 = vmatprep.subr.bf16.mxu0 %v2398
  %3269 = vmatpush1.bf16.msra.mxu0 %v2397
  %3270 = vmatprep.subr.bf16.mxu0 %v2406
  %3271 = vmatpush1.bf16.msra.mxu0 %v2405
  %3272 = vmatprep.subr.bf16.mxu0 %v2414
  %3273 = vmatpush1.bf16.msra.mxu0 %v2413
  %3274 = vmatprep.subr.bf16.mxu0 %v2422
  %3275 = vmatpush1.bf16.msra.mxu0 %v2421
  %3276 = vmatprep.subr.bf16.mxu0 %v2430
  %3277 = vmatpush1.bf16.msra.mxu0 %v2429
  %3278 = vmatprep.mubr.bf16.mxu0 %v632
  %3279 = vmatmul.mubr.bf16.gmra.mrb[0].mxu0 %v631
  %v3280 = vpop.f32.mrb[0].mxu0
  %v3281 = vadd.f32 %v3240, %v3280
  %v3282 = vpop.f32.mrb[0].mxu0
  %v3283 = vadd.f32 %v3242, %v3282
  %v3284 = vpop.f32.mrb[0].mxu0
  %v3285 = vpop.f32.mrb[0].mxu0
  %3286 = vdwg.mxu0
  %3287 = vmatprep.subr.bf16.mxu0 %v2438
  %3288 = vmatpush1.bf16.msra.mxu0 %v2437
  %3289 = vmatprep.subr.bf16.mxu0 %v2446
  %3290 = vmatpush1.bf16.msra.mxu0 %v2445
  %3291 = vmatprep.subr.bf16.mxu0 %v2454
  %3292 = vmatpush1.bf16.msra.mxu0 %v2453
  %3293 = vmatprep.subr.bf16.mxu0 %v2462
  %3294 = vmatpush1.bf16.msra.mxu0 %v2461
  %3295 = vmatprep.subr.bf16.mxu0 %v2470
  %3296 = vmatpush1.bf16.msra.mxu0 %v2469
  %3297 = vmatprep.subr.bf16.mxu0 %v2478
  %3298 = vmatpush1.bf16.msra.mxu0 %v2477
  %3299 = vmatprep.subr.bf16.mxu0 %v2486
  %3300 = vmatpush1.bf16.msra.mxu0 %v2485
  %3301 = vmatprep.subr.bf16.mxu0 %v2494
  %3302 = vmatpush1.bf16.msra.mxu0 %v2493
  %3303 = vmatprep.subr.bf16.mxu0 %v2502
  %3304 = vmatpush1.bf16.msra.mxu0 %v2501
  %3305 = vmatprep.subr.bf16.mxu0 %v2510
  %3306 = vmatpush1.bf16.msra.mxu0 %v2509
  %3307 = vmatprep.subr.bf16.mxu0 %v2518
  %3308 = vmatpush1.bf16.msra.mxu0 %v2517
  %3309 = vmatprep.subr.bf16.mxu0 %v2526
  %3310 = vmatpush1.bf16.msra.mxu0 %v2525
  %3311 = vmatprep.subr.bf16.mxu0 %v2534
  %3312 = vmatpush1.bf16.msra.mxu0 %v2533
  %3313 = vmatprep.subr.bf16.mxu0 %v2542
  %3314 = vmatpush1.bf16.msra.mxu0 %v2541
  %3315 = vmatprep.subr.bf16.mxu0 %v2550
  %3316 = vmatpush1.bf16.msra.mxu0 %v2549
  %3317 = vmatprep.subr.bf16.mxu0 %v2558
  %3318 = vmatpush1.bf16.msra.mxu0 %v2557
  %3319 = vmatprep.mubr.bf16.mxu0 %v634
  %3320 = vmatmul.mubr.bf16.gmra.mrb[0].mxu0 %v633
  %v3321 = vpop.f32.mrb[0].mxu0
  %v3322 = vadd.f32 %v3281, %v3321
  %v3323 = vpop.f32.mrb[0].mxu0
  %v3324 = vadd.f32 %v3283, %v3323
  %v3325 = vpop.f32.mrb[0].mxu0
  %v3326 = vpop.f32.mrb[0].mxu0
  %3327 = vdwg.mxu0
  %3328 = vmatprep.subr.bf16.mxu0 %v2566
  %3329 = vmatpush1.bf16.msra.mxu0 %v2565
  %3330 = vmatprep.subr.bf16.mxu0 %v2574
  %3331 = vmatpush1.bf16.msra.mxu0 %v2573
  %3332 = vmatprep.subr.bf16.mxu0 %v2582
  %3333 = vmatpush1.bf16.msra.mxu0 %v2581
  %3334 = vmatprep.subr.bf16.mxu0 %v2590
  %3335 = vmatpush1.bf16.msra.mxu0 %v2589
  %3336 = vmatprep.subr.bf16.mxu0 %v2598
  %3337 = vmatpush1.bf16.msra.mxu0 %v2597
  %3338 = vmatprep.subr.bf16.mxu0 %v2606
  %3339 = vmatpush1.bf16.msra.mxu0 %v2605
  %3340 = vmatprep.subr.bf16.mxu0 %v2614
  %3341 = vmatpush1.bf16.msra.mxu0 %v2613
  %3342 = vmatprep.subr.bf16.mxu0 %v2622
  %3343 = vmatpush1.bf16.msra.mxu0 %v2621
  %3344 = vmatprep.subr.bf16.mxu0 %v2630
  %3345 = vmatpush1.bf16.msra.mxu0 %v2629
  %3346 = vmatprep.subr.bf16.mxu0 %v2638
  %3347 = vmatpush1.bf16.msra.mxu0 %v2637
  %3348 = vmatprep.subr.bf16.mxu0 %v2646
  %3349 = vmatpush1.bf16.msra.mxu0 %v2645
  %3350 = vmatprep.subr.bf16.mxu0 %v2654
  %3351 = vmatpush1.bf16.msra.mxu0 %v2653
  %3352 = vmatprep.subr.bf16.mxu0 %v2662
  %3353 = vmatpush1.bf16.msra.mxu0 %v2661
  %3354 = vmatprep.subr.bf16.mxu0 %v2670
  %3355 = vmatpush1.bf16.msra.mxu0 %v2669
  %3356 = vmatprep.subr.bf16.mxu0 %v2678
  %3357 = vmatpush1.bf16.msra.mxu0 %v2677
  %3358 = vmatprep.subr.bf16.mxu0 %v2686
  %3359 = vmatpush1.bf16.msra.mxu0 %v2685
  %3360 = vmatprep.mubr.bf16.mxu0 %v636
  %3361 = vmatmul.mubr.bf16.gmra.mrb[0].mxu0 %v635
  %v3362 = vpop.f32.mrb[0].mxu0
  %v3363 = vadd.f32 %v3322, %v3362
  %v3364 = vpop.f32.mrb[0].mxu0
  %v3365 = vadd.f32 %v3324, %v3364
  %v3366 = vpop.f32.mrb[0].mxu0
  %v3367 = vpop.f32.mrb[0].mxu0
  %3368 = vdwg.mxu0
  %3369 = vmatprep.subr.bf16.mxu0 %v2184
  %3370 = vmatpush1.bf16.msra.mxu0 %v2183
  %3371 = vmatprep.subr.bf16.mxu0 %v2192
  %3372 = vmatpush1.bf16.msra.mxu0 %v2191
  %3373 = vmatprep.subr.bf16.mxu0 %v2200
  %3374 = vmatpush1.bf16.msra.mxu0 %v2199
  %3375 = vmatprep.subr.bf16.mxu0 %v2208
  %3376 = vmatpush1.bf16.msra.mxu0 %v2207
  %3377 = vmatprep.subr.bf16.mxu0 %v2216
  %3378 = vmatpush1.bf16.msra.mxu0 %v2215
  %3379 = vmatprep.subr.bf16.mxu0 %v2224
  %3380 = vmatpush1.bf16.msra.mxu0 %v2223
  %3381 = vmatprep.subr.bf16.mxu0 %v2232
  %3382 = vmatpush1.bf16.msra.mxu0 %v2231
  %3383 = vmatprep.subr.bf16.mxu0 %v2240
  %3384 = vmatpush1.bf16.msra.mxu0 %v2239
  %3385 = vmatprep.subr.bf16.mxu0 %v2248
  %3386 = vmatpush1.bf16.msra.mxu0 %v2247
  %3387 = vmatprep.subr.bf16.mxu0 %v2256
  %3388 = vmatpush1.bf16.msra.mxu0 %v2255
  %3389 = vmatprep.subr.bf16.mxu0 %v2264
  %3390 = vmatpush1.bf16.msra.mxu0 %v2263
  %3391 = vmatprep.subr.bf16.mxu0 %v2272
  %3392 = vmatpush1.bf16.msra.mxu0 %v2271
  %3393 = vmatprep.subr.bf16.mxu0 %v2280
  %3394 = vmatpush1.bf16.msra.mxu0 %v2279
  %3395 = vmatprep.subr.bf16.mxu0 %v2288
  %3396 = vmatpush1.bf16.msra.mxu0 %v2287
  %3397 = vmatprep.subr.bf16.mxu0 %v2296
  %3398 = vmatpush1.bf16.msra.mxu0 %v2295
  %3399 = vmatprep.subr.bf16.mxu0 %v2304
  %3400 = vmatpush1.bf16.msra.mxu0 %v2303
  %3401 = vmatprep.mubr.bf16.mxu0 %v630
  %3402 = vmatmul.mubr.bf16.gmra.mrb[0].mxu0 %v629
  %v3403 = vpop.f32.mrb[0].mxu0
  %v3404 = vadd.f32 %v588, %v3403
  %v3405 = vpop.f32.mrb[0].mxu0
  %v3406 = vadd.f32 %v592, %v3405
  %v3407 = vpop.f32.mrb[0].mxu0
  %v3408 = vpop.f32.mrb[0].mxu0
  %3409 = vdwg.mxu0
  %3410 = vmatprep.subr.bf16.mxu0 %v2312
  %3411 = vmatpush1.bf16.msra.mxu0 %v2311
  %3412 = vmatprep.subr.bf16.mxu0 %v2320
  %3413 = vmatpush1.bf16.msra.mxu0 %v2319
  %3414 = vmatprep.subr.bf16.mxu0 %v2328
  %3415 = vmatpush1.bf16.msra.mxu0 %v2327
  %3416 = vmatprep.subr.bf16.mxu0 %v2336
  %3417 = vmatpush1.bf16.msra.mxu0 %v2335
  %3418 = vmatprep.subr.bf16.mxu0 %v2344
  %3419 = vmatpush1.bf16.msra.mxu0 %v2343
  %3420 = vmatprep.subr.bf16.mxu0 %v2352
  %3421 = vmatpush1.bf16.msra.mxu0 %v2351
  %3422 = vmatprep.subr.bf16.mxu0 %v2360
  %3423 = vmatpush1.bf16.msra.mxu0 %v2359
  %3424 = vmatprep.subr.bf16.mxu0 %v2368
  %3425 = vmatpush1.bf16.msra.mxu0 %v2367
  %3426 = vmatprep.subr.bf16.mxu0 %v2376
  %3427 = vmatpush1.bf16.msra.mxu0 %v2375
  %3428 = vmatprep.subr.bf16.mxu0 %v2384
  %3429 = vmatpush1.bf16.msra.mxu0 %v2383
  %3430 = vmatprep.subr.bf16.mxu0 %v2392
  %3431 = vmatpush1.bf16.msra.mxu0 %v2391
  %3432 = vmatprep.subr.bf16.mxu0 %v2400
  %3433 = vmatpush1.bf16.msra.mxu0 %v2399
  %3434 = vmatprep.subr.bf16.mxu0 %v2408
  %3435 = vmatpush1.bf16.msra.mxu0 %v2407
  %3436 = vmatprep.subr.bf16.mxu0 %v2416
  %3437 = vmatpush1.bf16.msra.mxu0 %v2415
  %3438 = vmatprep.subr.bf16.mxu0 %v2424
  %3439 = vmatpush1.bf16.msra.mxu0 %v2423
  %3440 = vmatprep.subr.bf16.mxu0 %v2432
  %3441 = vmatpush1.bf16.msra.mxu0 %v2431
  %3442 = vmatprep.mubr.bf16.mxu0 %v632
  %3443 = vmatmul.mubr.bf16.gmra.mrb[0].mxu0 %v631
  %v3444 = vpop.f32.mrb[0].mxu0
  %v3445 = vadd.f32 %v3404, %v3444
  %v3446 = vpop.f32.mrb[0].mxu0
  %v3447 = vadd.f32 %v3406, %v3446
  %v3448 = vpop.f32.mrb[0].mxu0
  %v3449 = vpop.f32.mrb[0].mxu0
  %3450 = vdwg.mxu0
  %3451 = vmatprep.subr.bf16.mxu0 %v2440
  %3452 = vmatpush1.bf16.msra.mxu0 %v2439
  %3453 = vmatprep.subr.bf16.mxu0 %v2448
  %3454 = vmatpush1.bf16.msra.mxu0 %v2447
  %3455 = vmatprep.subr.bf16.mxu0 %v2456
  %3456 = vmatpush1.bf16.msra.mxu0 %v2455
  %3457 = vmatprep.subr.bf16.mxu0 %v2464
  %3458 = vmatpush1.bf16.msra.mxu0 %v2463
  %3459 = vmatprep.subr.bf16.mxu0 %v2472
  %3460 = vmatpush1.bf16.msra.mxu0 %v2471
  %3461 = vmatprep.subr.bf16.mxu0 %v2480
  %3462 = vmatpush1.bf16.msra.mxu0 %v2479
  %3463 = vmatprep.subr.bf16.mxu0 %v2488
  %3464 = vmatpush1.bf16.msra.mxu0 %v2487
  %3465 = vmatprep.subr.bf16.mxu0 %v2496
  %3466 = vmatpush1.bf16.msra.mxu0 %v2495
  %3467 = vmatprep.subr.bf16.mxu0 %v2504
  %3468 = vmatpush1.bf16.msra.mxu0 %v2503
  %3469 = vmatprep.subr.bf16.mxu0 %v2512
  %3470 = vmatpush1.bf16.msra.mxu0 %v2511
  %3471 = vmatprep.subr.bf16.mxu0 %v2520
  %3472 = vmatpush1.bf16.msra.mxu0 %v2519
  %3473 = vmatprep.subr.bf16.mxu0 %v2528
  %3474 = vmatpush1.bf16.msra.mxu0 %v2527
  %3475 = vmatprep.subr.bf16.mxu0 %v2536
  %3476 = vmatpush1.bf16.msra.mxu0 %v2535
  %3477 = vmatprep.subr.bf16.mxu0 %v2544
  %3478 = vmatpush1.bf16.msra.mxu0 %v2543
  %3479 = vmatprep.subr.bf16.mxu0 %v2552
  %3480 = vmatpush1.bf16.msra.mxu0 %v2551
  %3481 = vmatprep.subr.bf16.mxu0 %v2560
  %3482 = vmatpush1.bf16.msra.mxu0 %v2559
  %3483 = vmatprep.mubr.bf16.mxu0 %v634
  %3484 = vmatmul.mubr.bf16.gmra.mrb[0].mxu0 %v633
  %v3485 = vpop.f32.mrb[0].mxu0
  %v3486 = vadd.f32 %v3445, %v3485
  %v3487 = vpop.f32.mrb[0].mxu0
  %v3488 = vadd.f32 %v3447, %v3487
  %v3489 = vpop.f32.mrb[0].mxu0
  %v3490 = vpop.f32.mrb[0].mxu0
  %3491 = vdwg.mxu0
  %3492 = vmatprep.subr.bf16.mxu0 %v2568
  %3493 = vmatpush1.bf16.msra.mxu0 %v2567
  %3494 = vmatprep.subr.bf16.mxu0 %v2576
  %3495 = vmatpush1.bf16.msra.mxu0 %v2575
  %3496 = vmatprep.subr.bf16.mxu0 %v2584
  %3497 = vmatpush1.bf16.msra.mxu0 %v2583
  %3498 = vmatprep.subr.bf16.mxu0 %v2592
  %3499 = vmatpush1.bf16.msra.mxu0 %v2591
  %3500 = vmatprep.subr.bf16.mxu0 %v2600
  %3501 = vmatpush1.bf16.msra.mxu0 %v2599
  %3502 = vmatprep.subr.bf16.mxu0 %v2608
  %3503 = vmatpush1.bf16.msra.mxu0 %v2607
  %3504 = vmatprep.subr.bf16.mxu0 %v2616
  %3505 = vmatpush1.bf16.msra.mxu0 %v2615
  %3506 = vmatprep.subr.bf16.mxu0 %v2624
  %3507 = vmatpush1.bf16.msra.mxu0 %v2623
  %3508 = vmatprep.subr.bf16.mxu0 %v2632
  %3509 = vmatpush1.bf16.msra.mxu0 %v2631
  %3510 = vmatprep.subr.bf16.mxu0 %v2640
  %3511 = vmatpush1.bf16.msra.mxu0 %v2639
  %3512 = vmatprep.subr.bf16.mxu0 %v2648
  %3513 = vmatpush1.bf16.msra.mxu0 %v2647
  %3514 = vmatprep.subr.bf16.mxu0 %v2656
  %3515 = vmatpush1.bf16.msra.mxu0 %v2655
  %3516 = vmatprep.subr.bf16.mxu0 %v2664
  %3517 = vmatpush1.bf16.msra.mxu0 %v2663
  %3518 = vmatprep.subr.bf16.mxu0 %v2672
  %3519 = vmatpush1.bf16.msra.mxu0 %v2671
  %3520 = vmatprep.subr.bf16.mxu0 %v2680
  %3521 = vmatpush1.bf16.msra.mxu0 %v2679
  %3522 = vmatprep.subr.bf16.mxu0 %v2688
  %3523 = vmatpush1.bf16.msra.mxu0 %v2687
  %3524 = vmatprep.mubr.bf16.mxu0 %v636
  %3525 = vmatmul.mubr.bf16.gmra.mrb[0].mxu0 %v635
  %v3526 = vpop.f32.mrb[0].mxu0
  %v3527 = vadd.f32 %v3486, %v3526
  %v3528 = vpop.f32.mrb[0].mxu0
  %v3529 = vadd.f32 %v3488, %v3528
  %v3530 = vpop.f32.mrb[0].mxu0
  %v3531 = vpop.f32.mrb[0].mxu0
  %3532 = vdwg.mxu0
  %3533 = vmatprep.subr.bf16.mxu0 %v2186
  %3534 = vmatpush1.bf16.msra.mxu0 %v2185
  %3535 = vmatprep.subr.bf16.mxu0 %v2194
  %3536 = vmatpush1.bf16.msra.mxu0 %v2193
  %3537 = vmatprep.subr.bf16.mxu0 %v2202
  %3538 = vmatpush1.bf16.msra.mxu0 %v2201
  %3539 = vmatprep.subr.bf16.mxu0 %v2210
  %3540 = vmatpush1.bf16.msra.mxu0 %v2209
  %3541 = vmatprep.subr.bf16.mxu0 %v2218
  %3542 = vmatpush1.bf16.msra.mxu0 %v2217
  %3543 = vmatprep.subr.bf16.mxu0 %v2226
  %3544 = vmatpush1.bf16.msra.mxu0 %v2225
  %3545 = vmatprep.subr.bf16.mxu0 %v2234
  %3546 = vmatpush1.bf16.msra.mxu0 %v2233
  %3547 = vmatprep.subr.bf16.mxu0 %v2242
  %3548 = vmatpush1.bf16.msra.mxu0 %v2241
  %3549 = vmatprep.subr.bf16.mxu0 %v2250
  %3550 = vmatpush1.bf16.msra.mxu0 %v2249
  %3551 = vmatprep.subr.bf16.mxu0 %v2258
  %3552 = vmatpush1.bf16.msra.mxu0 %v2257
  %3553 = vmatprep.subr.bf16.mxu0 %v2266
  %3554 = vmatpush1.bf16.msra.mxu0 %v2265
  %3555 = vmatprep.subr.bf16.mxu0 %v2274
  %3556 = vmatpush1.bf16.msra.mxu0 %v2273
  %3557 = vmatprep.subr.bf16.mxu0 %v2282
  %3558 = vmatpush1.bf16.msra.mxu0 %v2281
  %3559 = vmatprep.subr.bf16.mxu0 %v2290
  %3560 = vmatpush1.bf16.msra.mxu0 %v2289
  %3561 = vmatprep.subr.bf16.mxu0 %v2298
  %3562 = vmatpush1.bf16.msra.mxu0 %v2297
  %3563 = vmatprep.subr.bf16.mxu0 %v2306
  %3564 = vmatpush1.bf16.msra.mxu0 %v2305
  %3565 = vmatprep.mubr.bf16.mxu0 %v630
  %3566 = vmatmul.mubr.bf16.gmra.mrb[0].mxu0 %v629
  %v3567 = vpop.f32.mrb[0].mxu0
  %v3568 = vadd.f32 %v596, %v3567
  %v3569 = vpop.f32.mrb[0].mxu0
  %v3570 = vadd.f32 %v600, %v3569
  %v3571 = vpop.f32.mrb[0].mxu0
  %v3572 = vpop.f32.mrb[0].mxu0
  %3573 = vdwg.mxu0
  %3574 = vmatprep.subr.bf16.mxu0 %v2314
  %3575 = vmatpush1.bf16.msra.mxu0 %v2313
  %3576 = vmatprep.subr.bf16.mxu0 %v2322
  %3577 = vmatpush1.bf16.msra.mxu0 %v2321
  %3578 = vmatprep.subr.bf16.mxu0 %v2330
  %3579 = vmatpush1.bf16.msra.mxu0 %v2329
  %3580 = vmatprep.subr.bf16.mxu0 %v2338
  %3581 = vmatpush1.bf16.msra.mxu0 %v2337
  %3582 = vmatprep.subr.bf16.mxu0 %v2346
  %3583 = vmatpush1.bf16.msra.mxu0 %v2345
  %3584 = vmatprep.subr.bf16.mxu0 %v2354
  %3585 = vmatpush1.bf16.msra.mxu0 %v2353
  %3586 = vmatprep.subr.bf16.mxu0 %v2362
  %3587 = vmatpush1.bf16.msra.mxu0 %v2361
  %3588 = vmatprep.subr.bf16.mxu0 %v2370
  %3589 = vmatpush1.bf16.msra.mxu0 %v2369
  %3590 = vmatprep.subr.bf16.mxu0 %v2378
  %3591 = vmatpush1.bf16.msra.mxu0 %v2377
  %3592 = vmatprep.subr.bf16.mxu0 %v2386
  %3593 = vmatpush1.bf16.msra.mxu0 %v2385
  %3594 = vmatprep.subr.bf16.mxu0 %v2394
  %3595 = vmatpush1.bf16.msra.mxu0 %v2393
  %3596 = vmatprep.subr.bf16.mxu0 %v2402
  %3597 = vmatpush1.bf16.msra.mxu0 %v2401
  %3598 = vmatprep.subr.bf16.mxu0 %v2410
  %3599 = vmatpush1.bf16.msra.mxu0 %v2409
  %3600 = vmatprep.subr.bf16.mxu0 %v2418
  %3601 = vmatpush1.bf16.msra.mxu0 %v2417
  %3602 = vmatprep.subr.bf16.mxu0 %v2426
  %3603 = vmatpush1.bf16.msra.mxu0 %v2425
  %3604 = vmatprep.subr.bf16.mxu0 %v2434
  %3605 = vmatpush1.bf16.msra.mxu0 %v2433
  %3606 = vmatprep.mubr.bf16.mxu0 %v632
  %3607 = vmatmul.mubr.bf16.gmra.mrb[0].mxu0 %v631
  %v3608 = vpop.f32.mrb[0].mxu0
  %v3609 = vadd.f32 %v3568, %v3608
  %v3610 = vpop.f32.mrb[0].mxu0
  %v3611 = vadd.f32 %v3570, %v3610
  %v3612 = vpop.f32.mrb[0].mxu0
  %v3613 = vpop.f32.mrb[0].mxu0
  %3614 = vdwg.mxu0
  %3615 = vmatprep.subr.bf16.mxu0 %v2442
  %3616 = vmatpush1.bf16.msra.mxu0 %v2441
  %3617 = vmatprep.subr.bf16.mxu0 %v2450
  %3618 = vmatpush1.bf16.msra.mxu0 %v2449
  %3619 = vmatprep.subr.bf16.mxu0 %v2458
  %3620 = vmatpush1.bf16.msra.mxu0 %v2457
  %3621 = vmatprep.subr.bf16.mxu0 %v2466
  %3622 = vmatpush1.bf16.msra.mxu0 %v2465
  %3623 = vmatprep.subr.bf16.mxu0 %v2474
  %3624 = vmatpush1.bf16.msra.mxu0 %v2473
  %3625 = vmatprep.subr.bf16.mxu0 %v2482
  %3626 = vmatpush1.bf16.msra.mxu0 %v2481
  %3627 = vmatprep.subr.bf16.mxu0 %v2490
  %3628 = vmatpush1.bf16.msra.mxu0 %v2489
  %3629 = vmatprep.subr.bf16.mxu0 %v2498
  %3630 = vmatpush1.bf16.msra.mxu0 %v2497
  %3631 = vmatprep.subr.bf16.mxu0 %v2506
  %3632 = vmatpush1.bf16.msra.mxu0 %v2505
  %3633 = vmatprep.subr.bf16.mxu0 %v2514
  %3634 = vmatpush1.bf16.msra.mxu0 %v2513
  %3635 = vmatprep.subr.bf16.mxu0 %v2522
  %3636 = vmatpush1.bf16.msra.mxu0 %v2521
  %3637 = vmatprep.subr.bf16.mxu0 %v2530
  %3638 = vmatpush1.bf16.msra.mxu0 %v2529
  %3639 = vmatprep.subr.bf16.mxu0 %v2538
  %3640 = vmatpush1.bf16.msra.mxu0 %v2537
  %3641 = vmatprep.subr.bf16.mxu0 %v2546
  %3642 = vmatpush1.bf16.msra.mxu0 %v2545
  %3643 = vmatprep.subr.bf16.mxu0 %v2554
  %3644 = vmatpush1.bf16.msra.mxu0 %v2553
  %3645 = vmatprep.subr.bf16.mxu0 %v2562
  %3646 = vmatpush1.bf16.msra.mxu0 %v2561
  %3647 = vmatprep.mubr.bf16.mxu0 %v634
  %3648 = vmatmul.mubr.bf16.gmra.mrb[0].mxu0 %v633
  %v3649 = vpop.f32.mrb[0].mxu0
  %v3650 = vadd.f32 %v3609, %v3649
  %v3651 = vpop.f32.mrb[0].mxu0
  %v3652 = vadd.f32 %v3611, %v3651
  %v3653 = vpop.f32.mrb[0].mxu0
  %v3654 = vpop.f32.mrb[0].mxu0
  %3655 = vdwg.mxu0
  %3656 = vmatprep.subr.bf16.mxu0 %v2570
  %3657 = vmatpush1.bf16.msra.mxu0 %v2569
  %3658 = vmatprep.subr.bf16.mxu0 %v2578
  %3659 = vmatpush1.bf16.msra.mxu0 %v2577
  %3660 = vmatprep.subr.bf16.mxu0 %v2586
  %3661 = vmatpush1.bf16.msra.mxu0 %v2585
  %3662 = vmatprep.subr.bf16.mxu0 %v2594
  %3663 = vmatpush1.bf16.msra.mxu0 %v2593
  %3664 = vmatprep.subr.bf16.mxu0 %v2602
  %3665 = vmatpush1.bf16.msra.mxu0 %v2601
  %3666 = vmatprep.subr.bf16.mxu0 %v2610
  %3667 = vmatpush1.bf16.msra.mxu0 %v2609
  %3668 = vmatprep.subr.bf16.mxu0 %v2618
  %3669 = vmatpush1.bf16.msra.mxu0 %v2617
  %3670 = vmatprep.subr.bf16.mxu0 %v2626
  %3671 = vmatpush1.bf16.msra.mxu0 %v2625
  %3672 = vmatprep.subr.bf16.mxu0 %v2634
  %3673 = vmatpush1.bf16.msra.mxu0 %v2633
  %3674 = vmatprep.subr.bf16.mxu0 %v2642
  %3675 = vmatpush1.bf16.msra.mxu0 %v2641
  %3676 = vmatprep.subr.bf16.mxu0 %v2650
  %3677 = vmatpush1.bf16.msra.mxu0 %v2649
  %3678 = vmatprep.subr.bf16.mxu0 %v2658
  %3679 = vmatpush1.bf16.msra.mxu0 %v2657
  %3680 = vmatprep.subr.bf16.mxu0 %v2666
  %3681 = vmatpush1.bf16.msra.mxu0 %v2665
  %3682 = vmatprep.subr.bf16.mxu0 %v2674
  %3683 = vmatpush1.bf16.msra.mxu0 %v2673
  %3684 = vmatprep.subr.bf16.mxu0 %v2682
  %3685 = vmatpush1.bf16.msra.mxu0 %v2681
  %3686 = vmatprep.subr.bf16.mxu0 %v2690
  %3687 = vmatpush1.bf16.msra.mxu0 %v2689
  %3688 = vmatprep.mubr.bf16.mxu0 %v636
  %3689 = vmatmul.mubr.bf16.gmra.mrb[0].mxu0 %v635
  %v3690 = vpop.f32.mrb[0].mxu0
  %v3691 = vadd.f32 %v3650, %v3690
  %v3692 = vpop.f32.mrb[0].mxu0
  %v3693 = vadd.f32 %v3652, %v3692
  %v3694 = vpop.f32.mrb[0].mxu0
  %v3695 = vpop.f32.mrb[0].mxu0
  %3696 = vdwg.mxu0
  %3697 = vmatprep.subr.bf16.mxu0 %v2188
  %3698 = vmatpush1.bf16.msra.mxu0 %v2187
  %3699 = vmatprep.subr.bf16.mxu0 %v2196
  %3700 = vmatpush1.bf16.msra.mxu0 %v2195
  %3701 = vmatprep.subr.bf16.mxu0 %v2204
  %3702 = vmatpush1.bf16.msra.mxu0 %v2203
  %3703 = vmatprep.subr.bf16.mxu0 %v2212
  %3704 = vmatpush1.bf16.msra.mxu0 %v2211
  %3705 = vmatprep.subr.bf16.mxu0 %v2220
  %3706 = vmatpush1.bf16.msra.mxu0 %v2219
  %3707 = vmatprep.subr.bf16.mxu0 %v2228
  %3708 = vmatpush1.bf16.msra.mxu0 %v2227
  %3709 = vmatprep.subr.bf16.mxu0 %v2236
  %3710 = vmatpush1.bf16.msra.mxu0 %v2235
  %3711 = vmatprep.subr.bf16.mxu0 %v2244
  %3712 = vmatpush1.bf16.msra.mxu0 %v2243
  %3713 = vmatprep.subr.bf16.mxu0 %v2252
  %3714 = vmatpush1.bf16.msra.mxu0 %v2251
  %3715 = vmatprep.subr.bf16.mxu0 %v2260
  %3716 = vmatpush1.bf16.msra.mxu0 %v2259
  %3717 = vmatprep.subr.bf16.mxu0 %v2268
  %3718 = vmatpush1.bf16.msra.mxu0 %v2267
  %3719 = vmatprep.subr.bf16.mxu0 %v2276
  %3720 = vmatpush1.bf16.msra.mxu0 %v2275
  %3721 = vmatprep.subr.bf16.mxu0 %v2284
  %3722 = vmatpush1.bf16.msra.mxu0 %v2283
  %3723 = vmatprep.subr.bf16.mxu0 %v2292
  %3724 = vmatpush1.bf16.msra.mxu0 %v2291
  %3725 = vmatprep.subr.bf16.mxu0 %v2300
  %3726 = vmatpush1.bf16.msra.mxu0 %v2299
  %3727 = vmatprep.subr.bf16.mxu0 %v2308
  %3728 = vmatpush1.bf16.msra.mxu0 %v2307
  %3729 = vmatprep.mubr.bf16.mxu0 %v630
  %3730 = vmatmul.mubr.bf16.gmra.mrb[0].mxu0 %v629
  %v3731 = vpop.f32.mrb[0].mxu0
  %v3732 = vadd.f32 %v604, %v3731
  %v3733 = vpop.f32.mrb[0].mxu0
  %v3734 = vadd.f32 %v608, %v3733
  %v3735 = vpop.f32.mrb[0].mxu0
  %v3736 = vpop.f32.mrb[0].mxu0
  %3737 = vdwg.mxu0
  %3738 = vmatprep.subr.bf16.mxu0 %v2316
  %3739 = vmatpush1.bf16.msra.mxu0 %v2315
  %3740 = vmatprep.subr.bf16.mxu0 %v2324
  %3741 = vmatpush1.bf16.msra.mxu0 %v2323
  %3742 = vmatprep.subr.bf16.mxu0 %v2332
  %3743 = vmatpush1.bf16.msra.mxu0 %v2331
  %3744 = vmatprep.subr.bf16.mxu0 %v2340
  %3745 = vmatpush1.bf16.msra.mxu0 %v2339
  %3746 = vmatprep.subr.bf16.mxu0 %v2348
  %3747 = vmatpush1.bf16.msra.mxu0 %v2347
  %3748 = vmatprep.subr.bf16.mxu0 %v2356
  %3749 = vmatpush1.bf16.msra.mxu0 %v2355
  %3750 = vmatprep.subr.bf16.mxu0 %v2364
  %3751 = vmatpush1.bf16.msra.mxu0 %v2363
  %3752 = vmatprep.subr.bf16.mxu0 %v2372
  %3753 = vmatpush1.bf16.msra.mxu0 %v2371
  %3754 = vmatprep.subr.bf16.mxu0 %v2380
  %3755 = vmatpush1.bf16.msra.mxu0 %v2379
  %3756 = vmatprep.subr.bf16.mxu0 %v2388
  %3757 = vmatpush1.bf16.msra.mxu0 %v2387
  %3758 = vmatprep.subr.bf16.mxu0 %v2396
  %3759 = vmatpush1.bf16.msra.mxu0 %v2395
  %3760 = vmatprep.subr.bf16.mxu0 %v2404
  %3761 = vmatpush1.bf16.msra.mxu0 %v2403
  %3762 = vmatprep.subr.bf16.mxu0 %v2412
  %3763 = vmatpush1.bf16.msra.mxu0 %v2411
  %3764 = vmatprep.subr.bf16.mxu0 %v2420
  %3765 = vmatpush1.bf16.msra.mxu0 %v2419
  %3766 = vmatprep.subr.bf16.mxu0 %v2428
  %3767 = vmatpush1.bf16.msra.mxu0 %v2427
  %3768 = vmatprep.subr.bf16.mxu0 %v2436
  %3769 = vmatpush1.bf16.msra.mxu0 %v2435
  %3770 = vmatprep.mubr.bf16.mxu0 %v632
  %3771 = vmatmul.mubr.bf16.gmra.mrb[0].mxu0 %v631
  %v3772 = vpop.f32.mrb[0].mxu0
  %v3773 = vadd.f32 %v3732, %v3772
  %v3774 = vpop.f32.mrb[0].mxu0
  %v3775 = vadd.f32 %v3734, %v3774
  %v3776 = vpop.f32.mrb[0].mxu0
  %v3777 = vpop.f32.mrb[0].mxu0
  %3778 = vdwg.mxu0
  %3779 = vmatprep.subr.bf16.mxu0 %v2444
  %3780 = vmatpush1.bf16.msra.mxu0 %v2443
  %3781 = vmatprep.subr.bf16.mxu0 %v2452
  %3782 = vmatpush1.bf16.msra.mxu0 %v2451
  %3783 = vmatprep.subr.bf16.mxu0 %v2460
  %3784 = vmatpush1.bf16.msra.mxu0 %v2459
  %3785 = vmatprep.subr.bf16.mxu0 %v2468
  %3786 = vmatpush1.bf16.msra.mxu0 %v2467
  %3787 = vmatprep.subr.bf16.mxu0 %v2476
  %3788 = vmatpush1.bf16.msra.mxu0 %v2475
  %3789 = vmatprep.subr.bf16.mxu0 %v2484
  %3790 = vmatpush1.bf16.msra.mxu0 %v2483
  %3791 = vmatprep.subr.bf16.mxu0 %v2492
  %3792 = vmatpush1.bf16.msra.mxu0 %v2491
  %3793 = vmatprep.subr.bf16.mxu0 %v2500
  %3794 = vmatpush1.bf16.msra.mxu0 %v2499
  %3795 = vmatprep.subr.bf16.mxu0 %v2508
  %3796 = vmatpush1.bf16.msra.mxu0 %v2507
  %3797 = vmatprep.subr.bf16.mxu0 %v2516
  %3798 = vmatpush1.bf16.msra.mxu0 %v2515
  %3799 = vmatprep.subr.bf16.mxu0 %v2524
  %3800 = vmatpush1.bf16.msra.mxu0 %v2523
  %3801 = vmatprep.subr.bf16.mxu0 %v2532
  %3802 = vmatpush1.bf16.msra.mxu0 %v2531
  %3803 = vmatprep.subr.bf16.mxu0 %v2540
  %3804 = vmatpush1.bf16.msra.mxu0 %v2539
  %3805 = vmatprep.subr.bf16.mxu0 %v2548
  %3806 = vmatpush1.bf16.msra.mxu0 %v2547
  %3807 = vmatprep.subr.bf16.mxu0 %v2556
  %3808 = vmatpush1.bf16.msra.mxu0 %v2555
  %3809 = vmatprep.subr.bf16.mxu0 %v2564
  %3810 = vmatpush1.bf16.msra.mxu0 %v2563
  %3811 = vmatprep.mubr.bf16.mxu0 %v634
  %3812 = vmatmul.mubr.bf16.gmra.mrb[0].mxu0 %v633
  %v3813 = vpop.f32.mrb[0].mxu0
  %v3814 = vadd.f32 %v3773, %v3813
  %v3815 = vpop.f32.mrb[0].mxu0
  %v3816 = vadd.f32 %v3775, %v3815
  %v3817 = vpop.f32.mrb[0].mxu0
  %v3818 = vpop.f32.mrb[0].mxu0
  %3819 = vdwg.mxu0
  %3820 = vmatprep.subr.bf16.mxu0 %v2572
  %3821 = vmatpush1.bf16.msra.mxu0 %v2571
  %3822 = vmatprep.subr.bf16.mxu0 %v2580
  %3823 = vmatpush1.bf16.msra.mxu0 %v2579
  %3824 = vmatprep.subr.bf16.mxu0 %v2588
  %3825 = vmatpush1.bf16.msra.mxu0 %v2587
  %3826 = vmatprep.subr.bf16.mxu0 %v2596
  %3827 = vmatpush1.bf16.msra.mxu0 %v2595
  %3828 = vmatprep.subr.bf16.mxu0 %v2604
  %3829 = vmatpush1.bf16.msra.mxu0 %v2603
  %3830 = vmatprep.subr.bf16.mxu0 %v2612
  %3831 = vmatpush1.bf16.msra.mxu0 %v2611
  %3832 = vmatprep.subr.bf16.mxu0 %v2620
  %3833 = vmatpush1.bf16.msra.mxu0 %v2619
  %3834 = vmatprep.subr.bf16.mxu0 %v2628
  %3835 = vmatpush1.bf16.msra.mxu0 %v2627
  %3836 = vmatprep.subr.bf16.mxu0 %v2636
  %3837 = vmatpush1.bf16.msra.mxu0 %v2635
  %3838 = vmatprep.subr.bf16.mxu0 %v2644
  %3839 = vmatpush1.bf16.msra.mxu0 %v2643
  %3840 = vmatprep.subr.bf16.mxu0 %v2652
  %3841 = vmatpush1.bf16.msra.mxu0 %v2651
  %3842 = vmatprep.subr.bf16.mxu0 %v2660
  %3843 = vmatpush1.bf16.msra.mxu0 %v2659
  %3844 = vmatprep.subr.bf16.mxu0 %v2668
  %3845 = vmatpush1.bf16.msra.mxu0 %v2667
  %3846 = vmatprep.subr.bf16.mxu0 %v2676
  %3847 = vmatpush1.bf16.msra.mxu0 %v2675
  %3848 = vmatprep.subr.bf16.mxu0 %v2684
  %3849 = vmatpush1.bf16.msra.mxu0 %v2683
  %3850 = vmatprep.subr.bf16.mxu0 %v2692
  %3851 = vmatpush1.bf16.msra.mxu0 %v2691
  %3852 = vmatprep.mubr.bf16.mxu0 %v636
  %3853 = vmatmul.mubr.bf16.gmra.mrb[0].mxu0 %v635
  %v3854 = vpop.f32.mrb[0].mxu0
  %v3855 = vadd.f32 %v3814, %v3854
  %v3856 = vpop.f32.mrb[0].mxu0
  %v3857 = vadd.f32 %v3816, %v3856
  %v3858 = vpop.f32.mrb[0].mxu0
  %v3859 = vpop.f32.mrb[0].mxu0
  %3860 = vdwg.mxu0
  %v3861 = vmax.f32 %v3363, 0.0
  %v3862 = vmax.f32 %v3365, 0.0
  %v3863 = vmax.f32 %v3527, 0.0
  %v3864 = vmax.f32 %v3529, 0.0
  %v3865 = vmax.f32 %v3691, 0.0
  %v3866 = vmax.f32 %v3693, 0.0
  %v3867 = vmax.f32 %v3855, 0.0
  %v3868 = vmax.f32 %v3857, 0.0
  %v3869 = vld [vmem:[%s3] sm:$0xff]
  %v3870 = vld [vmem:[%s3 + $0x8] sm:$0xff]
  %v3871 = vld [vmem:[%s3 + $0x10] sm:$0xff]
  %v3872 = vld [vmem:[%s3 + $0x18] sm:$0xff]
  %v3873 = vld [vmem:[%s3 + $0x20] sm:$0xff]
  %v3874 = vld [vmem:[%s3 + $0x28] sm:$0xff]
  %v3875 = vld [vmem:[%s3 + $0x30] sm:$0xff]
  %v3876 = vld [vmem:[%s3 + $0x38] sm:$0xff]
  %v3877 = vld [vmem:[%s3 + $0x40] sm:$0xff]
  %v3878 = vld [vmem:[%s3 + $0x48] sm:$0xff]
  %v3879 = vld [vmem:[%s3 + $0x50] sm:$0xff]
  %v3880 = vld [vmem:[%s3 + $0x58] sm:$0xff]
  %v3881 = vld [vmem:[%s3 + $0x60] sm:$0xff]
  %v3882 = vld [vmem:[%s3 + $0x68] sm:$0xff]
  %v3883 = vld [vmem:[%s3 + $0x70] sm:$0xff]
  %v3884 = vld [vmem:[%s3 + $0x78] sm:$0xff]
  %v3885 = vld [vmem:[%s3 + $0x80] sm:$0xff]
  %v3886 = vld [vmem:[%s3 + $0x88] sm:$0xff]
  %v3887 = vld [vmem:[%s3 + $0x90] sm:$0xff]
  %v3888 = vld [vmem:[%s3 + $0x98] sm:$0xff]
  %v3889 = vld [vmem:[%s3 + $0xa0] sm:$0xff]
  %v3890 = vld [vmem:[%s3 + $0xa8] sm:$0xff]
  %v3891 = vld [vmem:[%s3 + $0xb0] sm:$0xff]
  %v3892 = vld [vmem:[%s3 + $0xb8] sm:$0xff]
  %v3893 = vld [vmem:[%s3 + $0xc0] sm:$0xff]
  %v3894 = vld [vmem:[%s3 + $0xc8] sm:$0xff]
  %v3895 = vld [vmem:[%s3 + $0xd0] sm:$0xff]
  %v3896 = vld [vmem:[%s3 + $0xd8] sm:$0xff]
  %v3897 = vld [vmem:[%s3 + $0xe0] sm:$0xff]
  %v3898 = vld [vmem:[%s3 + $0xe8] sm:$0xff]
  %v3899 = vld [vmem:[%s3 + $0xf0] sm:$0xff]
  %v3900 = vld [vmem:[%s3 + $0xf8] sm:$0xff]
  %v3901 = vld [vmem:[%s3 + $0x100] sm:$0xff]
  %v3902 = vld [vmem:[%s3 + $0x108] sm:$0xff]
  %v3903 = vld [vmem:[%s3 + $0x110] sm:$0xff]
  %v3904 = vld [vmem:[%s3 + $0x118] sm:$0xff]
  %v3905 = vld [vmem:[%s3 + $0x120] sm:$0xff]
  %v3906 = vld [vmem:[%s3 + $0x128] sm:$0xff]
  %v3907 = vld [vmem:[%s3 + $0x130] sm:$0xff]
  %v3908 = vld [vmem:[%s3 + $0x138] sm:$0xff]
  %v3909 = vld [vmem:[%s3 + $0x140] sm:$0xff]
  %v3910 = vld [vmem:[%s3 + $0x148] sm:$0xff]
  %v3911 = vld [vmem:[%s3 + $0x150] sm:$0xff]
  %v3912 = vld [vmem:[%s3 + $0x158] sm:$0xff]
  %v3913 = vld [vmem:[%s3 + $0x160] sm:$0xff]
  %v3914 = vld [vmem:[%s3 + $0x168] sm:$0xff]
  %v3915 = vld [vmem:[%s3 + $0x170] sm:$0xff]
  %v3916 = vld [vmem:[%s3 + $0x178] sm:$0xff]
  %v3917 = vld [vmem:[%s3 + $0x180] sm:$0xff]
  %v3918 = vld [vmem:[%s3 + $0x188] sm:$0xff]
  %v3919 = vld [vmem:[%s3 + $0x190] sm:$0xff]
  %v3920 = vld [vmem:[%s3 + $0x198] sm:$0xff]
  %v3921 = vld [vmem:[%s3 + $0x1a0] sm:$0xff]
  %v3922 = vld [vmem:[%s3 + $0x1a8] sm:$0xff]
  %v3923 = vld [vmem:[%s3 + $0x1b0] sm:$0xff]
  %v3924 = vld [vmem:[%s3 + $0x1b8] sm:$0xff]
  %v3925 = vld [vmem:[%s3 + $0x1c0] sm:$0xff]
  %v3926 = vld [vmem:[%s3 + $0x1c8] sm:$0xff]
  %v3927 = vld [vmem:[%s3 + $0x1d0] sm:$0xff]
  %v3928 = vld [vmem:[%s3 + $0x1d8] sm:$0xff]
  %v3929 = vld [vmem:[%s3 + $0x1e0] sm:$0xff]
  %v3930 = vld [vmem:[%s3 + $0x1e8] sm:$0xff]
  %v3931 = vld [vmem:[%s3 + $0x1f0] sm:$0xff]
  %v3932 = vld [vmem:[%s3 + $0x1f8] sm:$0xff]
  %v3933 = vld [vmem:[%s3 + $0x200] sm:$0xff]
  %v3934 = vld [vmem:[%s3 + $0x208] sm:$0xff]
  %v3935 = vld [vmem:[%s3 + $0x210] sm:$0xff]
  %v3936 = vld [vmem:[%s3 + $0x218] sm:$0xff]
  %v3937 = vld [vmem:[%s3 + $0x220] sm:$0xff]
  %v3938 = vld [vmem:[%s3 + $0x228] sm:$0xff]
  %v3939 = vld [vmem:[%s3 + $0x230] sm:$0xff]
  %v3940 = vld [vmem:[%s3 + $0x238] sm:$0xff]
  %v3941 = vld [vmem:[%s3 + $0x240] sm:$0xff]
  %v3942 = vld [vmem:[%s3 + $0x248] sm:$0xff]
  %v3943 = vld [vmem:[%s3 + $0x250] sm:$0xff]
  %v3944 = vld [vmem:[%s3 + $0x258] sm:$0xff]
  %v3945 = vld [vmem:[%s3 + $0x260] sm:$0xff]
  %v3946 = vld [vmem:[%s3 + $0x268] sm:$0xff]
  %v3947 = vld [vmem:[%s3 + $0x270] sm:$0xff]
  %v3948 = vld [vmem:[%s3 + $0x278] sm:$0xff]
  %v3949 = vld [vmem:[%s3 + $0x280] sm:$0xff]
  %v3950 = vld [vmem:[%s3 + $0x288] sm:$0xff]
  %v3951 = vld [vmem:[%s3 + $0x290] sm:$0xff]
  %v3952 = vld [vmem:[%s3 + $0x298] sm:$0xff]
  %v3953 = vld [vmem:[%s3 + $0x2a0] sm:$0xff]
  %v3954 = vld [vmem:[%s3 + $0x2a8] sm:$0xff]
  %v3955 = vld [vmem:[%s3 + $0x2b0] sm:$0xff]
  %v3956 = vld [vmem:[%s3 + $0x2b8] sm:$0xff]
  %v3957 = vld [vmem:[%s3 + $0x2c0] sm:$0xff]
  %v3958 = vld [vmem:[%s3 + $0x2c8] sm:$0xff]
  %v3959 = vld [vmem:[%s3 + $0x2d0] sm:$0xff]
  %v3960 = vld [vmem:[%s3 + $0x2d8] sm:$0xff]
  %v3961 = vld [vmem:[%s3 + $0x2e0] sm:$0xff]
  %v3962 = vld [vmem:[%s3 + $0x2e8] sm:$0xff]
  %v3963 = vld [vmem:[%s3 + $0x2f0] sm:$0xff]
  %v3964 = vld [vmem:[%s3 + $0x2f8] sm:$0xff]
  %v3965 = vld [vmem:[%s3 + $0x300] sm:$0xff]
  %v3966 = vld [vmem:[%s3 + $0x308] sm:$0xff]
  %v3967 = vld [vmem:[%s3 + $0x310] sm:$0xff]
  %v3968 = vld [vmem:[%s3 + $0x318] sm:$0xff]
  %v3969 = vld [vmem:[%s3 + $0x320] sm:$0xff]
  %v3970 = vld [vmem:[%s3 + $0x328] sm:$0xff]
  %v3971 = vld [vmem:[%s3 + $0x330] sm:$0xff]
  %v3972 = vld [vmem:[%s3 + $0x338] sm:$0xff]
  %v3973 = vld [vmem:[%s3 + $0x340] sm:$0xff]
  %v3974 = vld [vmem:[%s3 + $0x348] sm:$0xff]
  %v3975 = vld [vmem:[%s3 + $0x350] sm:$0xff]
  %v3976 = vld [vmem:[%s3 + $0x358] sm:$0xff]
  %v3977 = vld [vmem:[%s3 + $0x360] sm:$0xff]
  %v3978 = vld [vmem:[%s3 + $0x368] sm:$0xff]
  %v3979 = vld [vmem:[%s3 + $0x370] sm:$0xff]
  %v3980 = vld [vmem:[%s3 + $0x378] sm:$0xff]
  %v3981 = vld [vmem:[%s3 + $0x380] sm:$0xff]
  %v3982 = vld [vmem:[%s3 + $0x388] sm:$0xff]
  %v3983 = vld [vmem:[%s3 + $0x390] sm:$0xff]
  %v3984 = vld [vmem:[%s3 + $0x398] sm:$0xff]
  %v3985 = vld [vmem:[%s3 + $0x3a0] sm:$0xff]
  %v3986 = vld [vmem:[%s3 + $0x3a8] sm:$0xff]
  %v3987 = vld [vmem:[%s3 + $0x3b0] sm:$0xff]
  %v3988 = vld [vmem:[%s3 + $0x3b8] sm:$0xff]
  %v3989 = vld [vmem:[%s3 + $0x3c0] sm:$0xff]
  %v3990 = vld [vmem:[%s3 + $0x3c8] sm:$0xff]
  %v3991 = vld [vmem:[%s3 + $0x3d0] sm:$0xff]
  %v3992 = vld [vmem:[%s3 + $0x3d8] sm:$0xff]
  %v3993 = vld [vmem:[%s3 + $0x3e0] sm:$0xff]
  %v3994 = vld [vmem:[%s3 + $0x3e8] sm:$0xff]
  %v3995 = vld [vmem:[%s3 + $0x3f0] sm:$0xff]
  %v3996 = vld [vmem:[%s3 + $0x3f8] sm:$0xff]
  %v3997 = vld [vmem:[%s4] sm:$0x3]
  %v3998 = vpack.c.bf16 %v3861, %v3861
  %v3999 = vpack.c.bf16 %v3862, %v3862
  %v4000 = vpack.c.bf16 %v3863, %v3863
  %v4001 = vpack.c.bf16 %v3864, %v3864
  %v4002 = vpack.c.bf16 %v3865, %v3865
  %v4003 = vpack.c.bf16 %v3866, %v3866
  %v4004 = vpack.c.bf16 %v3867, %v3867
  %v4005 = vpack.c.bf16 %v3868, %v3868
  %v4007 = vlaneseq
  %v4008 = vshrl.u32 %v4007, 7
  %v4009 = vsub.s32 0, %v4008
  %v4010 = vrot.slane %v3997, %v4009
  %v4011 = vlaneseq
  %v4012 = vshrl.u32 %v4011, 7
  %v4013 = vsub.s32 1, %v4012
  %v4014 = vrot.slane %v3997, %v4013
  %v4145 = vunpack.c.l.b16 %v3869
  %v4146 = vunpack.c.h.b16 %v3869
  %v4147 = vunpack.c.l.b16 %v3870
  %v4148 = vunpack.c.h.b16 %v3870
  %v4149 = vunpack.c.l.b16 %v3871
  %v4150 = vunpack.c.h.b16 %v3871
  %v4151 = vunpack.c.l.b16 %v3872
  %v4152 = vunpack.c.h.b16 %v3872
  %v4153 = vunpack.c.l.b16 %v3873
  %v4154 = vunpack.c.h.b16 %v3873
  %v4155 = vunpack.c.l.b16 %v3874
  %v4156 = vunpack.c.h.b16 %v3874
  %v4157 = vunpack.c.l.b16 %v3875
  %v4158 = vunpack.c.h.b16 %v3875
  %v4159 = vunpack.c.l.b16 %v3876
  %v4160 = vunpack.c.h.b16 %v3876
  %v4161 = vunpack.c.l.b16 %v3877
  %v4162 = vunpack.c.h.b16 %v3877
  %v4163 = vunpack.c.l.b16 %v3878
  %v4164 = vunpack.c.h.b16 %v3878
  %v4165 = vunpack.c.l.b16 %v3879
  %v4166 = vunpack.c.h.b16 %v3879
  %v4167 = vunpack.c.l.b16 %v3880
  %v4168 = vunpack.c.h.b16 %v3880
  %v4169 = vunpack.c.l.b16 %v3881
  %v4170 = vunpack.c.h.b16 %v3881
  %v4171 = vunpack.c.l.b16 %v3882
  %v4172 = vunpack.c.h.b16 %v3882
  %v4173 = vunpack.c.l.b16 %v3883
  %v4174 = vunpack.c.h.b16 %v3883
  %v4175 = vunpack.c.l.b16 %v3884
  %v4176 = vunpack.c.h.b16 %v3884
  %v4177 = vunpack.c.l.b16 %v3885
  %v4178 = vunpack.c.h.b16 %v3885
  %v4179 = vunpack.c.l.b16 %v3886
  %v4180 = vunpack.c.h.b16 %v3886
  %v4181 = vunpack.c.l.b16 %v3887
  %v4182 = vunpack.c.h.b16 %v3887
  %v4183 = vunpack.c.l.b16 %v3888
  %v4184 = vunpack.c.h.b16 %v3888
  %v4185 = vunpack.c.l.b16 %v3889
  %v4186 = vunpack.c.h.b16 %v3889
  %v4187 = vunpack.c.l.b16 %v3890
  %v4188 = vunpack.c.h.b16 %v3890
  %v4189 = vunpack.c.l.b16 %v3891
  %v4190 = vunpack.c.h.b16 %v3891
  %v4191 = vunpack.c.l.b16 %v3892
  %v4192 = vunpack.c.h.b16 %v3892
  %v4193 = vunpack.c.l.b16 %v3893
  %v4194 = vunpack.c.h.b16 %v3893
  %v4195 = vunpack.c.l.b16 %v3894
  %v4196 = vunpack.c.h.b16 %v3894
  %v4197 = vunpack.c.l.b16 %v3895
  %v4198 = vunpack.c.h.b16 %v3895
  %v4199 = vunpack.c.l.b16 %v3896
  %v4200 = vunpack.c.h.b16 %v3896
  %v4201 = vunpack.c.l.b16 %v3897
  %v4202 = vunpack.c.h.b16 %v3897
  %v4203 = vunpack.c.l.b16 %v3898
  %v4204 = vunpack.c.h.b16 %v3898
  %v4205 = vunpack.c.l.b16 %v3899
  %v4206 = vunpack.c.h.b16 %v3899
  %v4207 = vunpack.c.l.b16 %v3900
  %v4208 = vunpack.c.h.b16 %v3900
  %v4209 = vunpack.c.l.b16 %v3901
  %v4210 = vunpack.c.h.b16 %v3901
  %v4211 = vunpack.c.l.b16 %v3902
  %v4212 = vunpack.c.h.b16 %v3902
  %v4213 = vunpack.c.l.b16 %v3903
  %v4214 = vunpack.c.h.b16 %v3903
  %v4215 = vunpack.c.l.b16 %v3904
  %v4216 = vunpack.c.h.b16 %v3904
  %v4217 = vunpack.c.l.b16 %v3905
  %v4218 = vunpack.c.h.b16 %v3905
  %v4219 = vunpack.c.l.b16 %v3906
  %v4220 = vunpack.c.h.b16 %v3906
  %v4221 = vunpack.c.l.b16 %v3907
  %v4222 = vunpack.c.h.b16 %v3907
  %v4223 = vunpack.c.l.b16 %v3908
  %v4224 = vunpack.c.h.b16 %v3908
  %v4225 = vunpack.c.l.b16 %v3909
  %v4226 = vunpack.c.h.b16 %v3909
  %v4227 = vunpack.c.l.b16 %v3910
  %v4228 = vunpack.c.h.b16 %v3910
  %v4229 = vunpack.c.l.b16 %v3911
  %v4230 = vunpack.c.h.b16 %v3911
  %v4231 = vunpack.c.l.b16 %v3912
  %v4232 = vunpack.c.h.b16 %v3912
  %v4233 = vunpack.c.l.b16 %v3913
  %v4234 = vunpack.c.h.b16 %v3913
  %v4235 = vunpack.c.l.b16 %v3914
  %v4236 = vunpack.c.h.b16 %v3914
  %v4237 = vunpack.c.l.b16 %v3915
  %v4238 = vunpack.c.h.b16 %v3915
  %v4239 = vunpack.c.l.b16 %v3916
  %v4240 = vunpack.c.h.b16 %v3916
  %v4241 = vunpack.c.l.b16 %v3917
  %v4242 = vunpack.c.h.b16 %v3917
  %v4243 = vunpack.c.l.b16 %v3918
  %v4244 = vunpack.c.h.b16 %v3918
  %v4245 = vunpack.c.l.b16 %v3919
  %v4246 = vunpack.c.h.b16 %v3919
  %v4247 = vunpack.c.l.b16 %v3920
  %v4248 = vunpack.c.h.b16 %v3920
  %v4249 = vunpack.c.l.b16 %v3921
  %v4250 = vunpack.c.h.b16 %v3921
  %v4251 = vunpack.c.l.b16 %v3922
  %v4252 = vunpack.c.h.b16 %v3922
  %v4253 = vunpack.c.l.b16 %v3923
  %v4254 = vunpack.c.h.b16 %v3923
  %v4255 = vunpack.c.l.b16 %v3924
  %v4256 = vunpack.c.h.b16 %v3924
  %v4257 = vunpack.c.l.b16 %v3925
  %v4258 = vunpack.c.h.b16 %v3925
  %v4259 = vunpack.c.l.b16 %v3926
  %v4260 = vunpack.c.h.b16 %v3926
  %v4261 = vunpack.c.l.b16 %v3927
  %v4262 = vunpack.c.h.b16 %v3927
  %v4263 = vunpack.c.l.b16 %v3928
  %v4264 = vunpack.c.h.b16 %v3928
  %v4265 = vunpack.c.l.b16 %v3929
  %v4266 = vunpack.c.h.b16 %v3929
  %v4267 = vunpack.c.l.b16 %v3930
  %v4268 = vunpack.c.h.b16 %v3930
  %v4269 = vunpack.c.l.b16 %v3931
  %v4270 = vunpack.c.h.b16 %v3931
  %v4271 = vunpack.c.l.b16 %v3932
  %v4272 = vunpack.c.h.b16 %v3932
  %v4273 = vunpack.c.l.b16 %v3933
  %v4274 = vunpack.c.h.b16 %v3933
  %v4275 = vunpack.c.l.b16 %v3934
  %v4276 = vunpack.c.h.b16 %v3934
  %v4277 = vunpack.c.l.b16 %v3935
  %v4278 = vunpack.c.h.b16 %v3935
  %v4279 = vunpack.c.l.b16 %v3936
  %v4280 = vunpack.c.h.b16 %v3936
  %v4281 = vunpack.c.l.b16 %v3937
  %v4282 = vunpack.c.h.b16 %v3937
  %v4283 = vunpack.c.l.b16 %v3938
  %v4284 = vunpack.c.h.b16 %v3938
  %v4285 = vunpack.c.l.b16 %v3939
  %v4286 = vunpack.c.h.b16 %v3939
  %v4287 = vunpack.c.l.b16 %v3940
  %v4288 = vunpack.c.h.b16 %v3940
  %v4289 = vunpack.c.l.b16 %v3941
  %v4290 = vunpack.c.h.b16 %v3941
  %v4291 = vunpack.c.l.b16 %v3942
  %v4292 = vunpack.c.h.b16 %v3942
  %v4293 = vunpack.c.l.b16 %v3943
  %v4294 = vunpack.c.h.b16 %v3943
  %v4295 = vunpack.c.l.b16 %v3944
  %v4296 = vunpack.c.h.b16 %v3944
  %v4297 = vunpack.c.l.b16 %v3945
  %v4298 = vunpack.c.h.b16 %v3945
  %v4299 = vunpack.c.l.b16 %v3946
  %v4300 = vunpack.c.h.b16 %v3946
  %v4301 = vunpack.c.l.b16 %v3947
  %v4302 = vunpack.c.h.b16 %v3947
  %v4303 = vunpack.c.l.b16 %v3948
  %v4304 = vunpack.c.h.b16 %v3948
  %v4305 = vunpack.c.l.b16 %v3949
  %v4306 = vunpack.c.h.b16 %v3949
  %v4307 = vunpack.c.l.b16 %v3950
  %v4308 = vunpack.c.h.b16 %v3950
  %v4309 = vunpack.c.l.b16 %v3951
  %v4310 = vunpack.c.h.b16 %v3951
  %v4311 = vunpack.c.l.b16 %v3952
  %v4312 = vunpack.c.h.b16 %v3952
  %v4313 = vunpack.c.l.b16 %v3953
  %v4314 = vunpack.c.h.b16 %v3953
  %v4315 = vunpack.c.l.b16 %v3954
  %v4316 = vunpack.c.h.b16 %v3954
  %v4317 = vunpack.c.l.b16 %v3955
  %v4318 = vunpack.c.h.b16 %v3955
  %v4319 = vunpack.c.l.b16 %v3956
  %v4320 = vunpack.c.h.b16 %v3956
  %v4321 = vunpack.c.l.b16 %v3957
  %v4322 = vunpack.c.h.b16 %v3957
  %v4323 = vunpack.c.l.b16 %v3958
  %v4324 = vunpack.c.h.b16 %v3958
  %v4325 = vunpack.c.l.b16 %v3959
  %v4326 = vunpack.c.h.b16 %v3959
  %v4327 = vunpack.c.l.b16 %v3960
  %v4328 = vunpack.c.h.b16 %v3960
  %v4329 = vunpack.c.l.b16 %v3961
  %v4330 = vunpack.c.h.b16 %v3961
  %v4331 = vunpack.c.l.b16 %v3962
  %v4332 = vunpack.c.h.b16 %v3962
  %v4333 = vunpack.c.l.b16 %v3963
  %v4334 = vunpack.c.h.b16 %v3963
  %v4335 = vunpack.c.l.b16 %v3964
  %v4336 = vunpack.c.h.b16 %v3964
  %v4337 = vunpack.c.l.b16 %v3965
  %v4338 = vunpack.c.h.b16 %v3965
  %v4339 = vunpack.c.l.b16 %v3966
  %v4340 = vunpack.c.h.b16 %v3966
  %v4341 = vunpack.c.l.b16 %v3967
  %v4342 = vunpack.c.h.b16 %v3967
  %v4343 = vunpack.c.l.b16 %v3968
  %v4344 = vunpack.c.h.b16 %v3968
  %v4345 = vunpack.c.l.b16 %v3969
  %v4346 = vunpack.c.h.b16 %v3969
  %v4347 = vunpack.c.l.b16 %v3970
  %v4348 = vunpack.c.h.b16 %v3970
  %v4349 = vunpack.c.l.b16 %v3971
  %v4350 = vunpack.c.h.b16 %v3971
  %v4351 = vunpack.c.l.b16 %v3972
  %v4352 = vunpack.c.h.b16 %v3972
  %v4353 = vunpack.c.l.b16 %v3973
  %v4354 = vunpack.c.h.b16 %v3973
  %v4355 = vunpack.c.l.b16 %v3974
  %v4356 = vunpack.c.h.b16 %v3974
  %v4357 = vunpack.c.l.b16 %v3975
  %v4358 = vunpack.c.h.b16 %v3975
  %v4359 = vunpack.c.l.b16 %v3976
  %v4360 = vunpack.c.h.b16 %v3976
  %v4361 = vunpack.c.l.b16 %v3977
  %v4362 = vunpack.c.h.b16 %v3977
  %v4363 = vunpack.c.l.b16 %v3978
  %v4364 = vunpack.c.h.b16 %v3978
  %v4365 = vunpack.c.l.b16 %v3979
  %v4366 = vunpack.c.h.b16 %v3979
  %v4367 = vunpack.c.l.b16 %v3980
  %v4368 = vunpack.c.h.b16 %v3980
  %v4369 = vunpack.c.l.b16 %v3981
  %v4370 = vunpack.c.h.b16 %v3981
  %v4371 = vunpack.c.l.b16 %v3982
  %v4372 = vunpack.c.h.b16 %v3982
  %v4373 = vunpack.c.l.b16 %v3983
  %v4374 = vunpack.c.h.b16 %v3983
  %v4375 = vunpack.c.l.b16 %v3984
  %v4376 = vunpack.c.h.b16 %v3984
  %v4377 = vunpack.c.l.b16 %v3985
  %v4378 = vunpack.c.h.b16 %v3985
  %v4379 = vunpack.c.l.b16 %v3986
  %v4380 = vunpack.c.h.b16 %v3986
  %v4381 = vunpack.c.l.b16 %v3987
  %v4382 = vunpack.c.h.b16 %v3987
  %v4383 = vunpack.c.l.b16 %v3988
  %v4384 = vunpack.c.h.b16 %v3988
  %v4385 = vunpack.c.l.b16 %v3989
  %v4386 = vunpack.c.h.b16 %v3989
  %v4387 = vunpack.c.l.b16 %v3990
  %v4388 = vunpack.c.h.b16 %v3990
  %v4389 = vunpack.c.l.b16 %v3991
  %v4390 = vunpack.c.h.b16 %v3991
  %v4391 = vunpack.c.l.b16 %v3992
  %v4392 = vunpack.c.h.b16 %v3992
  %v4393 = vunpack.c.l.b16 %v3993
  %v4394 = vunpack.c.h.b16 %v3993
  %v4395 = vunpack.c.l.b16 %v3994
  %v4396 = vunpack.c.h.b16 %v3994
  %v4397 = vunpack.c.l.b16 %v3995
  %v4398 = vunpack.c.h.b16 %v3995
  %v4399 = vunpack.c.l.b16 %v3996
  %v4400 = vunpack.c.h.b16 %v3996
  %v4401 = vpack.c.b16 %v4147, %v4145
  %v4402 = vpack.c.b16 %v4148, %v4146
  %v4403 = vpack.c.b16 %v4151, %v4149
  %v4404 = vpack.c.b16 %v4152, %v4150
  %v4405 = vpack.c.b16 %v4155, %v4153
  %v4406 = vpack.c.b16 %v4156, %v4154
  %v4407 = vpack.c.b16 %v4159, %v4157
  %v4408 = vpack.c.b16 %v4160, %v4158
  %v4409 = vpack.c.b16 %v4163, %v4161
  %v4410 = vpack.c.b16 %v4164, %v4162
  %v4411 = vpack.c.b16 %v4167, %v4165
  %v4412 = vpack.c.b16 %v4168, %v4166
  %v4413 = vpack.c.b16 %v4171, %v4169
  %v4414 = vpack.c.b16 %v4172, %v4170
  %v4415 = vpack.c.b16 %v4175, %v4173
  %v4416 = vpack.c.b16 %v4176, %v4174
  %v4417 = vpack.c.b16 %v4179, %v4177
  %v4418 = vpack.c.b16 %v4180, %v4178
  %v4419 = vpack.c.b16 %v4183, %v4181
  %v4420 = vpack.c.b16 %v4184, %v4182
  %v4421 = vpack.c.b16 %v4187, %v4185
  %v4422 = vpack.c.b16 %v4188, %v4186
  %v4423 = vpack.c.b16 %v4191, %v4189
  %v4424 = vpack.c.b16 %v4192, %v4190
  %v4425 = vpack.c.b16 %v4195, %v4193
  %v4426 = vpack.c.b16 %v4196, %v4194
  %v4427 = vpack.c.b16 %v4199, %v4197
  %v4428 = vpack.c.b16 %v4200, %v4198
  %v4429 = vpack.c.b16 %v4203, %v4201
  %v4430 = vpack.c.b16 %v4204, %v4202
  %v4431 = vpack.c.b16 %v4207, %v4205
  %v4432 = vpack.c.b16 %v4208, %v4206
  %v4433 = vpack.c.b16 %v4211, %v4209
  %v4434 = vpack.c.b16 %v4212, %v4210
  %v4435 = vpack.c.b16 %v4215, %v4213
  %v4436 = vpack.c.b16 %v4216, %v4214
  %v4437 = vpack.c.b16 %v4219, %v4217
  %v4438 = vpack.c.b16 %v4220, %v4218
  %v4439 = vpack.c.b16 %v4223, %v4221
  %v4440 = vpack.c.b16 %v4224, %v4222
  %v4441 = vpack.c.b16 %v4227, %v4225
  %v4442 = vpack.c.b16 %v4228, %v4226
  %v4443 = vpack.c.b16 %v4231, %v4229
  %v4444 = vpack.c.b16 %v4232, %v4230
  %v4445 = vpack.c.b16 %v4235, %v4233
  %v4446 = vpack.c.b16 %v4236, %v4234
  %v4447 = vpack.c.b16 %v4239, %v4237
  %v4448 = vpack.c.b16 %v4240, %v4238
  %v4449 = vpack.c.b16 %v4243, %v4241
  %v4450 = vpack.c.b16 %v4244, %v4242
  %v4451 = vpack.c.b16 %v4247, %v4245
  %v4452 = vpack.c.b16 %v4248, %v4246
  %v4453 = vpack.c.b16 %v4251, %v4249
  %v4454 = vpack.c.b16 %v4252, %v4250
  %v4455 = vpack.c.b16 %v4255, %v4253
  %v4456 = vpack.c.b16 %v4256, %v4254
  %v4457 = vpack.c.b16 %v4259, %v4257
  %v4458 = vpack.c.b16 %v4260, %v4258
  %v4459 = vpack.c.b16 %v4263, %v4261
  %v4460 = vpack.c.b16 %v4264, %v4262
  %v4461 = vpack.c.b16 %v4267, %v4265
  %v4462 = vpack.c.b16 %v4268, %v4266
  %v4463 = vpack.c.b16 %v4271, %v4269
  %v4464 = vpack.c.b16 %v4272, %v4270
  %v4465 = vpack.c.b16 %v4275, %v4273
  %v4466 = vpack.c.b16 %v4276, %v4274
  %v4467 = vpack.c.b16 %v4279, %v4277
  %v4468 = vpack.c.b16 %v4280, %v4278
  %v4469 = vpack.c.b16 %v4283, %v4281
  %v4470 = vpack.c.b16 %v4284, %v4282
  %v4471 = vpack.c.b16 %v4287, %v4285
  %v4472 = vpack.c.b16 %v4288, %v4286
  %v4473 = vpack.c.b16 %v4291, %v4289
  %v4474 = vpack.c.b16 %v4292, %v4290
  %v4475 = vpack.c.b16 %v4295, %v4293
  %v4476 = vpack.c.b16 %v4296, %v4294
  %v4477 = vpack.c.b16 %v4299, %v4297
  %v4478 = vpack.c.b16 %v4300, %v4298
  %v4479 = vpack.c.b16 %v4303, %v4301
  %v4480 = vpack.c.b16 %v4304, %v4302
  %v4481 = vpack.c.b16 %v4307, %v4305
  %v4482 = vpack.c.b16 %v4308, %v4306
  %v4483 = vpack.c.b16 %v4311, %v4309
  %v4484 = vpack.c.b16 %v4312, %v4310
  %v4485 = vpack.c.b16 %v4315, %v4313
  %v4486 = vpack.c.b16 %v4316, %v4314
  %v4487 = vpack.c.b16 %v4319, %v4317
  %v4488 = vpack.c.b16 %v4320, %v4318
  %v4489 = vpack.c.b16 %v4323, %v4321
  %v4490 = vpack.c.b16 %v4324, %v4322
  %v4491 = vpack.c.b16 %v4327, %v4325
  %v4492 = vpack.c.b16 %v4328, %v4326
  %v4493 = vpack.c.b16 %v4331, %v4329
  %v4494 = vpack.c.b16 %v4332, %v4330
  %v4495 = vpack.c.b16 %v4335, %v4333
  %v4496 = vpack.c.b16 %v4336, %v4334
  %v4497 = vpack.c.b16 %v4339, %v4337
  %v4498 = vpack.c.b16 %v4340, %v4338
  %v4499 = vpack.c.b16 %v4343, %v4341
  %v4500 = vpack.c.b16 %v4344, %v4342
  %v4501 = vpack.c.b16 %v4347, %v4345
  %v4502 = vpack.c.b16 %v4348, %v4346
  %v4503 = vpack.c.b16 %v4351, %v4349
  %v4504 = vpack.c.b16 %v4352, %v4350
  %v4505 = vpack.c.b16 %v4355, %v4353
  %v4506 = vpack.c.b16 %v4356, %v4354
  %v4507 = vpack.c.b16 %v4359, %v4357
  %v4508 = vpack.c.b16 %v4360, %v4358
  %v4509 = vpack.c.b16 %v4363, %v4361
  %v4510 = vpack.c.b16 %v4364, %v4362
  %v4511 = vpack.c.b16 %v4367, %v4365
  %v4512 = vpack.c.b16 %v4368, %v4366
  %v4513 = vpack.c.b16 %v4371, %v4369
  %v4514 = vpack.c.b16 %v4372, %v4370
  %v4515 = vpack.c.b16 %v4375, %v4373
  %v4516 = vpack.c.b16 %v4376, %v4374
  %v4517 = vpack.c.b16 %v4379, %v4377
  %v4518 = vpack.c.b16 %v4380, %v4378
  %v4519 = vpack.c.b16 %v4383, %v4381
  %v4520 = vpack.c.b16 %v4384, %v4382
  %v4521 = vpack.c.b16 %v4387, %v4385
  %v4522 = vpack.c.b16 %v4388, %v4386
  %v4523 = vpack.c.b16 %v4391, %v4389
  %v4524 = vpack.c.b16 %v4392, %v4390
  %v4525 = vpack.c.b16 %v4395, %v4393
  %v4526 = vpack.c.b16 %v4396, %v4394
  %v4527 = vpack.c.b16 %v4399, %v4397
  %v4528 = vpack.c.b16 %v4400, %v4398
  %4657 = vmatprep.subr.bf16.mxu0 %v4402
  %4658 = vmatpush1.bf16.msra.mxu0 %v4401
  %4659 = vmatprep.subr.bf16.mxu0 %v4404
  %4660 = vmatpush1.bf16.msra.mxu0 %v4403
  %4661 = vmatprep.subr.bf16.mxu0 %v4406
  %4662 = vmatpush1.bf16.msra.mxu0 %v4405
  %4663 = vmatprep.subr.bf16.mxu0 %v4408
  %4664 = vmatpush1.bf16.msra.mxu0 %v4407
  %4665 = vmatprep.subr.bf16.mxu0 %v4410
  %4666 = vmatpush1.bf16.msra.mxu0 %v4409
  %4667 = vmatprep.subr.bf16.mxu0 %v4412
  %4668 = vmatpush1.bf16.msra.mxu0 %v4411
  %4669 = vmatprep.subr.bf16.mxu0 %v4414
  %4670 = vmatpush1.bf16.msra.mxu0 %v4413
  %4671 = vmatprep.subr.bf16.mxu0 %v4416
  %4672 = vmatpush1.bf16.msra.mxu0 %v4415
  %4673 = vmatprep.subr.bf16.mxu0 %v4418
  %4674 = vmatpush1.bf16.msra.mxu0 %v4417
  %4675 = vmatprep.subr.bf16.mxu0 %v4420
  %4676 = vmatpush1.bf16.msra.mxu0 %v4419
  %4677 = vmatprep.subr.bf16.mxu0 %v4422
  %4678 = vmatpush1.bf16.msra.mxu0 %v4421
  %4679 = vmatprep.subr.bf16.mxu0 %v4424
  %4680 = vmatpush1.bf16.msra.mxu0 %v4423
  %4681 = vmatprep.subr.bf16.mxu0 %v4426
  %4682 = vmatpush1.bf16.msra.mxu0 %v4425
  %4683 = vmatprep.subr.bf16.mxu0 %v4428
  %4684 = vmatpush1.bf16.msra.mxu0 %v4427
  %4685 = vmatprep.subr.bf16.mxu0 %v4430
  %4686 = vmatpush1.bf16.msra.mxu0 %v4429
  %4687 = vmatprep.subr.bf16.mxu0 %v4432
  %4688 = vmatpush1.bf16.msra.mxu0 %v4431
  %4689 = vmatprep.mubr.bf16.mxu0 %v3999
  %4690 = vmatmul.mubr.bf16.gmra.mrb[0].mxu0 %v3998
  %v4691 = vpop.f32.mrb[0].mxu0
  %v4692 = vadd.f32 %v4010, %v4691
  %v4693 = vpop.f32.mrb[0].mxu0
  %v4694 = vadd.f32 %v4014, %v4693
  %v4695 = vpop.f32.mrb[0].mxu0
  %v4696 = vpop.f32.mrb[0].mxu0
  %4697 = vdwg.mxu0
  %4698 = vmatprep.subr.bf16.mxu0 %v4434
  %4699 = vmatpush1.bf16.msra.mxu0 %v4433
  %4700 = vmatprep.subr.bf16.mxu0 %v4436
  %4701 = vmatpush1.bf16.msra.mxu0 %v4435
  %4702 = vmatprep.subr.bf16.mxu0 %v4438
  %4703 = vmatpush1.bf16.msra.mxu0 %v4437
  %4704 = vmatprep.subr.bf16.mxu0 %v4440
  %4705 = vmatpush1.bf16.msra.mxu0 %v4439
  %4706 = vmatprep.subr.bf16.mxu0 %v4442
  %4707 = vmatpush1.bf16.msra.mxu0 %v4441
  %4708 = vmatprep.subr.bf16.mxu0 %v4444
  %4709 = vmatpush1.bf16.msra.mxu0 %v4443
  %4710 = vmatprep.subr.bf16.mxu0 %v4446
  %4711 = vmatpush1.bf16.msra.mxu0 %v4445
  %4712 = vmatprep.subr.bf16.mxu0 %v4448
  %4713 = vmatpush1.bf16.msra.mxu0 %v4447
  %4714 = vmatprep.subr.bf16.mxu0 %v4450
  %4715 = vmatpush1.bf16.msra.mxu0 %v4449
  %4716 = vmatprep.subr.bf16.mxu0 %v4452
  %4717 = vmatpush1.bf16.msra.mxu0 %v4451
  %4718 = vmatprep.subr.bf16.mxu0 %v4454
  %4719 = vmatpush1.bf16.msra.mxu0 %v4453
  %4720 = vmatprep.subr.bf16.mxu0 %v4456
  %4721 = vmatpush1.bf16.msra.mxu0 %v4455
  %4722 = vmatprep.subr.bf16.mxu0 %v4458
  %4723 = vmatpush1.bf16.msra.mxu0 %v4457
  %4724 = vmatprep.subr.bf16.mxu0 %v4460
  %4725 = vmatpush1.bf16.msra.mxu0 %v4459
  %4726 = vmatprep.subr.bf16.mxu0 %v4462
  %4727 = vmatpush1.bf16.msra.mxu0 %v4461
  %4728 = vmatprep.subr.bf16.mxu0 %v4464
  %4729 = vmatpush1.bf16.msra.mxu0 %v4463
  %4730 = vmatprep.mubr.bf16.mxu0 %v4001
  %4731 = vmatmul.mubr.bf16.gmra.mrb[0].mxu0 %v4000
  %v4732 = vpop.f32.mrb[0].mxu0
  %v4733 = vadd.f32 %v4692, %v4732
  %v4734 = vpop.f32.mrb[0].mxu0
  %v4735 = vadd.f32 %v4694, %v4734
  %v4736 = vpop.f32.mrb[0].mxu0
  %v4737 = vpop.f32.mrb[0].mxu0
  %4738 = vdwg.mxu0
  %4739 = vmatprep.subr.bf16.mxu0 %v4466
  %4740 = vmatpush1.bf16.msra.mxu0 %v4465
  %4741 = vmatprep.subr.bf16.mxu0 %v4468
  %4742 = vmatpush1.bf16.msra.mxu0 %v4467
  %4743 = vmatprep.subr.bf16.mxu0 %v4470
  %4744 = vmatpush1.bf16.msra.mxu0 %v4469
  %4745 = vmatprep.subr.bf16.mxu0 %v4472
  %4746 = vmatpush1.bf16.msra.mxu0 %v4471
  %4747 = vmatprep.subr.bf16.mxu0 %v4474
  %4748 = vmatpush1.bf16.msra.mxu0 %v4473
  %4749 = vmatprep.subr.bf16.mxu0 %v4476
  %4750 = vmatpush1.bf16.msra.mxu0 %v4475
  %4751 = vmatprep.subr.bf16.mxu0 %v4478
  %4752 = vmatpush1.bf16.msra.mxu0 %v4477
  %4753 = vmatprep.subr.bf16.mxu0 %v4480
  %4754 = vmatpush1.bf16.msra.mxu0 %v4479
  %4755 = vmatprep.subr.bf16.mxu0 %v4482
  %4756 = vmatpush1.bf16.msra.mxu0 %v4481
  %4757 = vmatprep.subr.bf16.mxu0 %v4484
  %4758 = vmatpush1.bf16.msra.mxu0 %v4483
  %4759 = vmatprep.subr.bf16.mxu0 %v4486
  %4760 = vmatpush1.bf16.msra.mxu0 %v4485
  %4761 = vmatprep.subr.bf16.mxu0 %v4488
  %4762 = vmatpush1.bf16.msra.mxu0 %v4487
  %4763 = vmatprep.subr.bf16.mxu0 %v4490
  %4764 = vmatpush1.bf16.msra.mxu0 %v4489
  %4765 = vmatprep.subr.bf16.mxu0 %v4492
  %4766 = vmatpush1.bf16.msra.mxu0 %v4491
  %4767 = vmatprep.subr.bf16.mxu0 %v4494
  %4768 = vmatpush1.bf16.msra.mxu0 %v4493
  %4769 = vmatprep.subr.bf16.mxu0 %v4496
  %4770 = vmatpush1.bf16.msra.mxu0 %v4495
  %4771 = vmatprep.mubr.bf16.mxu0 %v4003
  %4772 = vmatmul.mubr.bf16.gmra.mrb[0].mxu0 %v4002
  %v4773 = vpop.f32.mrb[0].mxu0
  %v4774 = vadd.f32 %v4733, %v4773
  %v4775 = vpop.f32.mrb[0].mxu0
  %v4776 = vadd.f32 %v4735, %v4775
  %v4777 = vpop.f32.mrb[0].mxu0
  %v4778 = vpop.f32.mrb[0].mxu0
  %4779 = vdwg.mxu0
  %4780 = vmatprep.subr.bf16.mxu0 %v4498
  %4781 = vmatpush1.bf16.msra.mxu0 %v4497
  %4782 = vmatprep.subr.bf16.mxu0 %v4500
  %4783 = vmatpush1.bf16.msra.mxu0 %v4499
  %4784 = vmatprep.subr.bf16.mxu0 %v4502
  %4785 = vmatpush1.bf16.msra.mxu0 %v4501
  %4786 = vmatprep.subr.bf16.mxu0 %v4504
  %4787 = vmatpush1.bf16.msra.mxu0 %v4503
  %4788 = vmatprep.subr.bf16.mxu0 %v4506
  %4789 = vmatpush1.bf16.msra.mxu0 %v4505
  %4790 = vmatprep.subr.bf16.mxu0 %v4508
  %4791 = vmatpush1.bf16.msra.mxu0 %v4507
  %4792 = vmatprep.subr.bf16.mxu0 %v4510
  %4793 = vmatpush1.bf16.msra.mxu0 %v4509
  %4794 = vmatprep.subr.bf16.mxu0 %v4512
  %4795 = vmatpush1.bf16.msra.mxu0 %v4511
  %4796 = vmatprep.subr.bf16.mxu0 %v4514
  %4797 = vmatpush1.bf16.msra.mxu0 %v4513
  %4798 = vmatprep.subr.bf16.mxu0 %v4516
  %4799 = vmatpush1.bf16.msra.mxu0 %v4515
  %4800 = vmatprep.subr.bf16.mxu0 %v4518
  %4801 = vmatpush1.bf16.msra.mxu0 %v4517
  %4802 = vmatprep.subr.bf16.mxu0 %v4520
  %4803 = vmatpush1.bf16.msra.mxu0 %v4519
  %4804 = vmatprep.subr.bf16.mxu0 %v4522
  %4805 = vmatpush1.bf16.msra.mxu0 %v4521
  %4806 = vmatprep.subr.bf16.mxu0 %v4524
  %4807 = vmatpush1.bf16.msra.mxu0 %v4523
  %4808 = vmatprep.subr.bf16.mxu0 %v4526
  %4809 = vmatpush1.bf16.msra.mxu0 %v4525
  %4810 = vmatprep.subr.bf16.mxu0 %v4528
  %4811 = vmatpush1.bf16.msra.mxu0 %v4527
  %4812 = vmatprep.mubr.bf16.mxu0 %v4005
  %4813 = vmatmul.mubr.bf16.gmra.mrb[0].mxu0 %v4004
  %v4814 = vpop.f32.mrb[0].mxu0
  %v4815 = vadd.f32 %v4774, %v4814
  %v4816 = vpop.f32.mrb[0].mxu0
  %v4817 = vadd.f32 %v4776, %v4816
  %v4818 = vpop.f32.mrb[0].mxu0
  %v4819 = vpop.f32.mrb[0].mxu0
  %4820 = vdwg.mxu0
  %v4821 = vmax.f32 %v4815, 0.0
  %v4822 = vmax.f32 %v4817, 0.0
  %v4823 = vmax.f32 %v4821, %v4822
  %4824 = vmax.xlane.f32.xlu0 %v4823
  %v4825 = vpop.xlane.xlu0 %4824
  %v4826 = vsub.f32 %v4821, %v4825
  %v4827 = vsub.f32 %v4822, %v4825
  %v4828 = vmul.f32 %v4826, 1.442695
  %v4829 = vpow.pop %v4828
  %v4830 = vmul.f32 %v4827, 1.442695
  %v4831 = vpow.pop %v4830
  %v4832 = vpack.c.bf16 %v4829, %v4829
  %v4833 = vpack.c.bf16 %v4831, %v4831
  %v4834 = vld [vmem:[%s5] sm:$0xf]
  %v4835 = vld [vmem:[%s5 + $0x4] sm:$0xf]
  %v4836 = vld [vmem:[%s5 + $0x8] sm:$0xf]
  %v4837 = vld [vmem:[%s5 + $0xc] sm:$0xf]
  %v4838 = vld [vmem:[%s5 + $0x10] sm:$0xf]
  %v4839 = vld [vmem:[%s5 + $0x14] sm:$0xf]
  %v4840 = vld [vmem:[%s5 + $0x18] sm:$0xf]
  %v4841 = vld [vmem:[%s5 + $0x1c] sm:$0xf]
  %v4842 = vld [vmem:[%s5 + $0x20] sm:$0xf]
  %v4843 = vld [vmem:[%s5 + $0x24] sm:$0xf]
  %v4844 = vld [vmem:[%s5 + $0x28] sm:$0xf]
  %v4845 = vld [vmem:[%s5 + $0x2c] sm:$0xf]
  %v4846 = vld [vmem:[%s5 + $0x30] sm:$0xf]
  %v4847 = vld [vmem:[%s5 + $0x34] sm:$0xf]
  %v4848 = vld [vmem:[%s5 + $0x38] sm:$0xf]
  %v4849 = vld [vmem:[%s5 + $0x3c] sm:$0xf]
  %v4850 = vld [vmem:[%s5 + $0x40] sm:$0xf]
  %v4851 = vld [vmem:[%s5 + $0x44] sm:$0xf]
  %v4852 = vld [vmem:[%s5 + $0x48] sm:$0xf]
  %v4853 = vld [vmem:[%s5 + $0x4c] sm:$0xf]
  %v4854 = vld [vmem:[%s5 + $0x50] sm:$0xf]
  %v4855 = vld [vmem:[%s5 + $0x54] sm:$0xf]
  %v4856 = vld [vmem:[%s5 + $0x58] sm:$0xf]
  %v4857 = vld [vmem:[%s5 + $0x5c] sm:$0xf]
  %v4858 = vld [vmem:[%s5 + $0x60] sm:$0xf]
  %v4859 = vld [vmem:[%s5 + $0x64] sm:$0xf]
  %v4860 = vld [vmem:[%s5 + $0x68] sm:$0xf]
  %v4861 = vld [vmem:[%s5 + $0x6c] sm:$0xf]
  %v4862 = vld [vmem:[%s5 + $0x70] sm:$0xf]
  %v4863 = vld [vmem:[%s5 + $0x74] sm:$0xf]
  %v4864 = vld [vmem:[%s5 + $0x78] sm:$0xf]
  %v4865 = vld [vmem:[%s5 + $0x7c] sm:$0xf]
  %v4898 = vunpack.c.l.b16 %v4834
  %v4899 = vunpack.c.l.b16 %v4835
  %v4900 = vunpack.c.l.b16 %v4836
  %v4901 = vunpack.c.l.b16 %v4837
  %v4902 = vunpack.c.l.b16 %v4838
  %v4903 = vunpack.c.l.b16 %v4839
  %v4904 = vunpack.c.l.b16 %v4840
  %v4905 = vunpack.c.l.b16 %v4841
  %v4906 = vunpack.c.l.b16 %v4842
  %v4907 = vunpack.c.l.b16 %v4843
  %v4908 = vunpack.c.l.b16 %v4844
  %v4909 = vunpack.c.l.b16 %v4845
  %v4910 = vunpack.c.l.b16 %v4846
  %v4911 = vunpack.c.l.b16 %v4847
  %v4912 = vunpack.c.l.b16 %v4848
  %v4913 = vunpack.c.l.b16 %v4849
  %v4914 = vunpack.c.l.b16 %v4850
  %v4915 = vunpack.c.l.b16 %v4851
  %v4916 = vunpack.c.l.b16 %v4852
  %v4917 = vunpack.c.l.b16 %v4853
  %v4918 = vunpack.c.l.b16 %v4854
  %v4919 = vunpack.c.l.b16 %v4855
  %v4920 = vunpack.c.l.b16 %v4856
  %v4921 = vunpack.c.l.b16 %v4857
  %v4922 = vunpack.c.l.b16 %v4858
  %v4923 = vunpack.c.l.b16 %v4859
  %v4924 = vunpack.c.l.b16 %v4860
  %v4925 = vunpack.c.l.b16 %v4861
  %v4926 = vunpack.c.l.b16 %v4862
  %v4927 = vunpack.c.l.b16 %v4863
  %v4928 = vunpack.c.l.b16 %v4864
  %v4929 = vunpack.c.l.b16 %v4865
  %v4930 = vpack.c.b16 %v4899, %v4898
  %v4931 = vpack.c.b16 %v4901, %v4900
  %v4932 = vpack.c.b16 %v4903, %v4902
  %v4933 = vpack.c.b16 %v4905, %v4904
  %v4934 = vpack.c.b16 %v4907, %v4906
  %v4935 = vpack.c.b16 %v4909, %v4908
  %v4936 = vpack.c.b16 %v4911, %v4910
  %v4937 = vpack.c.b16 %v4913, %v4912
  %v4938 = vpack.c.b16 %v4915, %v4914
  %v4939 = vpack.c.b16 %v4917, %v4916
  %v4940 = vpack.c.b16 %v4919, %v4918
  %v4941 = vpack.c.b16 %v4921, %v4920
  %v4942 = vpack.c.b16 %v4923, %v4922
  %v4943 = vpack.c.b16 %v4925, %v4924
  %v4944 = vpack.c.b16 %v4927, %v4926
  %v4945 = vpack.c.b16 %v4929, %v4928
  %4962 = vmatprep.subr.bf16.mxu0 0
  %4963 = vmatpush1.bf16.msra.mxu0 %v4930
  %4964 = vmatprep.subr.bf16.mxu0 0
  %4965 = vmatpush1.bf16.msra.mxu0 %v4931
  %4966 = vmatprep.subr.bf16.mxu0 0
  %4967 = vmatpush1.bf16.msra.mxu0 %v4932
  %4968 = vmatprep.subr.bf16.mxu0 0
  %4969 = vmatpush1.bf16.msra.mxu0 %v4933
  %4970 = vmatprep.subr.bf16.mxu0 0
  %4971 = vmatpush1.bf16.msra.mxu0 %v4934
  %4972 = vmatprep.subr.bf16.mxu0 0
  %4973 = vmatpush1.bf16.msra.mxu0 %v4935
  %4974 = vmatprep.subr.bf16.mxu0 0
  %4975 = vmatpush1.bf16.msra.mxu0 %v4936
  %4976 = vmatprep.subr.bf16.mxu0 0
  %4977 = vmatpush1.bf16.msra.mxu0 %v4937
  %4978 = vmatprep.subr.bf16.mxu0 0
  %4979 = vmatpush1.bf16.msra.mxu0 %v4938
  %4980 = vmatprep.subr.bf16.mxu0 0
  %4981 = vmatpush1.bf16.msra.mxu0 %v4939
  %4982 = vmatprep.subr.bf16.mxu0 0
  %4983 = vmatpush1.bf16.msra.mxu0 %v4940
  %4984 = vmatprep.subr.bf16.mxu0 0
  %4985 = vmatpush1.bf16.msra.mxu0 %v4941
  %4986 = vmatprep.subr.bf16.mxu0 0
  %4987 = vmatpush1.bf16.msra.mxu0 %v4942
  %4988 = vmatprep.subr.bf16.mxu0 0
  %4989 = vmatpush1.bf16.msra.mxu0 %v4943
  %4990 = vmatprep.subr.bf16.mxu0 0
  %4991 = vmatpush1.bf16.msra.mxu0 %v4944
  %4992 = vmatprep.subr.bf16.mxu0 0
  %4993 = vmatpush1.bf16.msra.mxu0 %v4945
  %4994 = vmatprep.mubr.bf16.mxu0 %v4833
  %4995 = vmatmul.mubr.bf16.gmra.mrb[0].mxu0 %v4832
  %v4996 = vpop.f32.mrb[0].mxu0
  %v4997 = vadd.f32 0.0, %v4996
  %v4998 = vpop.f32.mrb[0].mxu0
  %v4999 = vpop.f32.mrb[0].mxu0
  %v5000 = vpop.f32.mrb[0].mxu0
  %5001 = vdwg.mxu0
  %v5002 = vld [vmem:[%s6] sm:$0xf]
  %v5003 = vld [vmem:[%s6 + $0x4] sm:$0xf]
  %v5004 = vld [vmem:[%s6 + $0x8] sm:$0xf]
  %v5005 = vld [vmem:[%s6 + $0xc] sm:$0xf]
  %v5006 = vld [vmem:[%s6 + $0x10] sm:$0xf]
  %v5007 = vld [vmem:[%s6 + $0x14] sm:$0xf]
  %v5008 = vld [vmem:[%s6 + $0x18] sm:$0xf]
  %v5009 = vld [vmem:[%s6 + $0x1c] sm:$0xf]
  %v5010 = vld [vmem:[%s6 + $0x20] sm:$0xf]
  %v5011 = vld [vmem:[%s6 + $0x24] sm:$0xf]
  %v5012 = vld [vmem:[%s6 + $0x28] sm:$0xf]
  %v5013 = vld [vmem:[%s6 + $0x2c] sm:$0xf]
  %v5014 = vld [vmem:[%s6 + $0x30] sm:$0xf]
  %v5015 = vld [vmem:[%s6 + $0x34] sm:$0xf]
  %v5016 = vld [vmem:[%s6 + $0x38] sm:$0xf]
  %v5017 = vld [vmem:[%s6 + $0x3c] sm:$0xf]
  %v5018 = vld [vmem:[%s6 + $0x40] sm:$0xf]
  %v5019 = vld [vmem:[%s6 + $0x44] sm:$0xf]
  %v5020 = vld [vmem:[%s6 + $0x48] sm:$0xf]
  %v5021 = vld [vmem:[%s6 + $0x4c] sm:$0xf]
  %v5022 = vld [vmem:[%s6 + $0x50] sm:$0xf]
  %v5023 = vld [vmem:[%s6 + $0x54] sm:$0xf]
  %v5024 = vld [vmem:[%s6 + $0x58] sm:$0xf]
  %v5025 = vld [vmem:[%s6 + $0x5c] sm:$0xf]
  %v5026 = vld [vmem:[%s6 + $0x60] sm:$0xf]
  %v5027 = vld [vmem:[%s6 + $0x64] sm:$0xf]
  %v5028 = vld [vmem:[%s6 + $0x68] sm:$0xf]
  %v5029 = vld [vmem:[%s6 + $0x6c] sm:$0xf]
  %v5030 = vld [vmem:[%s6 + $0x70] sm:$0xf]
  %v5031 = vld [vmem:[%s6 + $0x74] sm:$0xf]
  %v5032 = vld [vmem:[%s6 + $0x78] sm:$0xf]
  %v5033 = vld [vmem:[%s6 + $0x7c] sm:$0xf]
  %v5066 = vunpack.c.l.b16 %v5002
  %v5067 = vunpack.c.l.b16 %v5003
  %v5068 = vunpack.c.l.b16 %v5004
  %v5069 = vunpack.c.l.b16 %v5005
  %v5070 = vunpack.c.l.b16 %v5006
  %v5071 = vunpack.c.l.b16 %v5007
  %v5072 = vunpack.c.l.b16 %v5008
  %v5073 = vunpack.c.l.b16 %v5009
  %v5074 = vunpack.c.l.b16 %v5010
  %v5075 = vunpack.c.l.b16 %v5011
  %v5076 = vunpack.c.l.b16 %v5012
  %v5077 = vunpack.c.l.b16 %v5013
  %v5078 = vunpack.c.l.b16 %v5014
  %v5079 = vunpack.c.l.b16 %v5015
  %v5080 = vunpack.c.l.b16 %v5016
  %v5081 = vunpack.c.l.b16 %v5017
  %v5082 = vunpack.c.l.b16 %v5018
  %v5083 = vunpack.c.l.b16 %v5019
  %v5084 = vunpack.c.l.b16 %v5020
  %v5085 = vunpack.c.l.b16 %v5021
  %v5086 = vunpack.c.l.b16 %v5022
  %v5087 = vunpack.c.l.b16 %v5023
  %v5088 = vunpack.c.l.b16 %v5024
  %v5089 = vunpack.c.l.b16 %v5025
  %v5090 = vunpack.c.l.b16 %v5026
  %v5091 = vunpack.c.l.b16 %v5027
  %v5092 = vunpack.c.l.b16 %v5028
  %v5093 = vunpack.c.l.b16 %v5029
  %v5094 = vunpack.c.l.b16 %v5030
  %v5095 = vunpack.c.l.b16 %v5031
  %v5096 = vunpack.c.l.b16 %v5032
  %v5097 = vunpack.c.l.b16 %v5033
  %v5098 = vpack.c.b16 %v5067, %v5066
  %v5099 = vpack.c.b16 %v5069, %v5068
  %v5100 = vpack.c.b16 %v5071, %v5070
  %v5101 = vpack.c.b16 %v5073, %v5072
  %v5102 = vpack.c.b16 %v5075, %v5074
  %v5103 = vpack.c.b16 %v5077, %v5076
  %v5104 = vpack.c.b16 %v5079, %v5078
  %v5105 = vpack.c.b16 %v5081, %v5080
  %v5106 = vpack.c.b16 %v5083, %v5082
  %v5107 = vpack.c.b16 %v5085, %v5084
  %v5108 = vpack.c.b16 %v5087, %v5086
  %v5109 = vpack.c.b16 %v5089, %v5088
  %v5110 = vpack.c.b16 %v5091, %v5090
  %v5111 = vpack.c.b16 %v5093, %v5092
  %v5112 = vpack.c.b16 %v5095, %v5094
  %v5113 = vpack.c.b16 %v5097, %v5096
  %5130 = vmatprep.subr.bf16.mxu0 0
  %5131 = vmatpush1.bf16.msra.mxu0 %v5098
  %5132 = vmatprep.subr.bf16.mxu0 0
  %5133 = vmatpush1.bf16.msra.mxu0 %v5099
  %5134 = vmatprep.subr.bf16.mxu0 0
  %5135 = vmatpush1.bf16.msra.mxu0 %v5100
  %5136 = vmatprep.subr.bf16.mxu0 0
  %5137 = vmatpush1.bf16.msra.mxu0 %v5101
  %5138 = vmatprep.subr.bf16.mxu0 0
  %5139 = vmatpush1.bf16.msra.mxu0 %v5102
  %5140 = vmatprep.subr.bf16.mxu0 0
  %5141 = vmatpush1.bf16.msra.mxu0 %v5103
  %5142 = vmatprep.subr.bf16.mxu0 0
  %5143 = vmatpush1.bf16.msra.mxu0 %v5104
  %5144 = vmatprep.subr.bf16.mxu0 0
  %5145 = vmatpush1.bf16.msra.mxu0 %v5105
  %5146 = vmatprep.subr.bf16.mxu0 0
  %5147 = vmatpush1.bf16.msra.mxu0 %v5106
  %5148 = vmatprep.subr.bf16.mxu0 0
  %5149 = vmatpush1.bf16.msra.mxu0 %v5107
  %5150 = vmatprep.subr.bf16.mxu0 0
  %5151 = vmatpush1.bf16.msra.mxu0 %v5108
  %5152 = vmatprep.subr.bf16.mxu0 0
  %5153 = vmatpush1.bf16.msra.mxu0 %v5109
  %5154 = vmatprep.subr.bf16.mxu0 0
  %5155 = vmatpush1.bf16.msra.mxu0 %v5110
  %5156 = vmatprep.subr.bf16.mxu0 0
  %5157 = vmatpush1.bf16.msra.mxu0 %v5111
  %5158 = vmatprep.subr.bf16.mxu0 0
  %5159 = vmatpush1.bf16.msra.mxu0 %v5112
  %5160 = vmatprep.subr.bf16.mxu0 0
  %5161 = vmatpush1.bf16.msra.mxu0 %v5113
  %5162 = vmatprep.mubr.bf16.mxu0 %v4833
  %5163 = vmatmul.mubr.bf16.gmra.mrb[0].mxu0 %v4832
  %v5164 = vpop.f32.mrb[0].mxu0
  %v5165 = vadd.f32 0.0, %v5164
  %v5166 = vpop.f32.mrb[0].mxu0
  %v5167 = vpop.f32.mrb[0].mxu0
  %v5168 = vpop.f32.mrb[0].mxu0
  %5169 = vdwg.mxu0
  %v5170 = vmax.f32 %v4997, 1e-20
  %v5171 = vrcp.pop %v5170
  %v5172 = vmul.f32 %v5165, %v5171
  %v5173 = vld [vmem:[%s7] sm:$0xff]
  %v5174 = vld [vmem:[%s7 + $0x8] sm:$0xff]
  %v5175 = vld [vmem:[%s7 + $0x10] sm:$0xff]
  %v5176 = vld [vmem:[%s7 + $0x18] sm:$0xff]
  %v5177 = vld [vmem:[%s8] sm:$0x1]
  %v5178 = vld [vmem:[%s9] sm:$0x1]
  %v5179 = vld [vmem:[%s10] sm:$0x1]
  %v5181 = vlaneseq
  %v5182 = vshrl.u32 %v5181, 7
  %v5183 = vsub.s32 0, %v5182
  %v5184 = vrot.slane %v5177, %v5183
  %vm5186 = vcmask 261120
  %v5188 = vsel %vm5186, %v5172, 0
  %5190 = vmatprep.subr.mxu0 0.0
  %5191 = vmatpush1.msra.mxu0 %v5173
  %5192 = vmatprep.subr.mxu0 0.0
  %5193 = vmatpush1.msra.mxu0 %v5174
  %5194 = vmatprep.subr.mxu0 0.0
  %5195 = vmatpush1.msra.mxu0 %v5175
  %5196 = vmatprep.subr.mxu0 0.0
  %5197 = vmatpush1.msra.mxu0 %v5176
  %5198 = vmatprep.subr.mxu0 0.0
  %5199 = vmatpush1.msra.mxu0 0.0
  %5200 = vmatprep.subr.mxu0 0.0
  %5201 = vmatpush1.msra.mxu0 0.0
  %5202 = vmatprep.subr.mxu0 0.0
  %5203 = vmatpush1.msra.mxu0 0.0
  %5204 = vmatprep.subr.mxu0 0.0
  %5205 = vmatpush1.msra.mxu0 0.0
  %5206 = vmatprep.subr.mxu0 0.0
  %5207 = vmatpush1.msra.mxu0 0.0
  %5208 = vmatprep.subr.mxu0 0.0
  %5209 = vmatpush1.msra.mxu0 0.0
  %5210 = vmatprep.subr.mxu0 0.0
  %5211 = vmatpush1.msra.mxu0 0.0
  %5212 = vmatprep.subr.mxu0 0.0
  %5213 = vmatpush1.msra.mxu0 0.0
  %5214 = vmatprep.subr.mxu0 0.0
  %5215 = vmatpush1.msra.mxu0 0.0
  %5216 = vmatprep.subr.mxu0 0.0
  %5217 = vmatpush1.msra.mxu0 0.0
  %5218 = vmatprep.subr.mxu0 0.0
  %5219 = vmatpush1.msra.mxu0 0.0
  %5220 = vmatprep.subr.mxu0 0.0
  %5221 = vmatpush1.msra.mxu0 0.0
  %5222 = vmatprep.subr.mxu0 0.0
  %5223 = vmatpush1.msra.mxu0 0.0
  %5224 = vmatprep.subr.mxu0 0.0
  %5225 = vmatpush1.msra.mxu0 0.0
  %5226 = vmatprep.subr.mxu0 0.0
  %5227 = vmatpush1.msra.mxu0 0.0
  %5228 = vmatprep.subr.mxu0 0.0
  %5229 = vmatpush1.msra.mxu0 0.0
  %5230 = vmatprep.subr.mxu0 0.0
  %5231 = vmatpush1.msra.mxu0 0.0
  %5232 = vmatprep.subr.mxu0 0.0
  %5233 = vmatpush1.msra.mxu0 0.0
  %5234 = vmatprep.subr.mxu0 0.0
  %5235 = vmatpush1.msra.mxu0 0.0
  %5236 = vmatprep.subr.mxu0 0.0
  %5237 = vmatpush1.msra.mxu0 0.0
  %5238 = vmatprep.subr.mxu0 0.0
  %5239 = vmatpush1.msra.mxu0 0.0
  %5240 = vmatprep.subr.mxu0 0.0
  %5241 = vmatpush1.msra.mxu0 0.0
  %5242 = vmatprep.subr.mxu0 0.0
  %5243 = vmatpush1.msra.mxu0 0.0
  %5244 = vmatprep.subr.mxu0 0.0
  %5245 = vmatpush1.msra.mxu0 0.0
  %5246 = vmatprep.subr.mxu0 0.0
  %5247 = vmatpush1.msra.mxu0 0.0
  %5248 = vmatprep.subr.mxu0 0.0
  %5249 = vmatpush1.msra.mxu0 0.0
  %5250 = vmatprep.subr.mxu0 0.0
  %5251 = vmatpush1.msra.mxu0 0.0
  %5252 = vmatprep.subr.mxu0 0.0
  %5253 = vmatpush1.msra.mxu0 0.0
  %5254 = vmatprep.mubr.f32.mxu0 0.0
  %5255 = vmatmul.mubr.f32.gmra.mrb[0].mxu0 %v5188
  %v5256 = vpop.f32.mrb[0].mxu0
  %v5257 = vadd.f32 %v5184, %v5256
  %v5258 = vpop.f32.mrb[0].mxu0
  %5259 = vdwg.mxu0
  %v5260 = vsel %vm5186, %v5257, 0.0
  %5261 = vadd.xlane.f32.xlu0 %v5260
  %v5262 = vpop.xlane.xlu0 %5261
  %v5263 = vrcp.pop 32.0
  %v5264 = vmul.f32 %v5262, %v5263
  %v5265 = vsub.f32 %v5257, %v5264
  %v5266 = vmul.f32 %v5265, %v5265
  %v5267 = vsel %vm5186, %v5266, 0.0
  %5268 = vadd.xlane.f32.xlu0 %v5267
  %v5269 = vpop.xlane.xlu0 %5268
  %v5270 = vmul.f32 %v5269, %v5263
  %v5271 = vadd.f32 %v5270, 1e-05
  %v5272 = vrsqrt.pop %v5271
  %v5273 = vmul.f32 %v5265, %v5272
  %v5275 = vlaneseq
  %v5276 = vshrl.u32 %v5275, 7
  %v5277 = vsub.s32 0, %v5276
  %v5278 = vrot.slane %v5178, %v5277
  %v5280 = vmul.f32 %v5273, %v5278
  %v5282 = vlaneseq
  %v5283 = vshrl.u32 %v5282, 7
  %v5284 = vsub.s32 0, %v5283
  %v5285 = vrot.slane %v5179, %v5284
  %v5287 = vadd.f32 %v5280, %v5285
  %v5288 = vmax.f32 %v5287, 0.0
  %v5289 = vld [vmem:[%s11] sm:$0xff]
  %v5290 = vld [vmem:[%s11 + $0x8] sm:$0xff]
  %v5291 = vld [vmem:[%s11 + $0x10] sm:$0xff]
  %v5292 = vld [vmem:[%s11 + $0x18] sm:$0xff]
  %v5293 = vld [vmem:[%s12] sm:$0x1]
  %v5294 = vld [vmem:[%s13] sm:$0x1]
  %v5295 = vld [vmem:[%s14] sm:$0x1]
  %v5297 = vlaneseq
  %v5298 = vshrl.u32 %v5297, 7
  %v5299 = vsub.s32 0, %v5298
  %v5300 = vrot.slane %v5293, %v5299
  %v5303 = vsel %vm5186, %v5288, 0
  %5305 = vmatprep.subr.mxu0 0.0
  %5306 = vmatpush1.msra.mxu0 %v5289
  %5307 = vmatprep.subr.mxu0 0.0
  %5308 = vmatpush1.msra.mxu0 %v5290
  %5309 = vmatprep.subr.mxu0 0.0
  %5310 = vmatpush1.msra.mxu0 %v5291
  %5311 = vmatprep.subr.mxu0 0.0
  %5312 = vmatpush1.msra.mxu0 %v5292
  %5313 = vmatprep.subr.mxu0 0.0
  %5314 = vmatpush1.msra.mxu0 0.0
  %5315 = vmatprep.subr.mxu0 0.0
  %5316 = vmatpush1.msra.mxu0 0.0
  %5317 = vmatprep.subr.mxu0 0.0
  %5318 = vmatpush1.msra.mxu0 0.0
  %5319 = vmatprep.subr.mxu0 0.0
  %5320 = vmatpush1.msra.mxu0 0.0
  %5321 = vmatprep.subr.mxu0 0.0
  %5322 = vmatpush1.msra.mxu0 0.0
  %5323 = vmatprep.subr.mxu0 0.0
  %5324 = vmatpush1.msra.mxu0 0.0
  %5325 = vmatprep.subr.mxu0 0.0
  %5326 = vmatpush1.msra.mxu0 0.0
  %5327 = vmatprep.subr.mxu0 0.0
  %5328 = vmatpush1.msra.mxu0 0.0
  %5329 = vmatprep.subr.mxu0 0.0
  %5330 = vmatpush1.msra.mxu0 0.0
  %5331 = vmatprep.subr.mxu0 0.0
  %5332 = vmatpush1.msra.mxu0 0.0
  %5333 = vmatprep.subr.mxu0 0.0
  %5334 = vmatpush1.msra.mxu0 0.0
  %5335 = vmatprep.subr.mxu0 0.0
  %5336 = vmatpush1.msra.mxu0 0.0
  %5337 = vmatprep.subr.mxu0 0.0
  %5338 = vmatpush1.msra.mxu0 0.0
  %5339 = vmatprep.subr.mxu0 0.0
  %5340 = vmatpush1.msra.mxu0 0.0
  %5341 = vmatprep.subr.mxu0 0.0
  %5342 = vmatpush1.msra.mxu0 0.0
  %5343 = vmatprep.subr.mxu0 0.0
  %5344 = vmatpush1.msra.mxu0 0.0
  %5345 = vmatprep.subr.mxu0 0.0
  %5346 = vmatpush1.msra.mxu0 0.0
  %5347 = vmatprep.subr.mxu0 0.0
  %5348 = vmatpush1.msra.mxu0 0.0
  %5349 = vmatprep.subr.mxu0 0.0
  %5350 = vmatpush1.msra.mxu0 0.0
  %5351 = vmatprep.subr.mxu0 0.0
  %5352 = vmatpush1.msra.mxu0 0.0
  %5353 = vmatprep.subr.mxu0 0.0
  %5354 = vmatpush1.msra.mxu0 0.0
  %5355 = vmatprep.subr.mxu0 0.0
  %5356 = vmatpush1.msra.mxu0 0.0
  %5357 = vmatprep.subr.mxu0 0.0
  %5358 = vmatpush1.msra.mxu0 0.0
  %5359 = vmatprep.subr.mxu0 0.0
  %5360 = vmatpush1.msra.mxu0 0.0
  %5361 = vmatprep.subr.mxu0 0.0
  %5362 = vmatpush1.msra.mxu0 0.0
  %5363 = vmatprep.subr.mxu0 0.0
  %5364 = vmatpush1.msra.mxu0 0.0
  %5365 = vmatprep.subr.mxu0 0.0
  %5366 = vmatpush1.msra.mxu0 0.0
  %5367 = vmatprep.subr.mxu0 0.0
  %5368 = vmatpush1.msra.mxu0 0.0
  %5369 = vmatprep.mubr.f32.mxu0 0.0
  %5370 = vmatmul.mubr.f32.gmra.mrb[0].mxu0 %v5303
  %v5371 = vpop.f32.mrb[0].mxu0
  %v5372 = vadd.f32 %v5300, %v5371
  %v5373 = vpop.f32.mrb[0].mxu0
  %5374 = vdwg.mxu0
  %v5375 = vsel %vm5186, %v5372, 0.0
  %5376 = vadd.xlane.f32.xlu0 %v5375
  %v5377 = vpop.xlane.xlu0 %5376
  %v5378 = vmul.f32 %v5377, %v5263
  %v5379 = vsub.f32 %v5372, %v5378
  %v5380 = vmul.f32 %v5379, %v5379
  %v5381 = vsel %vm5186, %v5380, 0.0
  %5382 = vadd.xlane.f32.xlu0 %v5381
  %v5383 = vpop.xlane.xlu0 %5382
  %v5384 = vmul.f32 %v5383, %v5263
  %v5385 = vadd.f32 %v5384, 1e-05
  %v5386 = vrsqrt.pop %v5385
  %v5387 = vmul.f32 %v5379, %v5386
  %v5389 = vlaneseq
  %v5390 = vshrl.u32 %v5389, 7
  %v5391 = vsub.s32 0, %v5390
  %v5392 = vrot.slane %v5294, %v5391
  %v5394 = vmul.f32 %v5387, %v5392
  %v5396 = vlaneseq
  %v5397 = vshrl.u32 %v5396, 7
  %v5398 = vsub.s32 0, %v5397
  %v5399 = vrot.slane %v5295, %v5398
  %v5401 = vadd.f32 %v5394, %v5399
  %v5402 = vmax.f32 %v5401, 0.0
  %v5403 = vld [vmem:[%s15] sm:$0xff]
  %v5404 = vld [vmem:[%s15 + $0x8] sm:$0xff]
  %v5405 = vld [vmem:[%s15 + $0x10] sm:$0xff]
  %v5406 = vld [vmem:[%s15 + $0x18] sm:$0xff]
  %v5407 = vld [vmem:[%s16] sm:$0x1]
  %v5409 = vlaneseq
  %v5410 = vshrl.u32 %v5409, 7
  %v5411 = vsub.s32 0, %v5410
  %v5412 = vrot.slane %v5407, %v5411
  %v5415 = vsel %vm5186, %v5402, 0
  %5417 = vmatprep.subr.mxu0 0.0
  %5418 = vmatpush1.msra.mxu0 %v5403
  %5419 = vmatprep.subr.mxu0 0.0
  %5420 = vmatpush1.msra.mxu0 %v5404
  %5421 = vmatprep.subr.mxu0 0.0
  %5422 = vmatpush1.msra.mxu0 %v5405
  %5423 = vmatprep.subr.mxu0 0.0
  %5424 = vmatpush1.msra.mxu0 %v5406
  %5425 = vmatprep.subr.mxu0 0.0
  %5426 = vmatpush1.msra.mxu0 0.0
  %5427 = vmatprep.subr.mxu0 0.0
  %5428 = vmatpush1.msra.mxu0 0.0
  %5429 = vmatprep.subr.mxu0 0.0
  %5430 = vmatpush1.msra.mxu0 0.0
  %5431 = vmatprep.subr.mxu0 0.0
  %5432 = vmatpush1.msra.mxu0 0.0
  %5433 = vmatprep.subr.mxu0 0.0
  %5434 = vmatpush1.msra.mxu0 0.0
  %5435 = vmatprep.subr.mxu0 0.0
  %5436 = vmatpush1.msra.mxu0 0.0
  %5437 = vmatprep.subr.mxu0 0.0
  %5438 = vmatpush1.msra.mxu0 0.0
  %5439 = vmatprep.subr.mxu0 0.0
  %5440 = vmatpush1.msra.mxu0 0.0
  %5441 = vmatprep.subr.mxu0 0.0
  %5442 = vmatpush1.msra.mxu0 0.0
  %5443 = vmatprep.subr.mxu0 0.0
  %5444 = vmatpush1.msra.mxu0 0.0
  %5445 = vmatprep.subr.mxu0 0.0
  %5446 = vmatpush1.msra.mxu0 0.0
  %5447 = vmatprep.subr.mxu0 0.0
  %5448 = vmatpush1.msra.mxu0 0.0
  %5449 = vmatprep.subr.mxu0 0.0
  %5450 = vmatpush1.msra.mxu0 0.0
  %5451 = vmatprep.subr.mxu0 0.0
  %5452 = vmatpush1.msra.mxu0 0.0
  %5453 = vmatprep.subr.mxu0 0.0
  %5454 = vmatpush1.msra.mxu0 0.0
  %5455 = vmatprep.subr.mxu0 0.0
  %5456 = vmatpush1.msra.mxu0 0.0
  %5457 = vmatprep.subr.mxu0 0.0
  %5458 = vmatpush1.msra.mxu0 0.0
  %5459 = vmatprep.subr.mxu0 0.0
  %5460 = vmatpush1.msra.mxu0 0.0
  %5461 = vmatprep.subr.mxu0 0.0
  %5462 = vmatpush1.msra.mxu0 0.0
  %5463 = vmatprep.subr.mxu0 0.0
  %5464 = vmatpush1.msra.mxu0 0.0
  %5465 = vmatprep.subr.mxu0 0.0
  %5466 = vmatpush1.msra.mxu0 0.0
  %5467 = vmatprep.subr.mxu0 0.0
  %5468 = vmatpush1.msra.mxu0 0.0
  %5469 = vmatprep.subr.mxu0 0.0
  %5470 = vmatpush1.msra.mxu0 0.0
  %5471 = vmatprep.subr.mxu0 0.0
  %5472 = vmatpush1.msra.mxu0 0.0
  %5473 = vmatprep.subr.mxu0 0.0
  %5474 = vmatpush1.msra.mxu0 0.0
  %5475 = vmatprep.subr.mxu0 0.0
  %5476 = vmatpush1.msra.mxu0 0.0
  %5477 = vmatprep.subr.mxu0 0.0
  %5478 = vmatpush1.msra.mxu0 0.0
  %5479 = vmatprep.subr.mxu0 0.0
  %5480 = vmatpush1.msra.mxu0 0.0
  %5481 = vmatprep.mubr.f32.mxu0 0.0
  %5482 = vmatmul.mubr.f32.gmra.mrb[0].mxu0 %v5415
  %v5483 = vpop.f32.mrb[0].mxu0
  %v5484 = vadd.f32 %v5412, %v5483
  %v5485 = vpop.f32.mrb[0].mxu0
  %5486 = vdwg.mxu0
  %v5487 = vtanh.pop %v5484
  %v5488 = vmul.f32 %v5487, 2.0
  %v5489 = vadd.f32 %v5488, 0.0
  %5490 = vst [vmem:[%s17] sm:$0xff] %v5489
  // Predicated region
  $region70: #{sac_pi_forward.1} parent=0 // pred_check
    _
  $region71: #{sac_pi_forward.1} parent=0 // pred_check_branch
    %5492 = sbr.rel (0) target = $region73
  $region72: #{sac_pi_forward.1} parent=0 // pred_region
    _
  $region73: #{sac_pi_forward.1} parent=0 // pred_fallthru
    _
  // Predicated region
  $region74: #{sac_pi_forward.1} parent=0 // pred_check
    _
  $region75: #{sac_pi_forward.1} parent=0 // pred_check_branch
    %5494 = sbr.rel (0) target = $region77
  $region76: #{sac_pi_forward.1} parent=0 // pred_region
    _
  $region77: #{sac_pi_forward.1} parent=0 // pred_fallthru
    _

</llo_original>
